<compile_context>
chip_gen: v7x
topology: tpu7x:2x2x1
jax: 0.10.0
libtpu: 0.0.40
codegen_flags: <defaults>
</compile_context>

<pallas_src>
import functools

import jax
import jax.numpy as jnp
from jax import lax
from jax.experimental import pallas as pl
from jax.experimental.pallas import tpu as pltpu

LANE = 128


def _round_up(x, m):
    return (x + m - 1) // m * m


def _double_conv_kernel(x_ref, w1_ref, b1_ref, w2_ref, b2_ref, o_ref, mid_ref):
    """One (batch, row-tile) step of fused conv3x3+BN+ReLU x2.

    x_ref  : (TH+4, W+2, Cin)      bf16 input row slab (2-row / 1-col zero halo)
    w1_ref : (9, Cin, Cmid_p)      bf16 conv1 taps, BN1 scale folded in
    b1_ref : (1, Cmid_p)           f32 folded conv1-bias + BN1 bias
    w2_ref : (9, Cmid_p, Cout_p)   bf16 conv2 taps, BN2 scale folded in
    b2_ref : (1, Cout_p)           f32 folded conv2-bias + BN2 bias
    o_ref  : (TH, W, Cout_p)       f32 output tile
    mid_ref: (TH+2, W+2, Cmid_p)   bf16 scratch: conv1 output + conv2 halo
    """
    THp4, Wp, Cin = x_ref.shape
    TH, W = THp4 - 4, Wp - 2
    Cmid = mid_ref.shape[-1]
    Cout = o_ref.shape[-1]
    h = pl.program_id(1)
    n_h = pl.num_programs(1)

    # ---- conv1 (3x3) + folded BN1 bias + ReLU, f32 accumulation ------------
    # Produces TH+2 rows of the intermediate (the extra 2 are conv2's row halo).
    acc1 = jnp.zeros(((TH + 2) * W, Cmid), jnp.float32)
    for kh in range(3):
        for kw in range(3):
            patch = x_ref[kh:kh + TH + 2, kw:kw + W, :].reshape((TH + 2) * W, Cin)
            acc1 = acc1 + jnp.dot(patch, w1_ref[kh * 3 + kw],
                                  preferred_element_type=jnp.float32)
    act1 = jnp.maximum(acc1 + b1_ref[...], 0.0)   # BN scale already in weights

    # Stage intermediate in bf16.  Interior write + zero only the thin halo.
    mid_ref[:, 1:W + 1, :] = act1.reshape(TH + 2, W, Cmid).astype(mid_ref.dtype)
    mid_ref[:, 0:1, :] = jnp.zeros((TH + 2, 1, Cmid), mid_ref.dtype)
    mid_ref[:, W + 1:W + 2, :] = jnp.zeros((TH + 2, 1, Cmid), mid_ref.dtype)

    # conv2's zero row-padding exists only at the image top/bottom tiles.
    @pl.when(h == 0)
    def _():
        mid_ref[0:1, :, :] = jnp.zeros((1, Wp, Cmid), mid_ref.dtype)

    @pl.when(h == n_h - 1)
    def _():
        mid_ref[TH + 1:TH + 2, :, :] = jnp.zeros((1, Wp, Cmid), mid_ref.dtype)

    # ---- conv2 (3x3) + folded BN2 bias + ReLU ------------------------------
    # Each tap is a (TH*W, Cmid_p) x (Cmid_p, Cout_p) MXU dot (K, N >= 128).
    acc2 = jnp.zeros((TH * W, Cout), jnp.float32)
    for kh in range(3):
        for kw in range(3):
            patch = mid_ref[kh:kh + TH, kw:kw + W, :].reshape(TH * W, Cmid)
            acc2 = acc2 + jnp.dot(patch, w2_ref[kh * 3 + kw],
                                  preferred_element_type=jnp.float32)
    act2 = jnp.maximum(acc2 + b2_ref[...], 0.0)
    o_ref[...] = act2.reshape(TH, W, Cout).astype(o_ref.dtype)


def _fold_bn(conv_bias, gamma, beta, running_mean, running_var, eps=1e-5):
    """Fold conv bias + eval-mode BatchNorm into per-channel (scale, bias)."""
    scale = gamma / jnp.sqrt(running_var + eps)
    bias = scale * (conv_bias - running_mean) + beta
    return scale, bias


def _prepare_params(params):
    """Fold BN scale into weights, pad channels to LANE, pack for the kernel."""
    (w1, cb1, g1, be1, rm1, rv1, w2, cb2, g2, be2, rm2, rv2) = params
    Cin, Cmid = w1.shape[2], w1.shape[3]
    Cout = w2.shape[3]
    Cmid_p, Cout_p = _round_up(Cmid, LANE), _round_up(Cout, LANE)

    s1, b1 = _fold_bn(cb1, g1, be1, rm1, rv1)
    s2, b2 = _fold_bn(cb2, g2, be2, rm2, rv2)
    wf1 = (w1 * s1).astype(jnp.bfloat16)                       # (3,3,Cin,Cmid)
    wf2 = (w2 * s2).astype(jnp.bfloat16)                       # (3,3,Cmid,Cout)

    w1p = jnp.zeros((3, 3, Cin, Cmid_p), jnp.bfloat16).at[..., :Cmid].set(wf1)
    w2p = (jnp.zeros((3, 3, Cmid_p, Cout_p), jnp.bfloat16)
           .at[:, :, :Cmid, :Cout].set(wf2))
    w1m = w1p.reshape(9, Cin, Cmid_p)                          # per-tap taps
    w2m = w2p.reshape(9, Cmid_p, Cout_p)
    b1p = jnp.zeros((1, Cmid_p), jnp.float32).at[0, :Cmid].set(b1)
    b2p = jnp.zeros((1, Cout_p), jnp.float32).at[0, :Cout].set(b2)
    return w1m, b1p, w2m, b2p


@functools.partial(jax.jit, static_argnames=("row_tile",))
def double_conv(x_nchw, params, *, row_tile=8):
    """DoubleConv.forward (eval-mode BN).  NCHW in / NCHW out (like PyTorch)."""
    N, Cin, H, W = x_nchw.shape
    Cout = params[6].shape[3]
    Cmid_p = _round_up(params[0].shape[3], LANE)
    Cout_p = _round_up(Cout, LANE)

    TH = row_tile if H % row_tile == 0 else H
    nH = H // TH

    w1m, b1p, w2m, b2p = _prepare_params(params)

    # NCHW -> NHWC bf16, zero halo of 2 rows / 1 col (fused 3x3+3x3 needs a
    # 2-deep row halo), then overlapping row slabs so a plain Blocked BlockSpec
    # can stream them (duplicates only 4/TH of the rows).
    x = jnp.transpose(x_nchw, (0, 2, 3, 1)).astype(jnp.bfloat16)
    xp = jnp.pad(x, ((0, 0), (2, 2), (1, 1), (0, 0)))
    x_tiles = jnp.stack([xp[:, i * TH:i * TH + TH + 4] for i in range(nH)],
                        axis=1)                       # (N, nH, TH+4, W+2, Cin)

    out = pl.pallas_call(
        _double_conv_kernel,
        out_shape=jax.ShapeDtypeStruct((N, H, W, Cout_p), jnp.float32),
        grid=(N, nH),
        in_specs=[
            pl.BlockSpec((None, None, TH + 4, W + 2, Cin),
                         lambda n, h: (n, h, 0, 0, 0)),
            pl.BlockSpec((9, Cin, Cmid_p), lambda n, h: (0, 0, 0)),
            pl.BlockSpec((1, Cmid_p), lambda n, h: (0, 0)),
            pl.BlockSpec((9, Cmid_p, Cout_p), lambda n, h: (0, 0, 0)),
            pl.BlockSpec((1, Cout_p), lambda n, h: (0, 0)),
        ],
        out_specs=pl.BlockSpec((None, TH, W, Cout_p), lambda n, h: (n, h, 0, 0)),
        scratch_shapes=[pltpu.VMEM((TH + 2, W + 2, Cmid_p), jnp.bfloat16)],
        compiler_params=pltpu.CompilerParams(
            dimension_semantics=("parallel", "parallel"),
            # Per-step footprint (double-buffered tiles + weights + scratch)
            # stays well under this; headroom below v7x's 64 MiB physical VMEM.
            vmem_limit_bytes=48 * 1024 * 1024,
        ),
    )(x_tiles, w1m, b1p, w2m, b2p)

    out = out[..., :Cout]                             # drop channel padding
    return jnp.transpose(out, (0, 3, 1, 2))           # NHWC -> NCHW


def _reference(x_nchw, params):
    """Pure-JAX reference with the same bf16 quantization points as the kernel."""
    (w1, cb1, g1, be1, rm1, rv1, w2, cb2, g2, be2, rm2, rv2) = params
    f32 = jnp.float32
    s1, b1 = _fold_bn(cb1, g1, be1, rm1, rv1)
    s2, b2 = _fold_bn(cb2, g2, be2, rm2, rv2)
    wf1 = (w1 * s1).astype(jnp.bfloat16).astype(f32)
    wf2 = (w2 * s2).astype(jnp.bfloat16).astype(f32)
    x = jnp.transpose(x_nchw, (0, 2, 3, 1)).astype(jnp.bfloat16).astype(f32)
    dn = ("NHWC", "HWIO", "NHWC")
    y = lax.conv_general_dilated(x, wf1, (1, 1), "SAME",
                                 dimension_numbers=dn) + b1
    y = jnp.maximum(y, 0.0).astype(jnp.bfloat16).astype(f32)   # mid is bf16
    y = lax.conv_general_dilated(y, wf2, (1, 1), "SAME",
                                 dimension_numbers=dn) + b2
    y = jnp.maximum(y, 0.0)
    return jnp.transpose(y, (0, 3, 1, 2))


def _init_params(key, in_channels, out_channels):
    ks = jax.random.split(key, 12)
    f32 = jnp.float32

    def conv_bn(k0, k1, k2, k3, k4, k5, ci, co):
        w = 0.1 * jax.random.normal(k0, (3, 3, ci, co), f32)      # HWIO
        cb = 0.1 * jax.random.normal(k1, (co,), f32)              # conv bias
        gamma = 1.0 + 0.1 * jax.random.normal(k2, (co,), f32)     # BN weight
        beta = 0.1 * jax.random.normal(k3, (co,), f32)            # BN bias
        rmean = 0.1 * jax.random.normal(k4, (co,), f32)           # running_mean
        rvar = jax.random.uniform(k5, (co,), f32, 0.5, 1.5)       # running_var
        return w, cb, gamma, beta, rmean, rvar

    p1 = conv_bn(*ks[0:6], in_channels, out_channels)
    p2 = conv_bn(*ks[6:12], out_channels, out_channels)
    return p1 + p2


if __name__ == "__main__":
    key = jax.random.PRNGKey(0)
    kx, kp = jax.random.split(key)

    N, Cin, Cout, H, W = 2, 4, 8, 16, 16
    x = jax.random.normal(kx, (N, Cin, H, W), jnp.float32)   # NCHW like PyTorch
    params = _init_params(kp, Cin, Cout)

    out = jax.block_until_ready(double_conv(x, params))
    ref = _reference(x, params)

    assert out.shape == (N, Cout, H, W), out.shape
    err = float(jnp.max(jnp.abs(out - ref)))
    assert err < 1e-2, f"mismatch vs reference: max abs err {err}"

    print("KERNEL_OK")
</pallas_src>

<mosaic_0001>
module attributes {stable_mosaic.version = 11 : i64} {
  func.func @_double_conv_kernel(%arg0: i32, %arg1: i32, %arg2: memref<1x1x12x18x4xbf16, #tpu.memory_space<vmem>>, %arg3: memref<9x4x128xbf16, #tpu.memory_space<vmem>>, %arg4: memref<1x128xf32, #tpu.memory_space<vmem>>, %arg5: memref<9x128x128xbf16, #tpu.memory_space<vmem>>, %arg6: memref<1x128xf32, #tpu.memory_space<vmem>>, %arg7: memref<1x8x16x128xf32, #tpu.memory_space<vmem>>, %arg8: memref<10x18x128xbf16, #tpu.memory_space<vmem>>) attributes {dimension_semantics = [#tpu.dimension_semantics<parallel>, #tpu.dimension_semantics<parallel>], iteration_bounds = array<i64: 2, 2>, scalar_prefetch = 0 : i64, scratch_operands = 1 : i64, tpu.core_type = #tpu.core_type<tc>, window_params = [{transform_indices = @transform_0, window_bounds = array<i64: 1, 1, 12, 18, 4>}, {pipeline_mode = #tpu.pipeline_mode<synchronous>, transform_indices = @transform_1, window_bounds = array<i64: 9, 4, 128>}, {pipeline_mode = #tpu.pipeline_mode<synchronous>, transform_indices = @transform_2, window_bounds = array<i64: 1, 128>}, {pipeline_mode = #tpu.pipeline_mode<synchronous>, transform_indices = @transform_3, window_bounds = array<i64: 9, 128, 128>}, {pipeline_mode = #tpu.pipeline_mode<synchronous>, transform_indices = @transform_4, window_bounds = array<i64: 1, 128>}, {transform_indices = @transform_5, window_bounds = array<i64: 1, 8, 16, 128>}]} {
    %cst = arith.constant 0.000000e+00 : f32
    %0 = vector.broadcast %cst : f32 to vector<160x128xf32>
    %c0 = arith.constant 0 : index
    %c0_0 = arith.constant 0 : index
    %c0_1 = arith.constant 0 : index
    %c0_2 = arith.constant 0 : index
    %c0_3 = arith.constant 0 : index
    %1 = vector.load %arg2[%c0, %c0_0, %c0_1, %c0_2, %c0_3] : memref<1x1x12x18x4xbf16, #tpu.memory_space<vmem>>, vector<1x1x10x16x4xbf16>
    %2 = vector.shape_cast %1 : vector<1x1x10x16x4xbf16> to vector<10x16x4xbf16>
    %3 = vector.shape_cast %2 : vector<10x16x4xbf16> to vector<160x4xbf16>
    %c0_4 = arith.constant 0 : index
    %c0_5 = arith.constant 0 : index
    %c0_6 = arith.constant 0 : index
    %4 = vector.load %arg3[%c0_4, %c0_5, %c0_6] : memref<9x4x128xbf16, #tpu.memory_space<vmem>>, vector<1x4x128xbf16>
    %5 = vector.shape_cast %4 : vector<1x4x128xbf16> to vector<4x128xbf16>
    %cst_7 = arith.constant dense<0.000000e+00> : vector<160x128xf32>
    %6 = tpu.matmul %3, %5, %cst_7 {dimension_numbers = #tpu.dot_dimension_numbers<[1], [0], [0], [1], [0, 0, 1, 1], [], []>} : vector<160x4xbf16>, vector<4x128xbf16>, vector<160x128xf32> -> vector<160x128xf32>
    %7 = arith.addf %0, %6 : vector<160x128xf32>
    %c0_8 = arith.constant 0 : index
    %c0_9 = arith.constant 0 : index
    %c0_10 = arith.constant 0 : index
    %c1 = arith.constant 1 : index
    %c0_11 = arith.constant 0 : index
    %8 = vector.load %arg2[%c0_8, %c0_9, %c0_10, %c1, %c0_11] : memref<1x1x12x18x4xbf16, #tpu.memory_space<vmem>>, vector<1x1x10x16x4xbf16>
    %9 = vector.shape_cast %8 : vector<1x1x10x16x4xbf16> to vector<10x16x4xbf16>
    %10 = vector.shape_cast %9 : vector<10x16x4xbf16> to vector<160x4xbf16>
    %c1_12 = arith.constant 1 : index
    %c0_13 = arith.constant 0 : index
    %c0_14 = arith.constant 0 : index
    %11 = vector.load %arg3[%c1_12, %c0_13, %c0_14] : memref<9x4x128xbf16, #tpu.memory_space<vmem>>, vector<1x4x128xbf16>
    %12 = vector.shape_cast %11 : vector<1x4x128xbf16> to vector<4x128xbf16>
    %cst_15 = arith.constant dense<0.000000e+00> : vector<160x128xf32>
    %13 = tpu.matmul %10, %12, %cst_15 {dimension_numbers = #tpu.dot_dimension_numbers<[1], [0], [0], [1], [0, 0, 1, 1], [], []>} : vector<160x4xbf16>, vector<4x128xbf16>, vector<160x128xf32> -> vector<160x128xf32>
    %14 = arith.addf %7, %13 : vector<160x128xf32>
    %c0_16 = arith.constant 0 : index
    %c0_17 = arith.constant 0 : index
    %c0_18 = arith.constant 0 : index
    %c2 = arith.constant 2 : index
    %c0_19 = arith.constant 0 : index
    %15 = vector.load %arg2[%c0_16, %c0_17, %c0_18, %c2, %c0_19] : memref<1x1x12x18x4xbf16, #tpu.memory_space<vmem>>, vector<1x1x10x16x4xbf16>
    %16 = vector.shape_cast %15 : vector<1x1x10x16x4xbf16> to vector<10x16x4xbf16>
    %17 = vector.shape_cast %16 : vector<10x16x4xbf16> to vector<160x4xbf16>
    %c2_20 = arith.constant 2 : index
    %c0_21 = arith.constant 0 : index
    %c0_22 = arith.constant 0 : index
    %18 = vector.load %arg3[%c2_20, %c0_21, %c0_22] : memref<9x4x128xbf16, #tpu.memory_space<vmem>>, vector<1x4x128xbf16>
    %19 = vector.shape_cast %18 : vector<1x4x128xbf16> to vector<4x128xbf16>
    %cst_23 = arith.constant dense<0.000000e+00> : vector<160x128xf32>
    %20 = tpu.matmul %17, %19, %cst_23 {dimension_numbers = #tpu.dot_dimension_numbers<[1], [0], [0], [1], [0, 0, 1, 1], [], []>} : vector<160x4xbf16>, vector<4x128xbf16>, vector<160x128xf32> -> vector<160x128xf32>
    %21 = arith.addf %14, %20 : vector<160x128xf32>
    %c0_24 = arith.constant 0 : index
    %c0_25 = arith.constant 0 : index
    %c1_26 = arith.constant 1 : index
    %c0_27 = arith.constant 0 : index
    %c0_28 = arith.constant 0 : index
    %22 = vector.load %arg2[%c0_24, %c0_25, %c1_26, %c0_27, %c0_28] : memref<1x1x12x18x4xbf16, #tpu.memory_space<vmem>>, vector<1x1x10x16x4xbf16>
    %23 = vector.shape_cast %22 : vector<1x1x10x16x4xbf16> to vector<10x16x4xbf16>
    %24 = vector.shape_cast %23 : vector<10x16x4xbf16> to vector<160x4xbf16>
    %c3 = arith.constant 3 : index
    %c0_29 = arith.constant 0 : index
    %c0_30 = arith.constant 0 : index
    %25 = vector.load %arg3[%c3, %c0_29, %c0_30] : memref<9x4x128xbf16, #tpu.memory_space<vmem>>, vector<1x4x128xbf16>
    %26 = vector.shape_cast %25 : vector<1x4x128xbf16> to vector<4x128xbf16>
    %cst_31 = arith.constant dense<0.000000e+00> : vector<160x128xf32>
    %27 = tpu.matmul %24, %26, %cst_31 {dimension_numbers = #tpu.dot_dimension_numbers<[1], [0], [0], [1], [0, 0, 1, 1], [], []>} : vector<160x4xbf16>, vector<4x128xbf16>, vector<160x128xf32> -> vector<160x128xf32>
    %28 = arith.addf %21, %27 : vector<160x128xf32>
    %c0_32 = arith.constant 0 : index
    %c0_33 = arith.constant 0 : index
    %c1_34 = arith.constant 1 : index
    %c1_35 = arith.constant 1 : index
    %c0_36 = arith.constant 0 : index
    %29 = vector.load %arg2[%c0_32, %c0_33, %c1_34, %c1_35, %c0_36] : memref<1x1x12x18x4xbf16, #tpu.memory_space<vmem>>, vector<1x1x10x16x4xbf16>
    %30 = vector.shape_cast %29 : vector<1x1x10x16x4xbf16> to vector<10x16x4xbf16>
    %31 = vector.shape_cast %30 : vector<10x16x4xbf16> to vector<160x4xbf16>
    %c4 = arith.constant 4 : index
    %c0_37 = arith.constant 0 : index
    %c0_38 = arith.constant 0 : index
    %32 = vector.load %arg3[%c4, %c0_37, %c0_38] : memref<9x4x128xbf16, #tpu.memory_space<vmem>>, vector<1x4x128xbf16>
    %33 = vector.shape_cast %32 : vector<1x4x128xbf16> to vector<4x128xbf16>
    %cst_39 = arith.constant dense<0.000000e+00> : vector<160x128xf32>
    %34 = tpu.matmul %31, %33, %cst_39 {dimension_numbers = #tpu.dot_dimension_numbers<[1], [0], [0], [1], [0, 0, 1, 1], [], []>} : vector<160x4xbf16>, vector<4x128xbf16>, vector<160x128xf32> -> vector<160x128xf32>
    %35 = arith.addf %28, %34 : vector<160x128xf32>
    %c0_40 = arith.constant 0 : index
    %c0_41 = arith.constant 0 : index
    %c1_42 = arith.constant 1 : index
    %c2_43 = arith.constant 2 : index
    %c0_44 = arith.constant 0 : index
    %36 = vector.load %arg2[%c0_40, %c0_41, %c1_42, %c2_43, %c0_44] : memref<1x1x12x18x4xbf16, #tpu.memory_space<vmem>>, vector<1x1x10x16x4xbf16>
    %37 = vector.shape_cast %36 : vector<1x1x10x16x4xbf16> to vector<10x16x4xbf16>
    %38 = vector.shape_cast %37 : vector<10x16x4xbf16> to vector<160x4xbf16>
    %c5 = arith.constant 5 : index
    %c0_45 = arith.constant 0 : index
    %c0_46 = arith.constant 0 : index
    %39 = vector.load %arg3[%c5, %c0_45, %c0_46] : memref<9x4x128xbf16, #tpu.memory_space<vmem>>, vector<1x4x128xbf16>
    %40 = vector.shape_cast %39 : vector<1x4x128xbf16> to vector<4x128xbf16>
    %cst_47 = arith.constant dense<0.000000e+00> : vector<160x128xf32>
    %41 = tpu.matmul %38, %40, %cst_47 {dimension_numbers = #tpu.dot_dimension_numbers<[1], [0], [0], [1], [0, 0, 1, 1], [], []>} : vector<160x4xbf16>, vector<4x128xbf16>, vector<160x128xf32> -> vector<160x128xf32>
    %42 = arith.addf %35, %41 : vector<160x128xf32>
    %c0_48 = arith.constant 0 : index
    %c0_49 = arith.constant 0 : index
    %c2_50 = arith.constant 2 : index
    %c0_51 = arith.constant 0 : index
    %c0_52 = arith.constant 0 : index
    %43 = vector.load %arg2[%c0_48, %c0_49, %c2_50, %c0_51, %c0_52] : memref<1x1x12x18x4xbf16, #tpu.memory_space<vmem>>, vector<1x1x10x16x4xbf16>
    %44 = vector.shape_cast %43 : vector<1x1x10x16x4xbf16> to vector<10x16x4xbf16>
    %45 = vector.shape_cast %44 : vector<10x16x4xbf16> to vector<160x4xbf16>
    %c6 = arith.constant 6 : index
    %c0_53 = arith.constant 0 : index
    %c0_54 = arith.constant 0 : index
    %46 = vector.load %arg3[%c6, %c0_53, %c0_54] : memref<9x4x128xbf16, #tpu.memory_space<vmem>>, vector<1x4x128xbf16>
    %47 = vector.shape_cast %46 : vector<1x4x128xbf16> to vector<4x128xbf16>
    %cst_55 = arith.constant dense<0.000000e+00> : vector<160x128xf32>
    %48 = tpu.matmul %45, %47, %cst_55 {dimension_numbers = #tpu.dot_dimension_numbers<[1], [0], [0], [1], [0, 0, 1, 1], [], []>} : vector<160x4xbf16>, vector<4x128xbf16>, vector<160x128xf32> -> vector<160x128xf32>
    %49 = arith.addf %42, %48 : vector<160x128xf32>
    %c0_56 = arith.constant 0 : index
    %c0_57 = arith.constant 0 : index
    %c2_58 = arith.constant 2 : index
    %c1_59 = arith.constant 1 : index
    %c0_60 = arith.constant 0 : index
    %50 = vector.load %arg2[%c0_56, %c0_57, %c2_58, %c1_59, %c0_60] : memref<1x1x12x18x4xbf16, #tpu.memory_space<vmem>>, vector<1x1x10x16x4xbf16>
    %51 = vector.shape_cast %50 : vector<1x1x10x16x4xbf16> to vector<10x16x4xbf16>
    %52 = vector.shape_cast %51 : vector<10x16x4xbf16> to vector<160x4xbf16>
    %c7 = arith.constant 7 : index
    %c0_61 = arith.constant 0 : index
    %c0_62 = arith.constant 0 : index
    %53 = vector.load %arg3[%c7, %c0_61, %c0_62] : memref<9x4x128xbf16, #tpu.memory_space<vmem>>, vector<1x4x128xbf16>
    %54 = vector.shape_cast %53 : vector<1x4x128xbf16> to vector<4x128xbf16>
    %cst_63 = arith.constant dense<0.000000e+00> : vector<160x128xf32>
    %55 = tpu.matmul %52, %54, %cst_63 {dimension_numbers = #tpu.dot_dimension_numbers<[1], [0], [0], [1], [0, 0, 1, 1], [], []>} : vector<160x4xbf16>, vector<4x128xbf16>, vector<160x128xf32> -> vector<160x128xf32>
    %56 = arith.addf %49, %55 : vector<160x128xf32>
    %c0_64 = arith.constant 0 : index
    %c0_65 = arith.constant 0 : index
    %c2_66 = arith.constant 2 : index
    %c2_67 = arith.constant 2 : index
    %c0_68 = arith.constant 0 : index
    %57 = vector.load %arg2[%c0_64, %c0_65, %c2_66, %c2_67, %c0_68] : memref<1x1x12x18x4xbf16, #tpu.memory_space<vmem>>, vector<1x1x10x16x4xbf16>
    %58 = vector.shape_cast %57 : vector<1x1x10x16x4xbf16> to vector<10x16x4xbf16>
    %59 = vector.shape_cast %58 : vector<10x16x4xbf16> to vector<160x4xbf16>
    %c8 = arith.constant 8 : index
    %c0_69 = arith.constant 0 : index
    %c0_70 = arith.constant 0 : index
    %60 = vector.load %arg3[%c8, %c0_69, %c0_70] : memref<9x4x128xbf16, #tpu.memory_space<vmem>>, vector<1x4x128xbf16>
    %61 = vector.shape_cast %60 : vector<1x4x128xbf16> to vector<4x128xbf16>
    %cst_71 = arith.constant dense<0.000000e+00> : vector<160x128xf32>
    %62 = tpu.matmul %59, %61, %cst_71 {dimension_numbers = #tpu.dot_dimension_numbers<[1], [0], [0], [1], [0, 0, 1, 1], [], []>} : vector<160x4xbf16>, vector<4x128xbf16>, vector<160x128xf32> -> vector<160x128xf32>
    %63 = arith.addf %56, %62 : vector<160x128xf32>
    %c0_72 = arith.constant 0 : index
    %c0_73 = arith.constant 0 : index
    %64 = vector.load %arg4[%c0_72, %c0_73] : memref<1x128xf32, #tpu.memory_space<vmem>>, vector<1x128xf32>
    %65 = vector.broadcast %64 : vector<1x128xf32> to vector<160x128xf32>
    %66 = arith.addf %63, %65 : vector<160x128xf32>
    %cst_74 = arith.constant 0.000000e+00 : f32
    %67 = vector.broadcast %cst_74 : f32 to vector<160x128xf32>
    %68 = arith.maximumf %66, %67 : vector<160x128xf32>
    %69 = vector.shape_cast %68 : vector<160x128xf32> to vector<10x16x128xf32>
    %70 = arith.truncf %69 : vector<10x16x128xf32> to vector<10x16x128xbf16>
    %c0_75 = arith.constant 0 : index
    %c1_76 = arith.constant 1 : index
    %c0_77 = arith.constant 0 : index
    %71 = vector.load %arg8[%c0_75, %c1_76, %c0_77] : memref<10x18x128xbf16, #tpu.memory_space<vmem>>, vector<10x16x128xbf16>
    tpu.vector_store %arg8[%c0_75, %c1_76, %c0_77], %70 {strides = array<i32>} : memref<10x18x128xbf16, #tpu.memory_space<vmem>>, vector<10x16x128xbf16>,
    %cst_78 = arith.constant 0.000000e+00 : bf16
    %72 = vector.broadcast %cst_78 : bf16 to vector<10x1x128xbf16>
    %c0_79 = arith.constant 0 : index
    %c0_80 = arith.constant 0 : index
    %c0_81 = arith.constant 0 : index
    %73 = vector.load %arg8[%c0_79, %c0_80, %c0_81] : memref<10x18x128xbf16, #tpu.memory_space<vmem>>, vector<10x1x128xbf16>
    tpu.vector_store %arg8[%c0_79, %c0_80, %c0_81], %72 {strides = array<i32>} : memref<10x18x128xbf16, #tpu.memory_space<vmem>>, vector<10x1x128xbf16>,
    %cst_82 = arith.constant 0.000000e+00 : bf16
    %74 = vector.broadcast %cst_82 : bf16 to vector<10x1x128xbf16>
    %c0_83 = arith.constant 0 : index
    %c17 = arith.constant 17 : index
    %c0_84 = arith.constant 0 : index
    %75 = vector.load %arg8[%c0_83, %c17, %c0_84] : memref<10x18x128xbf16, #tpu.memory_space<vmem>>, vector<10x1x128xbf16>
    tpu.vector_store %arg8[%c0_83, %c17, %c0_84], %74 {strides = array<i32>} : memref<10x18x128xbf16, #tpu.memory_space<vmem>>, vector<10x1x128xbf16>,
    %c0_i32 = arith.constant 0 : i32
    %76 = arith.cmpi eq, %arg1, %c0_i32 : i32
    %77 = arith.extui %76 : i1 to i32
    %c0_i32_85 = arith.constant 0 : i32
    %78 = arith.cmpi ne, %77, %c0_i32_85 : i32
    scf.if %78 {
      %cst_158 = arith.constant 0.000000e+00 : bf16
      %146 = vector.broadcast %cst_158 : bf16 to vector<1x18x128xbf16>
      %c0_159 = arith.constant 0 : index
      %c0_160 = arith.constant 0 : index
      %c0_161 = arith.constant 0 : index
      %147 = vector.load %arg8[%c0_159, %c0_160, %c0_161] : memref<10x18x128xbf16, #tpu.memory_space<vmem>>, vector<1x18x128xbf16>
      tpu.vector_store %arg8[%c0_159, %c0_160, %c0_161], %146 {strides = array<i32>} : memref<10x18x128xbf16, #tpu.memory_space<vmem>>, vector<1x18x128xbf16>,
    } else {
    }
    %c1_i32 = arith.constant 1 : i32
    %79 = arith.cmpi eq, %arg1, %c1_i32 : i32
    %80 = arith.extui %79 : i1 to i32
    %c0_i32_86 = arith.constant 0 : i32
    %81 = arith.cmpi ne, %80, %c0_i32_86 : i32
    scf.if %81 {
      %cst_158 = arith.constant 0.000000e+00 : bf16
      %146 = vector.broadcast %cst_158 : bf16 to vector<1x18x128xbf16>
      %c9 = arith.constant 9 : index
      %c0_159 = arith.constant 0 : index
      %c0_160 = arith.constant 0 : index
      %147 = vector.load %arg8[%c9, %c0_159, %c0_160] : memref<10x18x128xbf16, #tpu.memory_space<vmem>>, vector<1x18x128xbf16>
      tpu.vector_store %arg8[%c9, %c0_159, %c0_160], %146 {strides = array<i32>} : memref<10x18x128xbf16, #tpu.memory_space<vmem>>, vector<1x18x128xbf16>,
    } else {
    }
    %cst_87 = arith.constant 0.000000e+00 : f32
    %82 = vector.broadcast %cst_87 : f32 to vector<128x128xf32>
    %c0_88 = arith.constant 0 : index
    %c0_89 = arith.constant 0 : index
    %c0_90 = arith.constant 0 : index
    %83 = vector.load %arg8[%c0_88, %c0_89, %c0_90] : memref<10x18x128xbf16, #tpu.memory_space<vmem>>, vector<8x16x128xbf16>
    %84 = vector.shape_cast %83 : vector<8x16x128xbf16> to vector<128x128xbf16>
    %c0_91 = arith.constant 0 : index
    %c0_92 = arith.constant 0 : index
    %c0_93 = arith.constant 0 : index
    %85 = vector.load %arg5[%c0_91, %c0_92, %c0_93] : memref<9x128x128xbf16, #tpu.memory_space<vmem>>, vector<1x128x128xbf16>
    %86 = vector.shape_cast %85 : vector<1x128x128xbf16> to vector<128x128xbf16>
    %cst_94 = arith.constant dense<0.000000e+00> : vector<128x128xf32>
    %87 = tpu.matmul %84, %86, %cst_94 {dimension_numbers = #tpu.dot_dimension_numbers<[1], [0], [0], [1], [0, 0, 1, 1], [], []>} : vector<128x128xbf16>, vector<128x128xbf16>, vector<128x128xf32> -> vector<128x128xf32>
    %88 = arith.addf %82, %87 : vector<128x128xf32>
    %c0_95 = arith.constant 0 : index
    %c1_96 = arith.constant 1 : index
    %c0_97 = arith.constant 0 : index
    %89 = vector.load %arg8[%c0_95, %c1_96, %c0_97] : memref<10x18x128xbf16, #tpu.memory_space<vmem>>, vector<8x16x128xbf16>
    %90 = vector.shape_cast %89 : vector<8x16x128xbf16> to vector<128x128xbf16>
    %c1_98 = arith.constant 1 : index
    %c0_99 = arith.constant 0 : index
    %c0_100 = arith.constant 0 : index
    %91 = vector.load %arg5[%c1_98, %c0_99, %c0_100] : memref<9x128x128xbf16, #tpu.memory_space<vmem>>, vector<1x128x128xbf16>
    %92 = vector.shape_cast %91 : vector<1x128x128xbf16> to vector<128x128xbf16>
    %cst_101 = arith.constant dense<0.000000e+00> : vector<128x128xf32>
    %93 = tpu.matmul %90, %92, %cst_101 {dimension_numbers = #tpu.dot_dimension_numbers<[1], [0], [0], [1], [0, 0, 1, 1], [], []>} : vector<128x128xbf16>, vector<128x128xbf16>, vector<128x128xf32> -> vector<128x128xf32>
    %94 = arith.addf %88, %93 : vector<128x128xf32>
    %c0_102 = arith.constant 0 : index
    %c2_103 = arith.constant 2 : index
    %c0_104 = arith.constant 0 : index
    %95 = vector.load %arg8[%c0_102, %c2_103, %c0_104] : memref<10x18x128xbf16, #tpu.memory_space<vmem>>, vector<8x16x128xbf16>
    %96 = vector.shape_cast %95 : vector<8x16x128xbf16> to vector<128x128xbf16>
    %c2_105 = arith.constant 2 : index
    %c0_106 = arith.constant 0 : index
    %c0_107 = arith.constant 0 : index
    %97 = vector.load %arg5[%c2_105, %c0_106, %c0_107] : memref<9x128x128xbf16, #tpu.memory_space<vmem>>, vector<1x128x128xbf16>
    %98 = vector.shape_cast %97 : vector<1x128x128xbf16> to vector<128x128xbf16>
    %cst_108 = arith.constant dense<0.000000e+00> : vector<128x128xf32>
    %99 = tpu.matmul %96, %98, %cst_108 {dimension_numbers = #tpu.dot_dimension_numbers<[1], [0], [0], [1], [0, 0, 1, 1], [], []>} : vector<128x128xbf16>, vector<128x128xbf16>, vector<128x128xf32> -> vector<128x128xf32>
    %100 = arith.addf %94, %99 : vector<128x128xf32>
    %c1_109 = arith.constant 1 : index
    %c0_110 = arith.constant 0 : index
    %c0_111 = arith.constant 0 : index
    %101 = vector.load %arg8[%c1_109, %c0_110, %c0_111] : memref<10x18x128xbf16, #tpu.memory_space<vmem>>, vector<8x16x128xbf16>
    %102 = vector.shape_cast %101 : vector<8x16x128xbf16> to vector<128x128xbf16>
    %c3_112 = arith.constant 3 : index
    %c0_113 = arith.constant 0 : index
    %c0_114 = arith.constant 0 : index
    %103 = vector.load %arg5[%c3_112, %c0_113, %c0_114] : memref<9x128x128xbf16, #tpu.memory_space<vmem>>, vector<1x128x128xbf16>
    %104 = vector.shape_cast %103 : vector<1x128x128xbf16> to vector<128x128xbf16>
    %cst_115 = arith.constant dense<0.000000e+00> : vector<128x128xf32>
    %105 = tpu.matmul %102, %104, %cst_115 {dimension_numbers = #tpu.dot_dimension_numbers<[1], [0], [0], [1], [0, 0, 1, 1], [], []>} : vector<128x128xbf16>, vector<128x128xbf16>, vector<128x128xf32> -> vector<128x128xf32>
    %106 = arith.addf %100, %105 : vector<128x128xf32>
    %c1_116 = arith.constant 1 : index
    %c1_117 = arith.constant 1 : index
    %c0_118 = arith.constant 0 : index
    %107 = vector.load %arg8[%c1_116, %c1_117, %c0_118] : memref<10x18x128xbf16, #tpu.memory_space<vmem>>, vector<8x16x128xbf16>
    %108 = vector.shape_cast %107 : vector<8x16x128xbf16> to vector<128x128xbf16>
    %c4_119 = arith.constant 4 : index
    %c0_120 = arith.constant 0 : index
    %c0_121 = arith.constant 0 : index
    %109 = vector.load %arg5[%c4_119, %c0_120, %c0_121] : memref<9x128x128xbf16, #tpu.memory_space<vmem>>, vector<1x128x128xbf16>
    %110 = vector.shape_cast %109 : vector<1x128x128xbf16> to vector<128x128xbf16>
    %cst_122 = arith.constant dense<0.000000e+00> : vector<128x128xf32>
    %111 = tpu.matmul %108, %110, %cst_122 {dimension_numbers = #tpu.dot_dimension_numbers<[1], [0], [0], [1], [0, 0, 1, 1], [], []>} : vector<128x128xbf16>, vector<128x128xbf16>, vector<128x128xf32> -> vector<128x128xf32>
    %112 = arith.addf %106, %111 : vector<128x128xf32>
    %c1_123 = arith.constant 1 : index
    %c2_124 = arith.constant 2 : index
    %c0_125 = arith.constant 0 : index
    %113 = vector.load %arg8[%c1_123, %c2_124, %c0_125] : memref<10x18x128xbf16, #tpu.memory_space<vmem>>, vector<8x16x128xbf16>
    %114 = vector.shape_cast %113 : vector<8x16x128xbf16> to vector<128x128xbf16>
    %c5_126 = arith.constant 5 : index
    %c0_127 = arith.constant 0 : index
    %c0_128 = arith.constant 0 : index
    %115 = vector.load %arg5[%c5_126, %c0_127, %c0_128] : memref<9x128x128xbf16, #tpu.memory_space<vmem>>, vector<1x128x128xbf16>
    %116 = vector.shape_cast %115 : vector<1x128x128xbf16> to vector<128x128xbf16>
    %cst_129 = arith.constant dense<0.000000e+00> : vector<128x128xf32>
    %117 = tpu.matmul %114, %116, %cst_129 {dimension_numbers = #tpu.dot_dimension_numbers<[1], [0], [0], [1], [0, 0, 1, 1], [], []>} : vector<128x128xbf16>, vector<128x128xbf16>, vector<128x128xf32> -> vector<128x128xf32>
    %118 = arith.addf %112, %117 : vector<128x128xf32>
    %c2_130 = arith.constant 2 : index
    %c0_131 = arith.constant 0 : index
    %c0_132 = arith.constant 0 : index
    %119 = vector.load %arg8[%c2_130, %c0_131, %c0_132] : memref<10x18x128xbf16, #tpu.memory_space<vmem>>, vector<8x16x128xbf16>
    %120 = vector.shape_cast %119 : vector<8x16x128xbf16> to vector<128x128xbf16>
    %c6_133 = arith.constant 6 : index
    %c0_134 = arith.constant 0 : index
    %c0_135 = arith.constant 0 : index
    %121 = vector.load %arg5[%c6_133, %c0_134, %c0_135] : memref<9x128x128xbf16, #tpu.memory_space<vmem>>, vector<1x128x128xbf16>
    %122 = vector.shape_cast %121 : vector<1x128x128xbf16> to vector<128x128xbf16>
    %cst_136 = arith.constant dense<0.000000e+00> : vector<128x128xf32>
    %123 = tpu.matmul %120, %122, %cst_136 {dimension_numbers = #tpu.dot_dimension_numbers<[1], [0], [0], [1], [0, 0, 1, 1], [], []>} : vector<128x128xbf16>, vector<128x128xbf16>, vector<128x128xf32> -> vector<128x128xf32>
    %124 = arith.addf %118, %123 : vector<128x128xf32>
    %c2_137 = arith.constant 2 : index
    %c1_138 = arith.constant 1 : index
    %c0_139 = arith.constant 0 : index
    %125 = vector.load %arg8[%c2_137, %c1_138, %c0_139] : memref<10x18x128xbf16, #tpu.memory_space<vmem>>, vector<8x16x128xbf16>
    %126 = vector.shape_cast %125 : vector<8x16x128xbf16> to vector<128x128xbf16>
    %c7_140 = arith.constant 7 : index
    %c0_141 = arith.constant 0 : index
    %c0_142 = arith.constant 0 : index
    %127 = vector.load %arg5[%c7_140, %c0_141, %c0_142] : memref<9x128x128xbf16, #tpu.memory_space<vmem>>, vector<1x128x128xbf16>
    %128 = vector.shape_cast %127 : vector<1x128x128xbf16> to vector<128x128xbf16>
    %cst_143 = arith.constant dense<0.000000e+00> : vector<128x128xf32>
    %129 = tpu.matmul %126, %128, %cst_143 {dimension_numbers = #tpu.dot_dimension_numbers<[1], [0], [0], [1], [0, 0, 1, 1], [], []>} : vector<128x128xbf16>, vector<128x128xbf16>, vector<128x128xf32> -> vector<128x128xf32>
    %130 = arith.addf %124, %129 : vector<128x128xf32>
    %c2_144 = arith.constant 2 : index
    %c2_145 = arith.constant 2 : index
    %c0_146 = arith.constant 0 : index
    %131 = vector.load %arg8[%c2_144, %c2_145, %c0_146] : memref<10x18x128xbf16, #tpu.memory_space<vmem>>, vector<8x16x128xbf16>
    %132 = vector.shape_cast %131 : vector<8x16x128xbf16> to vector<128x128xbf16>
    %c8_147 = arith.constant 8 : index
    %c0_148 = arith.constant 0 : index
    %c0_149 = arith.constant 0 : index
    %133 = vector.load %arg5[%c8_147, %c0_148, %c0_149] : memref<9x128x128xbf16, #tpu.memory_space<vmem>>, vector<1x128x128xbf16>
    %134 = vector.shape_cast %133 : vector<1x128x128xbf16> to vector<128x128xbf16>
    %cst_150 = arith.constant dense<0.000000e+00> : vector<128x128xf32>
    %135 = tpu.matmul %132, %134, %cst_150 {dimension_numbers = #tpu.dot_dimension_numbers<[1], [0], [0], [1], [0, 0, 1, 1], [], []>} : vector<128x128xbf16>, vector<128x128xbf16>, vector<128x128xf32> -> vector<128x128xf32>
    %136 = arith.addf %130, %135 : vector<128x128xf32>
    %c0_151 = arith.constant 0 : index
    %c0_152 = arith.constant 0 : index
    %137 = vector.load %arg6[%c0_151, %c0_152] : memref<1x128xf32, #tpu.memory_space<vmem>>, vector<1x128xf32>
    %138 = vector.broadcast %137 : vector<1x128xf32> to vector<128x128xf32>
    %139 = arith.addf %136, %138 : vector<128x128xf32>
    %cst_153 = arith.constant 0.000000e+00 : f32
    %140 = vector.broadcast %cst_153 : f32 to vector<128x128xf32>
    %141 = arith.maximumf %139, %140 : vector<128x128xf32>
    %142 = vector.shape_cast %141 : vector<128x128xf32> to vector<8x16x128xf32>
    %c0_154 = arith.constant 0 : index
    %c0_155 = arith.constant 0 : index
    %c0_156 = arith.constant 0 : index
    %c0_157 = arith.constant 0 : index
    %143 = vector.load %arg7[%c0_154, %c0_155, %c0_156, %c0_157] : memref<1x8x16x128xf32, #tpu.memory_space<vmem>>, vector<1x8x16x128xf32>
    %144 = vector.shape_cast %143 : vector<1x8x16x128xf32> to vector<8x16x128xf32>
    %145 = vector.shape_cast %142 : vector<8x16x128xf32> to vector<1x8x16x128xf32>
    tpu.vector_store %arg7[%c0_154, %c0_155, %c0_156, %c0_157], %145 {strides = array<i32>} : memref<1x8x16x128xf32, #tpu.memory_space<vmem>>, vector<1x8x16x128xf32>,
    return
  }
  func.func @transform_0(%arg0: i32, %arg1: i32) -> (i32, i32, i32, i32, i32) {
    %c0_i32 = arith.constant 0 : i32
    %c0_i32_0 = arith.constant 0 : i32
    %c0_i32_1 = arith.constant 0 : i32
    %c0_i32_2 = arith.constant 0 : i32
    return %arg0, %arg1, %c0_i32, %c0_i32_0, %c0_i32_1 : i32, i32, i32, i32, i32
  }
  func.func @transform_1(%arg0: i32, %arg1: i32) -> (i32, i32, i32) {
    %c0_i32 = arith.constant 0 : i32
    %c0_i32_0 = arith.constant 0 : i32
    %c0_i32_1 = arith.constant 0 : i32
    %c0_i32_2 = arith.constant 0 : i32
    return %c0_i32, %c0_i32_0, %c0_i32_1 : i32, i32, i32
  }
  func.func @transform_2(%arg0: i32, %arg1: i32) -> (i32, i32) {
    %c0_i32 = arith.constant 0 : i32
    %c0_i32_0 = arith.constant 0 : i32
    %c0_i32_1 = arith.constant 0 : i32
    return %c0_i32, %c0_i32_0 : i32, i32
  }
  func.func @transform_3(%arg0: i32, %arg1: i32) -> (i32, i32, i32) {
    %c0_i32 = arith.constant 0 : i32
    %c0_i32_0 = arith.constant 0 : i32
    %c0_i32_1 = arith.constant 0 : i32
    %c0_i32_2 = arith.constant 0 : i32
    return %c0_i32, %c0_i32_0, %c0_i32_1 : i32, i32, i32
  }
  func.func @transform_4(%arg0: i32, %arg1: i32) -> (i32, i32) {
    %c0_i32 = arith.constant 0 : i32
    %c0_i32_0 = arith.constant 0 : i32
    %c0_i32_1 = arith.constant 0 : i32
    return %c0_i32, %c0_i32_0 : i32, i32
  }
  func.func @transform_5(%arg0: i32, %arg1: i32) -> (i32, i32, i32, i32) {
    %c0_i32 = arith.constant 0 : i32
    %c0_i32_0 = arith.constant 0 : i32
    %c0_i32_1 = arith.constant 0 : i32
    return %arg0, %arg1, %c0_i32, %c0_i32_0 : i32, i32, i32, i32
  }
}

</mosaic_0001>

<llo_original>
// kernel: double_conv.1
$region0: #{double_conv.1}
  #allocation0 [shape = 'u32[]', space=smem, size = 0x4, offset = 0x4, fixed_abs, tag = 'smem constant byte address 0x4 - core index']
  #allocation1 [shape = 'u32[144,128]{1,0:T(1,128)}', space=vmem, size = 0x12000, scoped, tag = 'internal scratch']
  #allocation2 [shape = 'bf16[10,18,128]{2,1,0:T(8,128)(2,1)}', space=vmem, size = 0xf000, scoped, tag = 'scratch operand']
  %s0 = inlined_call_operand.vmem [shape: bf16[2,2,12,18,4], index: 0, kind: input, shape index: {}]
  %s1 = inlined_call_operand.vmem [shape: bf16[9,4,128], index: 1, kind: input, shape index: {}]
  %s2 = inlined_call_operand.vmem [shape: f32[1,128], index: 2, kind: input, shape index: {}]
  %s3 = inlined_call_operand.vmem [shape: bf16[9,128,128], index: 3, kind: input, shape index: {}]
  %s4 = inlined_call_operand.vmem [shape: f32[1,128], index: 4, kind: input, shape index: {}]
  %s5 = inlined_call_operand.vmem [shape: f32[2,16,16,128], index: 5, kind: output, shape index: {}]
  %s6 = sld [smem:[#allocation0]]
  $region61: #{double_conv.1} parent=0
    _
  %s8 = ssub.s32 1, %s6
  %s9 = scalar_select 0, %s8, %s6
  loop: start=0, step=1, limit=6
  $region2: #{double_conv.1} parent=0 // loop_pre_header
    _
  $region3: #{double_conv.1} parent=0 // loop_header
    %s11 = sphi 0, %s15
    %p12 = scmp.ge.s32.totalorder %s11, 6
    %s18 = sphi 0, %s30
    %s19 = sphi 0, %s26
    %s20 = sphi 0, %s18
    %s21 = sphi 0, %s19
    %s22 = sphi 0, %s20
    %s23 = sphi 0, %s21
    %s35 = sphi 0, %s37
    %s38 = sphi 0, %s35
    %s39 = sphi 0, %s38
    %s55 = sphi 0, %s39
    %s59 = sphi 0, %s59
    %s61 = sphi 0, %s59
    %s62 = sphi 0, %s61
    %s76 = sphi 0, %s62
    %s80 = sphi 0, %s80
    %s82 = sphi 0, %s80
    %s83 = sphi 0, %s82
    %s97 = sphi 0, %s83
    %s101 = sphi 0, %s101
    %s103 = sphi 0, %s101
    %s104 = sphi 0, %s103
    %s118 = sphi 0, %s104
    %s122 = sphi 0, %s122
    %s124 = sphi 0, %s122
    %s125 = sphi 0, %s124
    %s139 = sphi 0, %s125
    %s147 = sphi 0, %s149
    %s150 = sphi 0, %s147
    %s151 = sphi 0, %s150
    %s167 = sphi 0, %s151
  $region4: #{double_conv.1} parent=0 // loop_header_branch
    %14 = sbr.rel (%p12) target = $region8
  $region5: #{double_conv.1} parent=0 // loop_body
    %s16 = ssub.s32 %s11, 1
    %s17 = ssub.s32 %s11, 2
    %s24 = sadd.s32 1, %s19
    %p25 = scmp.ge.s32.totalorder %s24, 2
    %s26 = scalar_select %p25, 0, %s24
    %s27 = sadd.s32 1, %s18
    %s28 = scalar_select %p25, %s27, %s18
    %p29 = scmp.ge.s32.totalorder %s28, 2
    %s30 = scalar_select %p29, 0, %s28
    %s31 = ssub.s32 %s18, %s30
    %s32 = ssub.s32 %s19, %s26
    %s33 = sor.u32 %s31, %s32
    %p34 = scmp.eq.s32.totalorder %s33, 0
    %s36 = sadd.s32 %s35, 1
    %s37 = scalar_select %p34, %s35, %s36
    %p40 = pneg %p34
    %p41 = scmp.eq.s32.totalorder %s11, 3
    %p42 = por %p40, %p41
    %p43 = scmp.ne.s32.totalorder %s35, %s38
    %p44 = scmp.eq.s32.totalorder %s11, 0
    %p45 = por %p43, %p44
    %p46 = scmp.ne.s32.totalorder %s35, %s38
    %p47 = scmp.eq.s32.totalorder %s16, 3
    %p48 = por %p46, %p47
    %p49 = scmp.ne.s32.totalorder %s38, %s39
    %p50 = scmp.eq.s32.totalorder %s16, 0
    %p51 = por %p49, %p50
    %p52 = scmp.ne.s32.totalorder %s38, %s39
    %p53 = scmp.eq.s32.totalorder %s17, 3
    %p54 = por %p52, %p53
    %p56 = scmp.ne.s32.totalorder %s39, %s55
    %p57 = scmp.eq.s32.totalorder %s17, 0
    %p58 = por %p56, %p57
    %s60 = sadd.s32 %s59, 1
    %p63 = scmp.eq.s32.totalorder %s11, 3
    %p64 = scmp.ne.s32.totalorder %s59, %s61
    %p65 = scmp.eq.s32.totalorder %s11, 0
    %p66 = por %p64, %p65
    %p67 = scmp.ne.s32.totalorder %s59, %s61
    %p68 = scmp.eq.s32.totalorder %s16, 3
    %p69 = por %p67, %p68
    %p70 = scmp.ne.s32.totalorder %s61, %s62
    %p71 = scmp.eq.s32.totalorder %s16, 0
    %p72 = por %p70, %p71
    %p73 = scmp.ne.s32.totalorder %s61, %s62
    %p74 = scmp.eq.s32.totalorder %s17, 3
    %p75 = por %p73, %p74
    %p77 = scmp.ne.s32.totalorder %s62, %s76
    %p78 = scmp.eq.s32.totalorder %s17, 0
    %p79 = por %p77, %p78
    %s81 = sadd.s32 %s80, 1
    %p84 = scmp.eq.s32.totalorder %s11, 3
    %p85 = scmp.ne.s32.totalorder %s80, %s82
    %p86 = scmp.eq.s32.totalorder %s11, 0
    %p87 = por %p85, %p86
    %p88 = scmp.ne.s32.totalorder %s80, %s82
    %p89 = scmp.eq.s32.totalorder %s16, 3
    %p90 = por %p88, %p89
    %p91 = scmp.ne.s32.totalorder %s82, %s83
    %p92 = scmp.eq.s32.totalorder %s16, 0
    %p93 = por %p91, %p92
    %p94 = scmp.ne.s32.totalorder %s82, %s83
    %p95 = scmp.eq.s32.totalorder %s17, 3
    %p96 = por %p94, %p95
    %p98 = scmp.ne.s32.totalorder %s83, %s97
    %p99 = scmp.eq.s32.totalorder %s17, 0
    %p100 = por %p98, %p99
    %s102 = sadd.s32 %s101, 1
    %p105 = scmp.eq.s32.totalorder %s11, 3
    %p106 = scmp.ne.s32.totalorder %s101, %s103
    %p107 = scmp.eq.s32.totalorder %s11, 0
    %p108 = por %p106, %p107
    %p109 = scmp.ne.s32.totalorder %s101, %s103
    %p110 = scmp.eq.s32.totalorder %s16, 3
    %p111 = por %p109, %p110
    %p112 = scmp.ne.s32.totalorder %s103, %s104
    %p113 = scmp.eq.s32.totalorder %s16, 0
    %p114 = por %p112, %p113
    %p115 = scmp.ne.s32.totalorder %s103, %s104
    %p116 = scmp.eq.s32.totalorder %s17, 3
    %p117 = por %p115, %p116
    %p119 = scmp.ne.s32.totalorder %s104, %s118
    %p120 = scmp.eq.s32.totalorder %s17, 0
    %p121 = por %p119, %p120
    %s123 = sadd.s32 %s122, 1
    %p126 = scmp.eq.s32.totalorder %s11, 3
    %p127 = scmp.ne.s32.totalorder %s122, %s124
    %p128 = scmp.eq.s32.totalorder %s11, 0
    %p129 = por %p127, %p128
    %p130 = scmp.ne.s32.totalorder %s122, %s124
    %p131 = scmp.eq.s32.totalorder %s16, 3
    %p132 = por %p130, %p131
    %p133 = scmp.ne.s32.totalorder %s124, %s125
    %p134 = scmp.eq.s32.totalorder %s16, 0
    %p135 = por %p133, %p134
    %p136 = scmp.ne.s32.totalorder %s124, %s125
    %p137 = scmp.eq.s32.totalorder %s17, 3
    %p138 = por %p136, %p137
    %p140 = scmp.ne.s32.totalorder %s125, %s139
    %p141 = scmp.eq.s32.totalorder %s17, 0
    %p142 = por %p140, %p141
    %s143 = ssub.s32 %s18, %s30
    %s144 = ssub.s32 %s19, %s26
    %s145 = sor.u32 %s143, %s144
    %p146 = scmp.eq.s32.totalorder %s145, 0
    %s148 = sadd.s32 %s147, 1
    %s149 = scalar_select %p146, %s147, %s148
    %p152 = pneg %p146
    %p153 = scmp.eq.s32.totalorder %s11, 3
    %p154 = por %p152, %p153
    %p155 = scmp.ne.s32.totalorder %s147, %s150
    %p156 = scmp.eq.s32.totalorder %s11, 0
    %p157 = por %p155, %p156
    %p158 = scmp.ne.s32.totalorder %s147, %s150
    %p159 = scmp.eq.s32.totalorder %s16, 3
    %p160 = por %p158, %p159
    %p161 = scmp.ne.s32.totalorder %s150, %s151
    %p162 = scmp.eq.s32.totalorder %s16, 0
    %p163 = por %p161, %p162
    %p164 = scmp.ne.s32.totalorder %s150, %s151
    %p165 = scmp.eq.s32.totalorder %s17, 3
    %p166 = por %p164, %p165
    %p168 = scmp.ne.s32.totalorder %s151, %s167
    %p169 = scmp.eq.s32.totalorder %s17, 0
    %p170 = por %p168, %p169
    %p171 = scmp.le.s32.totalorder 1, %s11
    %p172 = scmp.lt.s32.totalorder %s11, 5
    %p173 = pnand %p171, %p172
    %p174 = pneg %p173
    // Predicated region
    $region9: #{double_conv.1} parent=5 // pred_check
      _
    $region10: #{double_conv.1} parent=5 // pred_check_branch
      %176 = sbr.rel (%p173) target = $region12
    $region11: #{double_conv.1} parent=5 // pred_region
      %s177 = ssub.s32 %s11, 1
      // Predicated region
      $region13: #{double_conv.1} parent=11 // pred_check
        %p178 = pneg %p72
      $region14: #{double_conv.1} parent=11 // pred_check_branch
        %180 = sbr.rel (%p178) target = $region16
      $region15: #{double_conv.1} parent=11 // pred_region
        _
      $region16: #{double_conv.1} parent=11 // pred_fallthru
        _
      // Predicated region
      $region17: #{double_conv.1} parent=11 // pred_check
        %p181 = pneg %p93
      $region18: #{double_conv.1} parent=11 // pred_check_branch
        %183 = sbr.rel (%p181) target = $region20
      $region19: #{double_conv.1} parent=11 // pred_region
        _
      $region20: #{double_conv.1} parent=11 // pred_fallthru
        _
      // Predicated region
      $region21: #{double_conv.1} parent=11 // pred_check
        %p184 = pneg %p114
      $region22: #{double_conv.1} parent=11 // pred_check_branch
        %186 = sbr.rel (%p184) target = $region24
      $region23: #{double_conv.1} parent=11 // pred_region
        _
      $region24: #{double_conv.1} parent=11 // pred_fallthru
        _
      // Predicated region
      $region25: #{double_conv.1} parent=11 // pred_check
        %p187 = pneg %p135
      $region26: #{double_conv.1} parent=11 // pred_check_branch
        %189 = sbr.rel (%p187) target = $region28
      $region27: #{double_conv.1} parent=11 // pred_region
        _
      $region28: #{double_conv.1} parent=11 // pred_fallthru
        _
    $region12: #{double_conv.1} parent=5 // pred_fallthru
      _
    %p190 = scmp.lt.s32.totalorder %s11, 4
    // Predicated region
    $region29: #{double_conv.1} parent=5 // pred_check
      %p191 = pneg %p190
    $region30: #{double_conv.1} parent=5 // pred_check_branch
      %193 = sbr.rel (%p191) target = $region32
    $region31: #{double_conv.1} parent=5 // pred_region
      // Predicated region
      $region33: #{double_conv.1} parent=31 // pred_check
        %p194 = pneg %p45
      $region34: #{double_conv.1} parent=31 // pred_check_branch
        %196 = sbr.rel (%p194) target = $region36
      $region35: #{double_conv.1} parent=31 // pred_region
        %p197 = scmp.lt.s32.totalorder %s18, 1
        %s198 = scalar_select %p197, %s18, 1
        %p199 = scmp.lt.s32.totalorder %s19, 1
        %s200 = scalar_select %p199, %s19, 1
        %s201 = smul.addr %s200, 36
        %s202 = smul.addr %s198, 72
        %s203 = sadd.s32 %s201, %s202
        %s204 = smul.addr %s203, 4
        %s205 = scalar_lea.vmem %s0, %s204
      $region36: #{double_conv.1} parent=31 // pred_fallthru
        _
    $region32: #{double_conv.1} parent=5 // pred_fallthru
      _
    %p206 = scmp.le.s32.totalorder 1, %s11
    %p207 = scmp.lt.s32.totalorder %s11, 5
    %p208 = pnand %p206, %p207
    %p209 = pneg %p208
    // Predicated region
    $region37: #{double_conv.1} parent=5 // pred_check
      _
    $region38: #{double_conv.1} parent=5 // pred_check_branch
      %211 = sbr.rel (%p208) target = $region40
    $region39: #{double_conv.1} parent=5 // pred_region
      %s212 = ssub.s32 %s11, 1
      %p213 = scmp.lt.s32.totalorder %s20, 1
      %s214 = scalar_select %p213, %s20, 1
      %p215 = scmp.lt.s32.totalorder %s21, 1
      %s216 = scalar_select %p215, %s21, 1
      %s217 = smul.addr %s216, 36
      %s218 = smul.addr %s214, 72
      %s219 = sadd.s32 %s217, %s218
      %s220 = smul.addr %s219, 4
      %s221 = scalar_lea.vmem %s0, %s220
      %p222 = pneg %p51
      %p223 = pneg %p48
      %p224 = pneg %p72
      %p225 = pneg %p69
      %p226 = pneg %p93
      %p227 = pneg %p90
      %p228 = pneg %p114
      %p229 = pneg %p111
      %p230 = pneg %p135
      %p231 = pneg %p132
      %p232 = pneg %p163
      %p233 = pneg %p160
      %s234 = smul.u32 8, %s21
      %p235 = scmp.lt.s32.totalorder %s20, 1
      %s236 = scalar_select %p235, %s20, 1
      %p237 = scmp.lt.s32.totalorder %s234, 15
      %s238 = scalar_select %p237, %s234, 15
      %s239 = smul.addr %s238, 2
      %s240 = smul.addr %s236, 32
      %s241 = sadd.s32 %s239, %s240
      %s242 = smul.addr %s241, 8
      %s243 = scalar_lea.vmem %s5, %s242
      %p244 = scmp.lt.s32.totalorder %s20, 1
      %s245 = scalar_select %p244, %s20, 1
      %p246 = scmp.lt.s32.totalorder %s21, 1
      %s247 = scalar_select %p246, %s21, 1
      %s248 = smul.addr %s247, 36
      %s249 = smul.addr %s245, 72
      %s250 = sadd.s32 %s248, %s249
      %s251 = smul.addr %s250, 4
      %s252 = scalar_lea.vmem %s0, %s251
      %s253 = smul.u32 8, %s21
      %p254 = scmp.lt.s32.totalorder %s20, 1
      %s255 = scalar_select %p254, %s20, 1
      %p256 = scmp.lt.s32.totalorder %s253, 15
      %s257 = scalar_select %p256, %s253, 15
      %s258 = smul.addr %s257, 2
      %s259 = smul.addr %s255, 32
      %s260 = sadd.s32 %s258, %s259
      %s261 = smul.addr %s260, 8
      %s262 = scalar_lea.vmem %s5, %s261
      %s263 = smul.u32 8, %s21
      %v265 = vld [vmem:[%s252] sm:$0xf]
      %v266 = vld [vmem:[%s252 + $0x4] sm:$0xf]
      %v267 = vld [vmem:[%s252 + $0xc] sm:$0xf]
      %v268 = vld [vmem:[%s252 + $0x10] sm:$0xf]
      %v269 = vld [vmem:[%s252 + $0x18] sm:$0xf]
      %v270 = vld [vmem:[%s252 + $0x1c] sm:$0xf]
      %v271 = vld [vmem:[%s252 + $0x24] sm:$0xf]
      %v272 = vld [vmem:[%s252 + $0x28] sm:$0xf]
      %v273 = vld [vmem:[%s252 + $0x30] sm:$0xf]
      %v274 = vld [vmem:[%s252 + $0x34] sm:$0xf]
      %v275 = vld [vmem:[%s252 + $0x3c] sm:$0xf]
      %v276 = vld [vmem:[%s252 + $0x40] sm:$0xf]
      %v277 = vld [vmem:[%s252 + $0x48] sm:$0xf]
      %v278 = vld [vmem:[%s252 + $0x4c] sm:$0xf]
      %v279 = vld [vmem:[%s252 + $0x54] sm:$0xf]
      %v280 = vld [vmem:[%s252 + $0x58] sm:$0xf]
      %v281 = vld [vmem:[%s252 + $0x60] sm:$0xf]
      %v282 = vld [vmem:[%s252 + $0x64] sm:$0xf]
      %v283 = vld [vmem:[%s252 + $0x6c] sm:$0xf]
      %v284 = vld [vmem:[%s252 + $0x70] sm:$0xf]
      %v285 = vld [vmem:[%s1] sm:$0x3]
      %v286 = vld [vmem:[%s252 + $0x8] sm:$0x1]
      %v287 = vld [vmem:[%s252 + $0x14] sm:$0x1]
      %v288 = vld [vmem:[%s252 + $0x20] sm:$0x1]
      %v289 = vld [vmem:[%s252 + $0x2c] sm:$0x1]
      %v290 = vld [vmem:[%s252 + $0x38] sm:$0x1]
      %v291 = vld [vmem:[%s252 + $0x44] sm:$0x1]
      %v292 = vld [vmem:[%s252 + $0x50] sm:$0x1]
      %v293 = vld [vmem:[%s252 + $0x5c] sm:$0x1]
      %v294 = vld [vmem:[%s252 + $0x68] sm:$0x1]
      %v295 = vld [vmem:[%s252 + $0x74] sm:$0x1]
      %vm296 = vsmask.f32 3328
      %vm297 = vsmask.f32 7440
      %vm298 = vmor %vm296, %vm297
      %v300 = vshrl.u32 %v265, 16
      %v302 = vrot.slane %v300, 4
      %v303 = vshll.u32 %v265, 16
      %v305 = vrot.slane %v303, 5
      %v306 = vor.u32 %v302, %v305
      %v307 = vrot.slane %v306, 4
      %v309 = vshll.u32 %v266, 16
      %v311 = vrot.slane %v309, 5
      %v312 = vsel %vm298, %v307, %v311
      %v313 = vshrl.u32 %v266, 16
      %v315 = vrot.slane %v313, 4
      %v316 = vor.u32 %v315, %v311
      %v317 = vrot.slane %v316, 4
      %v319 = vshll.u32 %v286, 16
      %v321 = vrot.slane %v319, 5
      %v322 = vsel %vm298, %v317, %v321
      %v324 = vshrl.u32 %v267, 16
      %v326 = vrot.slane %v324, 4
      %v327 = vshll.u32 %v267, 16
      %v329 = vrot.slane %v327, 5
      %v330 = vor.u32 %v326, %v329
      %v331 = vrot.slane %v330, 4
      %v333 = vshll.u32 %v268, 16
      %v335 = vrot.slane %v333, 5
      %v336 = vsel %vm298, %v331, %v335
      %v337 = vshrl.u32 %v268, 16
      %v339 = vrot.slane %v337, 4
      %v340 = vor.u32 %v339, %v335
      %v341 = vrot.slane %v340, 4
      %v343 = vshll.u32 %v287, 16
      %v345 = vrot.slane %v343, 5
      %v346 = vsel %vm298, %v341, %v345
      %v348 = vshrl.u32 %v269, 16
      %v350 = vrot.slane %v348, 4
      %v351 = vshll.u32 %v269, 16
      %v353 = vrot.slane %v351, 5
      %v354 = vor.u32 %v350, %v353
      %v355 = vrot.slane %v354, 4
      %v357 = vshll.u32 %v270, 16
      %v359 = vrot.slane %v357, 5
      %v360 = vsel %vm298, %v355, %v359
      %v361 = vshrl.u32 %v270, 16
      %v363 = vrot.slane %v361, 4
      %v364 = vor.u32 %v363, %v359
      %v365 = vrot.slane %v364, 4
      %v367 = vshll.u32 %v288, 16
      %v369 = vrot.slane %v367, 5
      %v370 = vsel %vm298, %v365, %v369
      %v372 = vshrl.u32 %v271, 16
      %v374 = vrot.slane %v372, 4
      %v375 = vshll.u32 %v271, 16
      %v377 = vrot.slane %v375, 5
      %v378 = vor.u32 %v374, %v377
      %v379 = vrot.slane %v378, 4
      %v381 = vshll.u32 %v272, 16
      %v383 = vrot.slane %v381, 5
      %v384 = vsel %vm298, %v379, %v383
      %v385 = vshrl.u32 %v272, 16
      %v387 = vrot.slane %v385, 4
      %v388 = vor.u32 %v387, %v383
      %v389 = vrot.slane %v388, 4
      %v391 = vshll.u32 %v289, 16
      %v393 = vrot.slane %v391, 5
      %v394 = vsel %vm298, %v389, %v393
      %v396 = vshrl.u32 %v273, 16
      %v398 = vrot.slane %v396, 4
      %v399 = vshll.u32 %v273, 16
      %v401 = vrot.slane %v399, 5
      %v402 = vor.u32 %v398, %v401
      %v403 = vrot.slane %v402, 4
      %v405 = vshll.u32 %v274, 16
      %v407 = vrot.slane %v405, 5
      %v408 = vsel %vm298, %v403, %v407
      %v409 = vshrl.u32 %v274, 16
      %v411 = vrot.slane %v409, 4
      %v412 = vor.u32 %v411, %v407
      %v413 = vrot.slane %v412, 4
      %v415 = vshll.u32 %v290, 16
      %v417 = vrot.slane %v415, 5
      %v418 = vsel %vm298, %v413, %v417
      %v420 = vshrl.u32 %v275, 16
      %v422 = vrot.slane %v420, 4
      %v423 = vshll.u32 %v275, 16
      %v425 = vrot.slane %v423, 5
      %v426 = vor.u32 %v422, %v425
      %v427 = vrot.slane %v426, 4
      %v429 = vshll.u32 %v276, 16
      %v431 = vrot.slane %v429, 5
      %v432 = vsel %vm298, %v427, %v431
      %v433 = vshrl.u32 %v276, 16
      %v435 = vrot.slane %v433, 4
      %v436 = vor.u32 %v435, %v431
      %v437 = vrot.slane %v436, 4
      %v439 = vshll.u32 %v291, 16
      %v441 = vrot.slane %v439, 5
      %v442 = vsel %vm298, %v437, %v441
      %v444 = vshrl.u32 %v277, 16
      %v446 = vrot.slane %v444, 4
      %v447 = vshll.u32 %v277, 16
      %v449 = vrot.slane %v447, 5
      %v450 = vor.u32 %v446, %v449
      %v451 = vrot.slane %v450, 4
      %v453 = vshll.u32 %v278, 16
      %v455 = vrot.slane %v453, 5
      %v456 = vsel %vm298, %v451, %v455
      %v457 = vshrl.u32 %v278, 16
      %v459 = vrot.slane %v457, 4
      %v460 = vor.u32 %v459, %v455
      %v461 = vrot.slane %v460, 4
      %v463 = vshll.u32 %v292, 16
      %v465 = vrot.slane %v463, 5
      %v466 = vsel %vm298, %v461, %v465
      %v468 = vshrl.u32 %v279, 16
      %v470 = vrot.slane %v468, 4
      %v471 = vshll.u32 %v279, 16
      %v473 = vrot.slane %v471, 5
      %v474 = vor.u32 %v470, %v473
      %v475 = vrot.slane %v474, 4
      %v477 = vshll.u32 %v280, 16
      %v479 = vrot.slane %v477, 5
      %v480 = vsel %vm298, %v475, %v479
      %v481 = vshrl.u32 %v280, 16
      %v483 = vrot.slane %v481, 4
      %v484 = vor.u32 %v483, %v479
      %v485 = vrot.slane %v484, 4
      %v487 = vshll.u32 %v293, 16
      %v489 = vrot.slane %v487, 5
      %v490 = vsel %vm298, %v485, %v489
      %v492 = vshrl.u32 %v281, 16
      %v494 = vrot.slane %v492, 4
      %v495 = vshll.u32 %v281, 16
      %v497 = vrot.slane %v495, 5
      %v498 = vor.u32 %v494, %v497
      %v499 = vrot.slane %v498, 4
      %v501 = vshll.u32 %v282, 16
      %v503 = vrot.slane %v501, 5
      %v504 = vsel %vm298, %v499, %v503
      %v505 = vshrl.u32 %v282, 16
      %v507 = vrot.slane %v505, 4
      %v508 = vor.u32 %v507, %v503
      %v509 = vrot.slane %v508, 4
      %v511 = vshll.u32 %v294, 16
      %v513 = vrot.slane %v511, 5
      %v514 = vsel %vm298, %v509, %v513
      %v516 = vshrl.u32 %v283, 16
      %v518 = vrot.slane %v516, 4
      %v519 = vshll.u32 %v283, 16
      %v521 = vrot.slane %v519, 5
      %v522 = vor.u32 %v518, %v521
      %v523 = vrot.slane %v522, 4
      %v525 = vshll.u32 %v284, 16
      %v527 = vrot.slane %v525, 5
      %v528 = vsel %vm298, %v523, %v527
      %v529 = vshrl.u32 %v284, 16
      %v531 = vrot.slane %v529, 4
      %v532 = vor.u32 %v531, %v527
      %v533 = vrot.slane %v532, 4
      %v535 = vshll.u32 %v295, 16
      %v537 = vrot.slane %v535, 5
      %v538 = vsel %vm298, %v533, %v537
      %s539 = scalar_lea.vmem %s1, 2
      %v540 = vld [vmem:[%s539] sm:$0x3]
      %v541 = vunpack.c.l.b16 %v312
      %v542 = vunpack.c.l.b16 %v322
      %v543 = vunpack.c.l.b16 %v336
      %v544 = vunpack.c.l.b16 %v346
      %v545 = vunpack.c.l.b16 %v360
      %v546 = vunpack.c.l.b16 %v370
      %v547 = vunpack.c.l.b16 %v384
      %v548 = vunpack.c.l.b16 %v394
      %v549 = vunpack.c.l.b16 %v408
      %v550 = vunpack.c.l.b16 %v418
      %v551 = vunpack.c.l.b16 %v432
      %v552 = vunpack.c.l.b16 %v442
      %v553 = vunpack.c.l.b16 %v456
      %v554 = vunpack.c.l.b16 %v466
      %v555 = vunpack.c.l.b16 %v480
      %v556 = vunpack.c.l.b16 %v490
      %v557 = vunpack.c.l.b16 %v504
      %v558 = vunpack.c.l.b16 %v514
      %v559 = vunpack.c.l.b16 %v528
      %v560 = vunpack.c.l.b16 %v538
      %v561 = vpack.c.b16 %v542, %v541
      %v562 = vpack.c.b16 %v544, %v543
      %v563 = vpack.c.b16 %v546, %v545
      %v564 = vpack.c.b16 %v548, %v547
      %v565 = vpack.c.b16 %v550, %v549
      %v566 = vpack.c.b16 %v552, %v551
      %v567 = vpack.c.b16 %v554, %v553
      %v568 = vpack.c.b16 %v556, %v555
      %v569 = vpack.c.b16 %v558, %v557
      %v570 = vpack.c.b16 %v560, %v559
      %vm571 = vcmask 31744
      %v573 = vsel %vm571, %v561, 0
      %v576 = vsel %vm571, %v562, 0
      %v579 = vsel %vm571, %v563, 0
      %v582 = vsel %vm571, %v564, 0
      %v585 = vsel %vm571, %v565, 0
      %v588 = vsel %vm571, %v566, 0
      %v591 = vsel %vm571, %v567, 0
      %v594 = vsel %vm571, %v568, 0
      %v597 = vsel %vm571, %v569, 0
      %v600 = vsel %vm571, %v570, 0
      %vm602 = vcmask 1041408
      %v604 = vsel %vm602, %v540, 0
      %606 = vmatprep.subr.bf16.mxu0 0
      %607 = vmatpush1.bf16.msra.mxu0 %v604
      %608 = vmatprep.subr.bf16.mxu0 0
      %609 = vmatpush1.bf16.msra.mxu0 0
      %610 = vmatprep.subr.bf16.mxu0 0
      %611 = vmatpush1.bf16.msra.mxu0 0
      %612 = vmatprep.subr.bf16.mxu0 0
      %613 = vmatpush1.bf16.msra.mxu0 0
      %614 = vmatprep.subr.bf16.mxu0 0
      %615 = vmatpush1.bf16.msra.mxu0 0
      %616 = vmatprep.subr.bf16.mxu0 0
      %617 = vmatpush1.bf16.msra.mxu0 0
      %618 = vmatprep.subr.bf16.mxu0 0
      %619 = vmatpush1.bf16.msra.mxu0 0
      %620 = vmatprep.subr.bf16.mxu0 0
      %621 = vmatpush1.bf16.msra.mxu0 0
      %622 = vmatprep.subr.bf16.mxu0 0
      %623 = vmatpush1.bf16.msra.mxu0 0
      %624 = vmatprep.subr.bf16.mxu0 0
      %625 = vmatpush1.bf16.msra.mxu0 0
      %626 = vmatprep.subr.bf16.mxu0 0
      %627 = vmatpush1.bf16.msra.mxu0 0
      %628 = vmatprep.subr.bf16.mxu0 0
      %629 = vmatpush1.bf16.msra.mxu0 0
      %630 = vmatprep.subr.bf16.mxu0 0
      %631 = vmatpush1.bf16.msra.mxu0 0
      %632 = vmatprep.subr.bf16.mxu0 0
      %633 = vmatpush1.bf16.msra.mxu0 0
      %634 = vmatprep.subr.bf16.mxu0 0
      %635 = vmatpush1.bf16.msra.mxu0 0
      %636 = vmatprep.subr.bf16.mxu0 0
      %637 = vmatpush1.bf16.msra.mxu0 0
      %638 = vmatprep.mubr.bf16.mxu0 0
      %639 = vmatmul.mubr.bf16.gmra.mrb[0].mxu0 %v573
      %v640 = vpop.f32.mrb[0].mxu0
      %v641 = vadd.f32 0.0, %v640
      %v642 = vpop.f32.mrb[0].mxu0
      %v643 = vpop.f32.mrb[0].mxu0
      %v644 = vadd.f32 0.0, %v643
      %v645 = vpop.f32.mrb[0].mxu0
      %646 = vmatprep.mubr.bf16.mxu0 0
      %647 = vmatmul.mubr.bf16.gmra.mrb[0].mxu0 %v576
      %v648 = vpop.f32.mrb[0].mxu0
      %v649 = vadd.f32 0.0, %v648
      %v650 = vpop.f32.mrb[0].mxu0
      %v651 = vpop.f32.mrb[0].mxu0
      %v652 = vadd.f32 0.0, %v651
      %v653 = vpop.f32.mrb[0].mxu0
      %654 = vmatprep.mubr.bf16.mxu0 0
      %655 = vmatmul.mubr.bf16.gmra.mrb[0].mxu0 %v579
      %v656 = vpop.f32.mrb[0].mxu0
      %v657 = vadd.f32 0.0, %v656
      %v658 = vpop.f32.mrb[0].mxu0
      %v659 = vpop.f32.mrb[0].mxu0
      %v660 = vadd.f32 0.0, %v659
      %v661 = vpop.f32.mrb[0].mxu0
      %662 = vmatprep.mubr.bf16.mxu0 0
      %663 = vmatmul.mubr.bf16.gmra.mrb[0].mxu0 %v582
      %v664 = vpop.f32.mrb[0].mxu0
      %v665 = vadd.f32 0.0, %v664
      %v666 = vpop.f32.mrb[0].mxu0
      %v667 = vpop.f32.mrb[0].mxu0
      %v668 = vadd.f32 0.0, %v667
      %v669 = vpop.f32.mrb[0].mxu0
      %670 = vmatprep.mubr.bf16.mxu0 0
      %671 = vmatmul.mubr.bf16.gmra.mrb[0].mxu0 %v585
      %v672 = vpop.f32.mrb[0].mxu0
      %v673 = vadd.f32 0.0, %v672
      %v674 = vpop.f32.mrb[0].mxu0
      %v675 = vpop.f32.mrb[0].mxu0
      %v676 = vadd.f32 0.0, %v675
      %v677 = vpop.f32.mrb[0].mxu0
      %678 = vmatprep.mubr.bf16.mxu0 0
      %679 = vmatmul.mubr.bf16.gmra.mrb[0].mxu0 %v588
      %v680 = vpop.f32.mrb[0].mxu0
      %v681 = vadd.f32 0.0, %v680
      %v682 = vpop.f32.mrb[0].mxu0
      %v683 = vpop.f32.mrb[0].mxu0
      %v684 = vadd.f32 0.0, %v683
      %v685 = vpop.f32.mrb[0].mxu0
      %686 = vmatprep.mubr.bf16.mxu0 0
      %687 = vmatmul.mubr.bf16.gmra.mrb[0].mxu0 %v591
      %v688 = vpop.f32.mrb[0].mxu0
      %v689 = vadd.f32 0.0, %v688
      %v690 = vpop.f32.mrb[0].mxu0
      %v691 = vpop.f32.mrb[0].mxu0
      %v692 = vadd.f32 0.0, %v691
      %v693 = vpop.f32.mrb[0].mxu0
      %694 = vmatprep.mubr.bf16.mxu0 0
      %695 = vmatmul.mubr.bf16.gmra.mrb[0].mxu0 %v594
      %v696 = vpop.f32.mrb[0].mxu0
      %v697 = vadd.f32 0.0, %v696
      %v698 = vpop.f32.mrb[0].mxu0
      %v699 = vpop.f32.mrb[0].mxu0
      %v700 = vadd.f32 0.0, %v699
      %v701 = vpop.f32.mrb[0].mxu0
      %702 = vmatprep.mubr.bf16.mxu0 0
      %703 = vmatmul.mubr.bf16.gmra.mrb[0].mxu0 %v597
      %v704 = vpop.f32.mrb[0].mxu0
      %v705 = vadd.f32 0.0, %v704
      %v706 = vpop.f32.mrb[0].mxu0
      %v707 = vpop.f32.mrb[0].mxu0
      %v708 = vadd.f32 0.0, %v707
      %v709 = vpop.f32.mrb[0].mxu0
      %710 = vmatprep.mubr.bf16.mxu0 0
      %711 = vmatmul.mubr.bf16.gmra.mrb[0].mxu0 %v600
      %v712 = vpop.f32.mrb[0].mxu0
      %v713 = vadd.f32 0.0, %v712
      %v714 = vpop.f32.mrb[0].mxu0
      %v715 = vpop.f32.mrb[0].mxu0
      %v716 = vadd.f32 0.0, %v715
      %v717 = vpop.f32.mrb[0].mxu0
      %718 = vdwg.mxu0
      %v739 = vunpack.c.l.b16 %v265
      %v740 = vunpack.c.l.b16 %v266
      %v741 = vunpack.c.l.b16 %v267
      %v742 = vunpack.c.l.b16 %v268
      %v743 = vunpack.c.l.b16 %v269
      %v744 = vunpack.c.l.b16 %v270
      %v745 = vunpack.c.l.b16 %v271
      %v746 = vunpack.c.l.b16 %v272
      %v747 = vunpack.c.l.b16 %v273
      %v748 = vunpack.c.l.b16 %v274
      %v749 = vunpack.c.l.b16 %v275
      %v750 = vunpack.c.l.b16 %v276
      %v751 = vunpack.c.l.b16 %v277
      %v752 = vunpack.c.l.b16 %v278
      %v753 = vunpack.c.l.b16 %v279
      %v754 = vunpack.c.l.b16 %v280
      %v755 = vunpack.c.l.b16 %v281
      %v756 = vunpack.c.l.b16 %v282
      %v757 = vunpack.c.l.b16 %v283
      %v758 = vunpack.c.l.b16 %v284
      %v759 = vpack.c.b16 %v740, %v739
      %v760 = vpack.c.b16 %v742, %v741
      %v761 = vpack.c.b16 %v744, %v743
      %v762 = vpack.c.b16 %v746, %v745
      %v763 = vpack.c.b16 %v748, %v747
      %v764 = vpack.c.b16 %v750, %v749
      %v765 = vpack.c.b16 %v752, %v751
      %v766 = vpack.c.b16 %v754, %v753
      %v767 = vpack.c.b16 %v756, %v755
      %v768 = vpack.c.b16 %v758, %v757
      %v770 = vsel %vm571, %v759, 0
      %v773 = vsel %vm571, %v760, 0
      %v776 = vsel %vm571, %v761, 0
      %v779 = vsel %vm571, %v762, 0
      %v782 = vsel %vm571, %v763, 0
      %v785 = vsel %vm571, %v764, 0
      %v788 = vsel %vm571, %v765, 0
      %v791 = vsel %vm571, %v766, 0
      %v794 = vsel %vm571, %v767, 0
      %v797 = vsel %vm571, %v768, 0
      %v800 = vsel %vm602, %v285, 0
      %802 = vmatprep.subr.bf16.mxu0 0
      %803 = vmatpush1.bf16.msra.mxu0 %v800
      %804 = vmatprep.subr.bf16.mxu0 0
      %805 = vmatpush1.bf16.msra.mxu0 0
      %806 = vmatprep.subr.bf16.mxu0 0
      %807 = vmatpush1.bf16.msra.mxu0 0
      %808 = vmatprep.subr.bf16.mxu0 0
      %809 = vmatpush1.bf16.msra.mxu0 0
      %810 = vmatprep.subr.bf16.mxu0 0
      %811 = vmatpush1.bf16.msra.mxu0 0
      %812 = vmatprep.subr.bf16.mxu0 0
      %813 = vmatpush1.bf16.msra.mxu0 0
      %814 = vmatprep.subr.bf16.mxu0 0
      %815 = vmatpush1.bf16.msra.mxu0 0
      %816 = vmatprep.subr.bf16.mxu0 0
      %817 = vmatpush1.bf16.msra.mxu0 0
      %818 = vmatprep.subr.bf16.mxu0 0
      %819 = vmatpush1.bf16.msra.mxu0 0
      %820 = vmatprep.subr.bf16.mxu0 0
      %821 = vmatpush1.bf16.msra.mxu0 0
      %822 = vmatprep.subr.bf16.mxu0 0
      %823 = vmatpush1.bf16.msra.mxu0 0
      %824 = vmatprep.subr.bf16.mxu0 0
      %825 = vmatpush1.bf16.msra.mxu0 0
      %826 = vmatprep.subr.bf16.mxu0 0
      %827 = vmatpush1.bf16.msra.mxu0 0
      %828 = vmatprep.subr.bf16.mxu0 0
      %829 = vmatpush1.bf16.msra.mxu0 0
      %830 = vmatprep.subr.bf16.mxu0 0
      %831 = vmatpush1.bf16.msra.mxu0 0
      %832 = vmatprep.subr.bf16.mxu0 0
      %833 = vmatpush1.bf16.msra.mxu0 0
      %834 = vmatprep.mubr.bf16.mxu0 0
      %835 = vmatmul.mubr.bf16.gmra.mrb[0].mxu0 %v770
      %v836 = vpop.f32.mrb[0].mxu0
      %v837 = vadd.f32 %v641, %v836
      %v838 = vpop.f32.mrb[0].mxu0
      %v839 = vpop.f32.mrb[0].mxu0
      %v840 = vadd.f32 %v644, %v839
      %v841 = vpop.f32.mrb[0].mxu0
      %842 = vmatprep.mubr.bf16.mxu0 0
      %843 = vmatmul.mubr.bf16.gmra.mrb[0].mxu0 %v773
      %v844 = vpop.f32.mrb[0].mxu0
      %v845 = vadd.f32 %v649, %v844
      %v846 = vpop.f32.mrb[0].mxu0
      %v847 = vpop.f32.mrb[0].mxu0
      %v848 = vadd.f32 %v652, %v847
      %v849 = vpop.f32.mrb[0].mxu0
      %850 = vmatprep.mubr.bf16.mxu0 0
      %851 = vmatmul.mubr.bf16.gmra.mrb[0].mxu0 %v776
      %v852 = vpop.f32.mrb[0].mxu0
      %v853 = vadd.f32 %v657, %v852
      %v854 = vpop.f32.mrb[0].mxu0
      %v855 = vpop.f32.mrb[0].mxu0
      %v856 = vadd.f32 %v660, %v855
      %v857 = vpop.f32.mrb[0].mxu0
      %858 = vmatprep.mubr.bf16.mxu0 0
      %859 = vmatmul.mubr.bf16.gmra.mrb[0].mxu0 %v779
      %v860 = vpop.f32.mrb[0].mxu0
      %v861 = vadd.f32 %v665, %v860
      %v862 = vpop.f32.mrb[0].mxu0
      %v863 = vpop.f32.mrb[0].mxu0
      %v864 = vadd.f32 %v668, %v863
      %v865 = vpop.f32.mrb[0].mxu0
      %866 = vmatprep.mubr.bf16.mxu0 0
      %867 = vmatmul.mubr.bf16.gmra.mrb[0].mxu0 %v782
      %v868 = vpop.f32.mrb[0].mxu0
      %v869 = vadd.f32 %v673, %v868
      %v870 = vpop.f32.mrb[0].mxu0
      %v871 = vpop.f32.mrb[0].mxu0
      %v872 = vadd.f32 %v676, %v871
      %v873 = vpop.f32.mrb[0].mxu0
      %874 = vmatprep.mubr.bf16.mxu0 0
      %875 = vmatmul.mubr.bf16.gmra.mrb[0].mxu0 %v785
      %v876 = vpop.f32.mrb[0].mxu0
      %v877 = vadd.f32 %v681, %v876
      %v878 = vpop.f32.mrb[0].mxu0
      %v879 = vpop.f32.mrb[0].mxu0
      %v880 = vadd.f32 %v684, %v879
      %v881 = vpop.f32.mrb[0].mxu0
      %882 = vmatprep.mubr.bf16.mxu0 0
      %883 = vmatmul.mubr.bf16.gmra.mrb[0].mxu0 %v788
      %v884 = vpop.f32.mrb[0].mxu0
      %v885 = vadd.f32 %v689, %v884
      %v886 = vpop.f32.mrb[0].mxu0
      %v887 = vpop.f32.mrb[0].mxu0
      %v888 = vadd.f32 %v692, %v887
      %v889 = vpop.f32.mrb[0].mxu0
      %890 = vmatprep.mubr.bf16.mxu0 0
      %891 = vmatmul.mubr.bf16.gmra.mrb[0].mxu0 %v791
      %v892 = vpop.f32.mrb[0].mxu0
      %v893 = vadd.f32 %v697, %v892
      %v894 = vpop.f32.mrb[0].mxu0
      %v895 = vpop.f32.mrb[0].mxu0
      %v896 = vadd.f32 %v700, %v895
      %v897 = vpop.f32.mrb[0].mxu0
      %898 = vmatprep.mubr.bf16.mxu0 0
      %899 = vmatmul.mubr.bf16.gmra.mrb[0].mxu0 %v794
      %v900 = vpop.f32.mrb[0].mxu0
      %v901 = vadd.f32 %v705, %v900
      %v902 = vpop.f32.mrb[0].mxu0
      %v903 = vpop.f32.mrb[0].mxu0
      %v904 = vadd.f32 %v708, %v903
      %v905 = vpop.f32.mrb[0].mxu0
      %906 = vmatprep.mubr.bf16.mxu0 0
      %907 = vmatmul.mubr.bf16.gmra.mrb[0].mxu0 %v797
      %v908 = vpop.f32.mrb[0].mxu0
      %v909 = vadd.f32 %v713, %v908
      %v910 = vpop.f32.mrb[0].mxu0
      %v911 = vpop.f32.mrb[0].mxu0
      %v912 = vadd.f32 %v716, %v911
      %v913 = vpop.f32.mrb[0].mxu0
      %914 = vdwg.mxu0
      %v915 = vld [vmem:[%s252] sm:$0xe]
      %v916 = vld [vmem:[%s252 + $0xc] sm:$0xe]
      %v917 = vld [vmem:[%s252 + $0x18] sm:$0xe]
      %v918 = vld [vmem:[%s252 + $0x24] sm:$0xe]
      %v919 = vld [vmem:[%s252 + $0x30] sm:$0xe]
      %v920 = vld [vmem:[%s252 + $0x3c] sm:$0xe]
      %v921 = vld [vmem:[%s252 + $0x48] sm:$0xe]
      %v922 = vld [vmem:[%s252 + $0x54] sm:$0xe]
      %v923 = vld [vmem:[%s252 + $0x60] sm:$0xe]
      %v924 = vld [vmem:[%s252 + $0x6c] sm:$0xe]
      %vm945 = vcmask 1042432
      %vm946 = vcmask 1046532
      %vm947 = vmor %vm945, %vm946
      %v948 = vrot.slane %v915, 5
      %v949 = vrot.slane %v948, 4
      %v950 = vrot.slane %v266, 5
      %v951 = vsel %vm947, %v949, %v950
      %v952 = vrot.slane %v950, 4
      %v953 = vrot.slane %v286, 5
      %v954 = vsel %vm947, %v952, %v953
      %v955 = vrot.slane %v916, 5
      %v956 = vrot.slane %v955, 4
      %v957 = vrot.slane %v268, 5
      %v958 = vsel %vm947, %v956, %v957
      %v959 = vrot.slane %v957, 4
      %v960 = vrot.slane %v287, 5
      %v961 = vsel %vm947, %v959, %v960
      %v962 = vrot.slane %v917, 5
      %v963 = vrot.slane %v962, 4
      %v964 = vrot.slane %v270, 5
      %v965 = vsel %vm947, %v963, %v964
      %v966 = vrot.slane %v964, 4
      %v967 = vrot.slane %v288, 5
      %v968 = vsel %vm947, %v966, %v967
      %v969 = vrot.slane %v918, 5
      %v970 = vrot.slane %v969, 4
      %v971 = vrot.slane %v272, 5
      %v972 = vsel %vm947, %v970, %v971
      %v973 = vrot.slane %v971, 4
      %v974 = vrot.slane %v289, 5
      %v975 = vsel %vm947, %v973, %v974
      %v976 = vrot.slane %v919, 5
      %v977 = vrot.slane %v976, 4
      %v978 = vrot.slane %v274, 5
      %v979 = vsel %vm947, %v977, %v978
      %v980 = vrot.slane %v978, 4
      %v981 = vrot.slane %v290, 5
      %v982 = vsel %vm947, %v980, %v981
      %v983 = vrot.slane %v920, 5
      %v984 = vrot.slane %v983, 4
      %v985 = vrot.slane %v276, 5
      %v986 = vsel %vm947, %v984, %v985
      %v987 = vrot.slane %v985, 4
      %v988 = vrot.slane %v291, 5
      %v989 = vsel %vm947, %v987, %v988
      %v990 = vrot.slane %v921, 5
      %v991 = vrot.slane %v990, 4
      %v992 = vrot.slane %v278, 5
      %v993 = vsel %vm947, %v991, %v992
      %v994 = vrot.slane %v992, 4
      %v995 = vrot.slane %v292, 5
      %v996 = vsel %vm947, %v994, %v995
      %v997 = vrot.slane %v922, 5
      %v998 = vrot.slane %v997, 4
      %v999 = vrot.slane %v280, 5
      %v1000 = vsel %vm947, %v998, %v999
      %v1001 = vrot.slane %v999, 4
      %v1002 = vrot.slane %v293, 5
      %v1003 = vsel %vm947, %v1001, %v1002
      %v1004 = vrot.slane %v923, 5
      %v1005 = vrot.slane %v1004, 4
      %v1006 = vrot.slane %v282, 5
      %v1007 = vsel %vm947, %v1005, %v1006
      %v1008 = vrot.slane %v1006, 4
      %v1009 = vrot.slane %v294, 5
      %v1010 = vsel %vm947, %v1008, %v1009
      %v1011 = vrot.slane %v924, 5
      %v1012 = vrot.slane %v1011, 4
      %v1013 = vrot.slane %v284, 5
      %v1014 = vsel %vm947, %v1012, %v1013
      %v1015 = vrot.slane %v1013, 4
      %v1016 = vrot.slane %v295, 5
      %v1017 = vsel %vm947, %v1015, %v1016
      %s1018 = scalar_lea.vmem %s1, 4
      %v1019 = vld [vmem:[%s1018] sm:$0x3]
      %v1020 = vunpack.c.l.b16 %v951
      %v1021 = vunpack.c.l.b16 %v954
      %v1022 = vunpack.c.l.b16 %v958
      %v1023 = vunpack.c.l.b16 %v961
      %v1024 = vunpack.c.l.b16 %v965
      %v1025 = vunpack.c.l.b16 %v968
      %v1026 = vunpack.c.l.b16 %v972
      %v1027 = vunpack.c.l.b16 %v975
      %v1028 = vunpack.c.l.b16 %v979
      %v1029 = vunpack.c.l.b16 %v982
      %v1030 = vunpack.c.l.b16 %v986
      %v1031 = vunpack.c.l.b16 %v989
      %v1032 = vunpack.c.l.b16 %v993
      %v1033 = vunpack.c.l.b16 %v996
      %v1034 = vunpack.c.l.b16 %v1000
      %v1035 = vunpack.c.l.b16 %v1003
      %v1036 = vunpack.c.l.b16 %v1007
      %v1037 = vunpack.c.l.b16 %v1010
      %v1038 = vunpack.c.l.b16 %v1014
      %v1039 = vunpack.c.l.b16 %v1017
      %v1040 = vpack.c.b16 %v1021, %v1020
      %v1041 = vpack.c.b16 %v1023, %v1022
      %v1042 = vpack.c.b16 %v1025, %v1024
      %v1043 = vpack.c.b16 %v1027, %v1026
      %v1044 = vpack.c.b16 %v1029, %v1028
      %v1045 = vpack.c.b16 %v1031, %v1030
      %v1046 = vpack.c.b16 %v1033, %v1032
      %v1047 = vpack.c.b16 %v1035, %v1034
      %v1048 = vpack.c.b16 %v1037, %v1036
      %v1049 = vpack.c.b16 %v1039, %v1038
      %v1051 = vsel %vm571, %v1040, 0
      %v1054 = vsel %vm571, %v1041, 0
      %v1057 = vsel %vm571, %v1042, 0
      %v1060 = vsel %vm571, %v1043, 0
      %v1063 = vsel %vm571, %v1044, 0
      %v1066 = vsel %vm571, %v1045, 0
      %v1069 = vsel %vm571, %v1046, 0
      %v1072 = vsel %vm571, %v1047, 0
      %v1075 = vsel %vm571, %v1048, 0
      %v1078 = vsel %vm571, %v1049, 0
      %v1081 = vsel %vm602, %v1019, 0
      %1083 = vmatprep.subr.bf16.mxu0 0
      %1084 = vmatpush1.bf16.msra.mxu0 %v1081
      %1085 = vmatprep.subr.bf16.mxu0 0
      %1086 = vmatpush1.bf16.msra.mxu0 0
      %1087 = vmatprep.subr.bf16.mxu0 0
      %1088 = vmatpush1.bf16.msra.mxu0 0
      %1089 = vmatprep.subr.bf16.mxu0 0
      %1090 = vmatpush1.bf16.msra.mxu0 0
      %1091 = vmatprep.subr.bf16.mxu0 0
      %1092 = vmatpush1.bf16.msra.mxu0 0
      %1093 = vmatprep.subr.bf16.mxu0 0
      %1094 = vmatpush1.bf16.msra.mxu0 0
      %1095 = vmatprep.subr.bf16.mxu0 0
      %1096 = vmatpush1.bf16.msra.mxu0 0
      %1097 = vmatprep.subr.bf16.mxu0 0
      %1098 = vmatpush1.bf16.msra.mxu0 0
      %1099 = vmatprep.subr.bf16.mxu0 0
      %1100 = vmatpush1.bf16.msra.mxu0 0
      %1101 = vmatprep.subr.bf16.mxu0 0
      %1102 = vmatpush1.bf16.msra.mxu0 0
      %1103 = vmatprep.subr.bf16.mxu0 0
      %1104 = vmatpush1.bf16.msra.mxu0 0
      %1105 = vmatprep.subr.bf16.mxu0 0
      %1106 = vmatpush1.bf16.msra.mxu0 0
      %1107 = vmatprep.subr.bf16.mxu0 0
      %1108 = vmatpush1.bf16.msra.mxu0 0
      %1109 = vmatprep.subr.bf16.mxu0 0
      %1110 = vmatpush1.bf16.msra.mxu0 0
      %1111 = vmatprep.subr.bf16.mxu0 0
      %1112 = vmatpush1.bf16.msra.mxu0 0
      %1113 = vmatprep.subr.bf16.mxu0 0
      %1114 = vmatpush1.bf16.msra.mxu0 0
      %1115 = vmatprep.mubr.bf16.mxu0 0
      %1116 = vmatmul.mubr.bf16.gmra.mrb[0].mxu0 %v1051
      %v1117 = vpop.f32.mrb[0].mxu0
      %v1118 = vadd.f32 0.0, %v1117
      %v1119 = vpop.f32.mrb[0].mxu0
      %v1120 = vpop.f32.mrb[0].mxu0
      %v1121 = vadd.f32 0.0, %v1120
      %v1122 = vpop.f32.mrb[0].mxu0
      %1123 = vmatprep.mubr.bf16.mxu0 0
      %1124 = vmatmul.mubr.bf16.gmra.mrb[0].mxu0 %v1054
      %v1125 = vpop.f32.mrb[0].mxu0
      %v1126 = vadd.f32 0.0, %v1125
      %v1127 = vpop.f32.mrb[0].mxu0
      %v1128 = vpop.f32.mrb[0].mxu0
      %v1129 = vadd.f32 0.0, %v1128
      %v1130 = vpop.f32.mrb[0].mxu0
      %1131 = vmatprep.mubr.bf16.mxu0 0
      %1132 = vmatmul.mubr.bf16.gmra.mrb[0].mxu0 %v1057
      %v1133 = vpop.f32.mrb[0].mxu0
      %v1134 = vadd.f32 0.0, %v1133
      %v1135 = vpop.f32.mrb[0].mxu0
      %v1136 = vpop.f32.mrb[0].mxu0
      %v1137 = vadd.f32 0.0, %v1136
      %v1138 = vpop.f32.mrb[0].mxu0
      %1139 = vmatprep.mubr.bf16.mxu0 0
      %1140 = vmatmul.mubr.bf16.gmra.mrb[0].mxu0 %v1060
      %v1141 = vpop.f32.mrb[0].mxu0
      %v1142 = vadd.f32 0.0, %v1141
      %v1143 = vpop.f32.mrb[0].mxu0
      %v1144 = vpop.f32.mrb[0].mxu0
      %v1145 = vadd.f32 0.0, %v1144
      %v1146 = vpop.f32.mrb[0].mxu0
      %1147 = vmatprep.mubr.bf16.mxu0 0
      %1148 = vmatmul.mubr.bf16.gmra.mrb[0].mxu0 %v1063
      %v1149 = vpop.f32.mrb[0].mxu0
      %v1150 = vadd.f32 0.0, %v1149
      %v1151 = vpop.f32.mrb[0].mxu0
      %v1152 = vpop.f32.mrb[0].mxu0
      %v1153 = vadd.f32 0.0, %v1152
      %v1154 = vpop.f32.mrb[0].mxu0
      %1155 = vmatprep.mubr.bf16.mxu0 0
      %1156 = vmatmul.mubr.bf16.gmra.mrb[0].mxu0 %v1066
      %v1157 = vpop.f32.mrb[0].mxu0
      %v1158 = vadd.f32 0.0, %v1157
      %v1159 = vpop.f32.mrb[0].mxu0
      %v1160 = vpop.f32.mrb[0].mxu0
      %v1161 = vadd.f32 0.0, %v1160
      %v1162 = vpop.f32.mrb[0].mxu0
      %1163 = vmatprep.mubr.bf16.mxu0 0
      %1164 = vmatmul.mubr.bf16.gmra.mrb[0].mxu0 %v1069
      %v1165 = vpop.f32.mrb[0].mxu0
      %v1166 = vadd.f32 0.0, %v1165
      %v1167 = vpop.f32.mrb[0].mxu0
      %v1168 = vpop.f32.mrb[0].mxu0
      %v1169 = vadd.f32 0.0, %v1168
      %v1170 = vpop.f32.mrb[0].mxu0
      %1171 = vmatprep.mubr.bf16.mxu0 0
      %1172 = vmatmul.mubr.bf16.gmra.mrb[0].mxu0 %v1072
      %v1173 = vpop.f32.mrb[0].mxu0
      %v1174 = vadd.f32 0.0, %v1173
      %v1175 = vpop.f32.mrb[0].mxu0
      %v1176 = vpop.f32.mrb[0].mxu0
      %v1177 = vadd.f32 0.0, %v1176
      %v1178 = vpop.f32.mrb[0].mxu0
      %1179 = vmatprep.mubr.bf16.mxu0 0
      %1180 = vmatmul.mubr.bf16.gmra.mrb[0].mxu0 %v1075
      %v1181 = vpop.f32.mrb[0].mxu0
      %v1182 = vadd.f32 0.0, %v1181
      %v1183 = vpop.f32.mrb[0].mxu0
      %v1184 = vpop.f32.mrb[0].mxu0
      %v1185 = vadd.f32 0.0, %v1184
      %v1186 = vpop.f32.mrb[0].mxu0
      %1187 = vmatprep.mubr.bf16.mxu0 0
      %1188 = vmatmul.mubr.bf16.gmra.mrb[0].mxu0 %v1078
      %v1189 = vpop.f32.mrb[0].mxu0
      %v1190 = vadd.f32 0.0, %v1189
      %v1191 = vpop.f32.mrb[0].mxu0
      %v1192 = vpop.f32.mrb[0].mxu0
      %v1193 = vadd.f32 0.0, %v1192
      %v1194 = vpop.f32.mrb[0].mxu0
      %1195 = vdwg.mxu0
      %v1196 = vadd.f32 %v837, %v1118
      %v1197 = vadd.f32 %v840, %v1121
      %v1198 = vadd.f32 %v845, %v1126
      %v1199 = vadd.f32 %v848, %v1129
      %v1200 = vadd.f32 %v853, %v1134
      %v1201 = vadd.f32 %v856, %v1137
      %v1202 = vadd.f32 %v861, %v1142
      %v1203 = vadd.f32 %v864, %v1145
      %v1204 = vadd.f32 %v869, %v1150
      %v1205 = vadd.f32 %v872, %v1153
      %v1206 = vadd.f32 %v877, %v1158
      %v1207 = vadd.f32 %v880, %v1161
      %v1208 = vadd.f32 %v885, %v1166
      %v1209 = vadd.f32 %v888, %v1169
      %v1210 = vadd.f32 %v893, %v1174
      %v1211 = vadd.f32 %v896, %v1177
      %v1212 = vadd.f32 %v901, %v1182
      %v1213 = vadd.f32 %v904, %v1185
      %v1214 = vadd.f32 %v909, %v1190
      %v1215 = vadd.f32 %v912, %v1193
      %s1216 = scalar_lea.vmem %s252, 12
      %v1217 = vld [vmem:[%s1216] sm:$0xf]
      %v1218 = vld [vmem:[%s1216 + $0x4] sm:$0xf]
      %v1219 = vld [vmem:[%s1216 + $0xc] sm:$0xf]
      %v1220 = vld [vmem:[%s1216 + $0x10] sm:$0xf]
      %v1221 = vld [vmem:[%s1216 + $0x18] sm:$0xf]
      %v1222 = vld [vmem:[%s1216 + $0x1c] sm:$0xf]
      %v1223 = vld [vmem:[%s1216 + $0x24] sm:$0xf]
      %v1224 = vld [vmem:[%s1216 + $0x28] sm:$0xf]
      %v1225 = vld [vmem:[%s1216 + $0x30] sm:$0xf]
      %v1226 = vld [vmem:[%s1216 + $0x34] sm:$0xf]
      %v1227 = vld [vmem:[%s1216 + $0x3c] sm:$0xf]
      %v1228 = vld [vmem:[%s1216 + $0x40] sm:$0xf]
      %v1229 = vld [vmem:[%s1216 + $0x48] sm:$0xf]
      %v1230 = vld [vmem:[%s1216 + $0x4c] sm:$0xf]
      %v1231 = vld [vmem:[%s1216 + $0x54] sm:$0xf]
      %v1232 = vld [vmem:[%s1216 + $0x58] sm:$0xf]
      %v1233 = vld [vmem:[%s1216 + $0x60] sm:$0xf]
      %v1234 = vld [vmem:[%s1216 + $0x64] sm:$0xf]
      %v1235 = vld [vmem:[%s1216 + $0x6c] sm:$0xf]
      %v1236 = vld [vmem:[%s1216 + $0x70] sm:$0xf]
      %s1237 = scalar_lea.vmem %s1, 6
      %v1238 = vld [vmem:[%s1237] sm:$0x3]
      %v1259 = vunpack.c.l.b16 %v1217
      %v1260 = vunpack.c.l.b16 %v1218
      %v1261 = vunpack.c.l.b16 %v1219
      %v1262 = vunpack.c.l.b16 %v1220
      %v1263 = vunpack.c.l.b16 %v1221
      %v1264 = vunpack.c.l.b16 %v1222
      %v1265 = vunpack.c.l.b16 %v1223
      %v1266 = vunpack.c.l.b16 %v1224
      %v1267 = vunpack.c.l.b16 %v1225
      %v1268 = vunpack.c.l.b16 %v1226
      %v1269 = vunpack.c.l.b16 %v1227
      %v1270 = vunpack.c.l.b16 %v1228
      %v1271 = vunpack.c.l.b16 %v1229
      %v1272 = vunpack.c.l.b16 %v1230
      %v1273 = vunpack.c.l.b16 %v1231
      %v1274 = vunpack.c.l.b16 %v1232
      %v1275 = vunpack.c.l.b16 %v1233
      %v1276 = vunpack.c.l.b16 %v1234
      %v1277 = vunpack.c.l.b16 %v1235
      %v1278 = vunpack.c.l.b16 %v1236
      %v1279 = vpack.c.b16 %v1260, %v1259
      %v1280 = vpack.c.b16 %v1262, %v1261
      %v1281 = vpack.c.b16 %v1264, %v1263
      %v1282 = vpack.c.b16 %v1266, %v1265
      %v1283 = vpack.c.b16 %v1268, %v1267
      %v1284 = vpack.c.b16 %v1270, %v1269
      %v1285 = vpack.c.b16 %v1272, %v1271
      %v1286 = vpack.c.b16 %v1274, %v1273
      %v1287 = vpack.c.b16 %v1276, %v1275
      %v1288 = vpack.c.b16 %v1278, %v1277
      %v1290 = vsel %vm571, %v1279, 0
      %v1293 = vsel %vm571, %v1280, 0
      %v1296 = vsel %vm571, %v1281, 0
      %v1299 = vsel %vm571, %v1282, 0
      %v1302 = vsel %vm571, %v1283, 0
      %v1305 = vsel %vm571, %v1284, 0
      %v1308 = vsel %vm571, %v1285, 0
      %v1311 = vsel %vm571, %v1286, 0
      %v1314 = vsel %vm571, %v1287, 0
      %v1317 = vsel %vm571, %v1288, 0
      %v1320 = vsel %vm602, %v1238, 0
      %1322 = vmatprep.subr.bf16.mxu0 0
      %1323 = vmatpush1.bf16.msra.mxu0 %v1320
      %1324 = vmatprep.subr.bf16.mxu0 0
      %1325 = vmatpush1.bf16.msra.mxu0 0
      %1326 = vmatprep.subr.bf16.mxu0 0
      %1327 = vmatpush1.bf16.msra.mxu0 0
      %1328 = vmatprep.subr.bf16.mxu0 0
      %1329 = vmatpush1.bf16.msra.mxu0 0
      %1330 = vmatprep.subr.bf16.mxu0 0
      %1331 = vmatpush1.bf16.msra.mxu0 0
      %1332 = vmatprep.subr.bf16.mxu0 0
      %1333 = vmatpush1.bf16.msra.mxu0 0
      %1334 = vmatprep.subr.bf16.mxu0 0
      %1335 = vmatpush1.bf16.msra.mxu0 0
      %1336 = vmatprep.subr.bf16.mxu0 0
      %1337 = vmatpush1.bf16.msra.mxu0 0
      %1338 = vmatprep.subr.bf16.mxu0 0
      %1339 = vmatpush1.bf16.msra.mxu0 0
      %1340 = vmatprep.subr.bf16.mxu0 0
      %1341 = vmatpush1.bf16.msra.mxu0 0
      %1342 = vmatprep.subr.bf16.mxu0 0
      %1343 = vmatpush1.bf16.msra.mxu0 0
      %1344 = vmatprep.subr.bf16.mxu0 0
      %1345 = vmatpush1.bf16.msra.mxu0 0
      %1346 = vmatprep.subr.bf16.mxu0 0
      %1347 = vmatpush1.bf16.msra.mxu0 0
      %1348 = vmatprep.subr.bf16.mxu0 0
      %1349 = vmatpush1.bf16.msra.mxu0 0
      %1350 = vmatprep.subr.bf16.mxu0 0
      %1351 = vmatpush1.bf16.msra.mxu0 0
      %1352 = vmatprep.subr.bf16.mxu0 0
      %1353 = vmatpush1.bf16.msra.mxu0 0
      %1354 = vmatprep.mubr.bf16.mxu0 0
      %1355 = vmatmul.mubr.bf16.gmra.mrb[0].mxu0 %v1290
      %v1356 = vpop.f32.mrb[0].mxu0
      %v1357 = vadd.f32 0.0, %v1356
      %v1358 = vpop.f32.mrb[0].mxu0
      %v1359 = vpop.f32.mrb[0].mxu0
      %v1360 = vadd.f32 0.0, %v1359
      %v1361 = vpop.f32.mrb[0].mxu0
      %1362 = vmatprep.mubr.bf16.mxu0 0
      %1363 = vmatmul.mubr.bf16.gmra.mrb[0].mxu0 %v1293
      %v1364 = vpop.f32.mrb[0].mxu0
      %v1365 = vadd.f32 0.0, %v1364
      %v1366 = vpop.f32.mrb[0].mxu0
      %v1367 = vpop.f32.mrb[0].mxu0
      %v1368 = vadd.f32 0.0, %v1367
      %v1369 = vpop.f32.mrb[0].mxu0
      %1370 = vmatprep.mubr.bf16.mxu0 0
      %1371 = vmatmul.mubr.bf16.gmra.mrb[0].mxu0 %v1296
      %v1372 = vpop.f32.mrb[0].mxu0
      %v1373 = vadd.f32 0.0, %v1372
      %v1374 = vpop.f32.mrb[0].mxu0
      %v1375 = vpop.f32.mrb[0].mxu0
      %v1376 = vadd.f32 0.0, %v1375
      %v1377 = vpop.f32.mrb[0].mxu0
      %1378 = vmatprep.mubr.bf16.mxu0 0
      %1379 = vmatmul.mubr.bf16.gmra.mrb[0].mxu0 %v1299
      %v1380 = vpop.f32.mrb[0].mxu0
      %v1381 = vadd.f32 0.0, %v1380
      %v1382 = vpop.f32.mrb[0].mxu0
      %v1383 = vpop.f32.mrb[0].mxu0
      %v1384 = vadd.f32 0.0, %v1383
      %v1385 = vpop.f32.mrb[0].mxu0
      %1386 = vmatprep.mubr.bf16.mxu0 0
      %1387 = vmatmul.mubr.bf16.gmra.mrb[0].mxu0 %v1302
      %v1388 = vpop.f32.mrb[0].mxu0
      %v1389 = vadd.f32 0.0, %v1388
      %v1390 = vpop.f32.mrb[0].mxu0
      %v1391 = vpop.f32.mrb[0].mxu0
      %v1392 = vadd.f32 0.0, %v1391
      %v1393 = vpop.f32.mrb[0].mxu0
      %1394 = vmatprep.mubr.bf16.mxu0 0
      %1395 = vmatmul.mubr.bf16.gmra.mrb[0].mxu0 %v1305
      %v1396 = vpop.f32.mrb[0].mxu0
      %v1397 = vadd.f32 0.0, %v1396
      %v1398 = vpop.f32.mrb[0].mxu0
      %v1399 = vpop.f32.mrb[0].mxu0
      %v1400 = vadd.f32 0.0, %v1399
      %v1401 = vpop.f32.mrb[0].mxu0
      %1402 = vmatprep.mubr.bf16.mxu0 0
      %1403 = vmatmul.mubr.bf16.gmra.mrb[0].mxu0 %v1308
      %v1404 = vpop.f32.mrb[0].mxu0
      %v1405 = vadd.f32 0.0, %v1404
      %v1406 = vpop.f32.mrb[0].mxu0
      %v1407 = vpop.f32.mrb[0].mxu0
      %v1408 = vadd.f32 0.0, %v1407
      %v1409 = vpop.f32.mrb[0].mxu0
      %1410 = vmatprep.mubr.bf16.mxu0 0
      %1411 = vmatmul.mubr.bf16.gmra.mrb[0].mxu0 %v1311
      %v1412 = vpop.f32.mrb[0].mxu0
      %v1413 = vadd.f32 0.0, %v1412
      %v1414 = vpop.f32.mrb[0].mxu0
      %v1415 = vpop.f32.mrb[0].mxu0
      %v1416 = vadd.f32 0.0, %v1415
      %v1417 = vpop.f32.mrb[0].mxu0
      %1418 = vmatprep.mubr.bf16.mxu0 0
      %1419 = vmatmul.mubr.bf16.gmra.mrb[0].mxu0 %v1314
      %v1420 = vpop.f32.mrb[0].mxu0
      %v1421 = vadd.f32 0.0, %v1420
      %v1422 = vpop.f32.mrb[0].mxu0
      %v1423 = vpop.f32.mrb[0].mxu0
      %v1424 = vadd.f32 0.0, %v1423
      %v1425 = vpop.f32.mrb[0].mxu0
      %1426 = vmatprep.mubr.bf16.mxu0 0
      %1427 = vmatmul.mubr.bf16.gmra.mrb[0].mxu0 %v1317
      %v1428 = vpop.f32.mrb[0].mxu0
      %v1429 = vadd.f32 0.0, %v1428
      %v1430 = vpop.f32.mrb[0].mxu0
      %v1431 = vpop.f32.mrb[0].mxu0
      %v1432 = vadd.f32 0.0, %v1431
      %v1433 = vpop.f32.mrb[0].mxu0
      %1434 = vdwg.mxu0
      %v1435 = vadd.f32 %v1196, %v1357
      %v1436 = vadd.f32 %v1197, %v1360
      %v1437 = vadd.f32 %v1198, %v1365
      %v1438 = vadd.f32 %v1199, %v1368
      %v1439 = vadd.f32 %v1200, %v1373
      %v1440 = vadd.f32 %v1201, %v1376
      %v1441 = vadd.f32 %v1202, %v1381
      %v1442 = vadd.f32 %v1203, %v1384
      %v1443 = vadd.f32 %v1204, %v1389
      %v1444 = vadd.f32 %v1205, %v1392
      %v1445 = vadd.f32 %v1206, %v1397
      %v1446 = vadd.f32 %v1207, %v1400
      %v1447 = vadd.f32 %v1208, %v1405
      %v1448 = vadd.f32 %v1209, %v1408
      %v1449 = vadd.f32 %v1210, %v1413
      %v1450 = vadd.f32 %v1211, %v1416
      %v1451 = vadd.f32 %v1212, %v1421
      %v1452 = vadd.f32 %v1213, %v1424
      %v1453 = vadd.f32 %v1214, %v1429
      %v1454 = vadd.f32 %v1215, %v1432
      %v1455 = vld [vmem:[%s1216] sm:$0xf]
      %v1456 = vld [vmem:[%s1216 + $0x4] sm:$0xf]
      %v1457 = vld [vmem:[%s1216 + $0x8] sm:$0x1]
      %v1458 = vld [vmem:[%s1216 + $0xc] sm:$0xf]
      %v1459 = vld [vmem:[%s1216 + $0x10] sm:$0xf]
      %v1460 = vld [vmem:[%s1216 + $0x14] sm:$0x1]
      %v1461 = vld [vmem:[%s1216 + $0x18] sm:$0xf]
      %v1462 = vld [vmem:[%s1216 + $0x1c] sm:$0xf]
      %v1463 = vld [vmem:[%s1216 + $0x20] sm:$0x1]
      %v1464 = vld [vmem:[%s1216 + $0x24] sm:$0xf]
      %v1465 = vld [vmem:[%s1216 + $0x28] sm:$0xf]
      %v1466 = vld [vmem:[%s1216 + $0x2c] sm:$0x1]
      %v1467 = vld [vmem:[%s1216 + $0x30] sm:$0xf]
      %v1468 = vld [vmem:[%s1216 + $0x34] sm:$0xf]
      %v1469 = vld [vmem:[%s1216 + $0x38] sm:$0x1]
      %v1470 = vld [vmem:[%s1216 + $0x3c] sm:$0xf]
      %v1471 = vld [vmem:[%s1216 + $0x40] sm:$0xf]
      %v1472 = vld [vmem:[%s1216 + $0x44] sm:$0x1]
      %v1473 = vld [vmem:[%s1216 + $0x48] sm:$0xf]
      %v1474 = vld [vmem:[%s1216 + $0x4c] sm:$0xf]
      %v1475 = vld [vmem:[%s1216 + $0x50] sm:$0x1]
      %v1476 = vld [vmem:[%s1216 + $0x54] sm:$0xf]
      %v1477 = vld [vmem:[%s1216 + $0x58] sm:$0xf]
      %v1478 = vld [vmem:[%s1216 + $0x5c] sm:$0x1]
      %v1479 = vld [vmem:[%s1216 + $0x60] sm:$0xf]
      %v1480 = vld [vmem:[%s1216 + $0x64] sm:$0xf]
      %v1481 = vld [vmem:[%s1216 + $0x68] sm:$0x1]
      %v1482 = vld [vmem:[%s1216 + $0x6c] sm:$0xf]
      %v1483 = vld [vmem:[%s1216 + $0x70] sm:$0xf]
      %v1484 = vld [vmem:[%s1216 + $0x74] sm:$0x1]
      %v1486 = vshrl.u32 %v1455, 16
      %v1488 = vrot.slane %v1486, 4
      %v1489 = vshll.u32 %v1455, 16
      %v1491 = vrot.slane %v1489, 5
      %v1492 = vor.u32 %v1488, %v1491
      %v1493 = vrot.slane %v1492, 4
      %v1495 = vshll.u32 %v1456, 16
      %v1497 = vrot.slane %v1495, 5
      %v1498 = vsel %vm298, %v1493, %v1497
      %v1499 = vshrl.u32 %v1456, 16
      %v1501 = vrot.slane %v1499, 4
      %v1502 = vor.u32 %v1501, %v1497
      %v1503 = vrot.slane %v1502, 4
      %v1505 = vshll.u32 %v1457, 16
      %v1507 = vrot.slane %v1505, 5
      %v1508 = vsel %vm298, %v1503, %v1507
      %v1510 = vshrl.u32 %v1458, 16
      %v1512 = vrot.slane %v1510, 4
      %v1513 = vshll.u32 %v1458, 16
      %v1515 = vrot.slane %v1513, 5
      %v1516 = vor.u32 %v1512, %v1515
      %v1517 = vrot.slane %v1516, 4
      %v1519 = vshll.u32 %v1459, 16
      %v1521 = vrot.slane %v1519, 5
      %v1522 = vsel %vm298, %v1517, %v1521
      %v1523 = vshrl.u32 %v1459, 16
      %v1525 = vrot.slane %v1523, 4
      %v1526 = vor.u32 %v1525, %v1521
      %v1527 = vrot.slane %v1526, 4
      %v1529 = vshll.u32 %v1460, 16
      %v1531 = vrot.slane %v1529, 5
      %v1532 = vsel %vm298, %v1527, %v1531
      %v1534 = vshrl.u32 %v1461, 16
      %v1536 = vrot.slane %v1534, 4
      %v1537 = vshll.u32 %v1461, 16
      %v1539 = vrot.slane %v1537, 5
      %v1540 = vor.u32 %v1536, %v1539
      %v1541 = vrot.slane %v1540, 4
      %v1543 = vshll.u32 %v1462, 16
      %v1545 = vrot.slane %v1543, 5
      %v1546 = vsel %vm298, %v1541, %v1545
      %v1547 = vshrl.u32 %v1462, 16
      %v1549 = vrot.slane %v1547, 4
      %v1550 = vor.u32 %v1549, %v1545
      %v1551 = vrot.slane %v1550, 4
      %v1553 = vshll.u32 %v1463, 16
      %v1555 = vrot.slane %v1553, 5
      %v1556 = vsel %vm298, %v1551, %v1555
      %v1558 = vshrl.u32 %v1464, 16
      %v1560 = vrot.slane %v1558, 4
      %v1561 = vshll.u32 %v1464, 16
      %v1563 = vrot.slane %v1561, 5
      %v1564 = vor.u32 %v1560, %v1563
      %v1565 = vrot.slane %v1564, 4
      %v1567 = vshll.u32 %v1465, 16
      %v1569 = vrot.slane %v1567, 5
      %v1570 = vsel %vm298, %v1565, %v1569
      %v1571 = vshrl.u32 %v1465, 16
      %v1573 = vrot.slane %v1571, 4
      %v1574 = vor.u32 %v1573, %v1569
      %v1575 = vrot.slane %v1574, 4
      %v1577 = vshll.u32 %v1466, 16
      %v1579 = vrot.slane %v1577, 5
      %v1580 = vsel %vm298, %v1575, %v1579
      %v1582 = vshrl.u32 %v1467, 16
      %v1584 = vrot.slane %v1582, 4
      %v1585 = vshll.u32 %v1467, 16
      %v1587 = vrot.slane %v1585, 5
      %v1588 = vor.u32 %v1584, %v1587
      %v1589 = vrot.slane %v1588, 4
      %v1591 = vshll.u32 %v1468, 16
      %v1593 = vrot.slane %v1591, 5
      %v1594 = vsel %vm298, %v1589, %v1593
      %v1595 = vshrl.u32 %v1468, 16
      %v1597 = vrot.slane %v1595, 4
      %v1598 = vor.u32 %v1597, %v1593
      %v1599 = vrot.slane %v1598, 4
      %v1601 = vshll.u32 %v1469, 16
      %v1603 = vrot.slane %v1601, 5
      %v1604 = vsel %vm298, %v1599, %v1603
      %v1606 = vshrl.u32 %v1470, 16
      %v1608 = vrot.slane %v1606, 4
      %v1609 = vshll.u32 %v1470, 16
      %v1611 = vrot.slane %v1609, 5
      %v1612 = vor.u32 %v1608, %v1611
      %v1613 = vrot.slane %v1612, 4
      %v1615 = vshll.u32 %v1471, 16
      %v1617 = vrot.slane %v1615, 5
      %v1618 = vsel %vm298, %v1613, %v1617
      %v1619 = vshrl.u32 %v1471, 16
      %v1621 = vrot.slane %v1619, 4
      %v1622 = vor.u32 %v1621, %v1617
      %v1623 = vrot.slane %v1622, 4
      %v1625 = vshll.u32 %v1472, 16
      %v1627 = vrot.slane %v1625, 5
      %v1628 = vsel %vm298, %v1623, %v1627
      %v1630 = vshrl.u32 %v1473, 16
      %v1632 = vrot.slane %v1630, 4
      %v1633 = vshll.u32 %v1473, 16
      %v1635 = vrot.slane %v1633, 5
      %v1636 = vor.u32 %v1632, %v1635
      %v1637 = vrot.slane %v1636, 4
      %v1639 = vshll.u32 %v1474, 16
      %v1641 = vrot.slane %v1639, 5
      %v1642 = vsel %vm298, %v1637, %v1641
      %v1643 = vshrl.u32 %v1474, 16
      %v1645 = vrot.slane %v1643, 4
      %v1646 = vor.u32 %v1645, %v1641
      %v1647 = vrot.slane %v1646, 4
      %v1649 = vshll.u32 %v1475, 16
      %v1651 = vrot.slane %v1649, 5
      %v1652 = vsel %vm298, %v1647, %v1651
      %v1654 = vshrl.u32 %v1476, 16
      %v1656 = vrot.slane %v1654, 4
      %v1657 = vshll.u32 %v1476, 16
      %v1659 = vrot.slane %v1657, 5
      %v1660 = vor.u32 %v1656, %v1659
      %v1661 = vrot.slane %v1660, 4
      %v1663 = vshll.u32 %v1477, 16
      %v1665 = vrot.slane %v1663, 5
      %v1666 = vsel %vm298, %v1661, %v1665
      %v1667 = vshrl.u32 %v1477, 16
      %v1669 = vrot.slane %v1667, 4
      %v1670 = vor.u32 %v1669, %v1665
      %v1671 = vrot.slane %v1670, 4
      %v1673 = vshll.u32 %v1478, 16
      %v1675 = vrot.slane %v1673, 5
      %v1676 = vsel %vm298, %v1671, %v1675
      %v1678 = vshrl.u32 %v1479, 16
      %v1680 = vrot.slane %v1678, 4
      %v1681 = vshll.u32 %v1479, 16
      %v1683 = vrot.slane %v1681, 5
      %v1684 = vor.u32 %v1680, %v1683
      %v1685 = vrot.slane %v1684, 4
      %v1687 = vshll.u32 %v1480, 16
      %v1689 = vrot.slane %v1687, 5
      %v1690 = vsel %vm298, %v1685, %v1689
      %v1691 = vshrl.u32 %v1480, 16
      %v1693 = vrot.slane %v1691, 4
      %v1694 = vor.u32 %v1693, %v1689
      %v1695 = vrot.slane %v1694, 4
      %v1697 = vshll.u32 %v1481, 16
      %v1699 = vrot.slane %v1697, 5
      %v1700 = vsel %vm298, %v1695, %v1699
      %v1702 = vshrl.u32 %v1482, 16
      %v1704 = vrot.slane %v1702, 4
      %v1705 = vshll.u32 %v1482, 16
      %v1707 = vrot.slane %v1705, 5
      %v1708 = vor.u32 %v1704, %v1707
      %v1709 = vrot.slane %v1708, 4
      %v1711 = vshll.u32 %v1483, 16
      %v1713 = vrot.slane %v1711, 5
      %v1714 = vsel %vm298, %v1709, %v1713
      %v1715 = vshrl.u32 %v1483, 16
      %v1717 = vrot.slane %v1715, 4
      %v1718 = vor.u32 %v1717, %v1713
      %v1719 = vrot.slane %v1718, 4
      %v1721 = vshll.u32 %v1484, 16
      %v1723 = vrot.slane %v1721, 5
      %v1724 = vsel %vm298, %v1719, %v1723
      %s1725 = scalar_lea.vmem %s1, 8
      %v1726 = vld [vmem:[%s1725] sm:$0x3]
      %v1727 = vunpack.c.l.b16 %v1498
      %v1728 = vunpack.c.l.b16 %v1508
      %v1729 = vunpack.c.l.b16 %v1522
      %v1730 = vunpack.c.l.b16 %v1532
      %v1731 = vunpack.c.l.b16 %v1546
      %v1732 = vunpack.c.l.b16 %v1556
      %v1733 = vunpack.c.l.b16 %v1570
      %v1734 = vunpack.c.l.b16 %v1580
      %v1735 = vunpack.c.l.b16 %v1594
      %v1736 = vunpack.c.l.b16 %v1604
      %v1737 = vunpack.c.l.b16 %v1618
      %v1738 = vunpack.c.l.b16 %v1628
      %v1739 = vunpack.c.l.b16 %v1642
      %v1740 = vunpack.c.l.b16 %v1652
      %v1741 = vunpack.c.l.b16 %v1666
      %v1742 = vunpack.c.l.b16 %v1676
      %v1743 = vunpack.c.l.b16 %v1690
      %v1744 = vunpack.c.l.b16 %v1700
      %v1745 = vunpack.c.l.b16 %v1714
      %v1746 = vunpack.c.l.b16 %v1724
      %v1747 = vpack.c.b16 %v1728, %v1727
      %v1748 = vpack.c.b16 %v1730, %v1729
      %v1749 = vpack.c.b16 %v1732, %v1731
      %v1750 = vpack.c.b16 %v1734, %v1733
      %v1751 = vpack.c.b16 %v1736, %v1735
      %v1752 = vpack.c.b16 %v1738, %v1737
      %v1753 = vpack.c.b16 %v1740, %v1739
      %v1754 = vpack.c.b16 %v1742, %v1741
      %v1755 = vpack.c.b16 %v1744, %v1743
      %v1756 = vpack.c.b16 %v1746, %v1745
      %v1758 = vsel %vm571, %v1747, 0
      %v1761 = vsel %vm571, %v1748, 0
      %v1764 = vsel %vm571, %v1749, 0
      %v1767 = vsel %vm571, %v1750, 0
      %v1770 = vsel %vm571, %v1751, 0
      %v1773 = vsel %vm571, %v1752, 0
      %v1776 = vsel %vm571, %v1753, 0
      %v1779 = vsel %vm571, %v1754, 0
      %v1782 = vsel %vm571, %v1755, 0
      %v1785 = vsel %vm571, %v1756, 0
      %v1788 = vsel %vm602, %v1726, 0
      %1790 = vmatprep.subr.bf16.mxu0 0
      %1791 = vmatpush1.bf16.msra.mxu0 %v1788
      %1792 = vmatprep.subr.bf16.mxu0 0
      %1793 = vmatpush1.bf16.msra.mxu0 0
      %1794 = vmatprep.subr.bf16.mxu0 0
      %1795 = vmatpush1.bf16.msra.mxu0 0
      %1796 = vmatprep.subr.bf16.mxu0 0
      %1797 = vmatpush1.bf16.msra.mxu0 0
      %1798 = vmatprep.subr.bf16.mxu0 0
      %1799 = vmatpush1.bf16.msra.mxu0 0
      %1800 = vmatprep.subr.bf16.mxu0 0
      %1801 = vmatpush1.bf16.msra.mxu0 0
      %1802 = vmatprep.subr.bf16.mxu0 0
      %1803 = vmatpush1.bf16.msra.mxu0 0
      %1804 = vmatprep.subr.bf16.mxu0 0
      %1805 = vmatpush1.bf16.msra.mxu0 0
      %1806 = vmatprep.subr.bf16.mxu0 0
      %1807 = vmatpush1.bf16.msra.mxu0 0
      %1808 = vmatprep.subr.bf16.mxu0 0
      %1809 = vmatpush1.bf16.msra.mxu0 0
      %1810 = vmatprep.subr.bf16.mxu0 0
      %1811 = vmatpush1.bf16.msra.mxu0 0
      %1812 = vmatprep.subr.bf16.mxu0 0
      %1813 = vmatpush1.bf16.msra.mxu0 0
      %1814 = vmatprep.subr.bf16.mxu0 0
      %1815 = vmatpush1.bf16.msra.mxu0 0
      %1816 = vmatprep.subr.bf16.mxu0 0
      %1817 = vmatpush1.bf16.msra.mxu0 0
      %1818 = vmatprep.subr.bf16.mxu0 0
      %1819 = vmatpush1.bf16.msra.mxu0 0
      %1820 = vmatprep.subr.bf16.mxu0 0
      %1821 = vmatpush1.bf16.msra.mxu0 0
      %1822 = vmatprep.mubr.bf16.mxu0 0
      %1823 = vmatmul.mubr.bf16.gmra.mrb[0].mxu0 %v1758
      %v1824 = vpop.f32.mrb[0].mxu0
      %v1825 = vadd.f32 0.0, %v1824
      %v1826 = vpop.f32.mrb[0].mxu0
      %v1827 = vpop.f32.mrb[0].mxu0
      %v1828 = vadd.f32 0.0, %v1827
      %v1829 = vpop.f32.mrb[0].mxu0
      %1830 = vmatprep.mubr.bf16.mxu0 0
      %1831 = vmatmul.mubr.bf16.gmra.mrb[0].mxu0 %v1761
      %v1832 = vpop.f32.mrb[0].mxu0
      %v1833 = vadd.f32 0.0, %v1832
      %v1834 = vpop.f32.mrb[0].mxu0
      %v1835 = vpop.f32.mrb[0].mxu0
      %v1836 = vadd.f32 0.0, %v1835
      %v1837 = vpop.f32.mrb[0].mxu0
      %1838 = vmatprep.mubr.bf16.mxu0 0
      %1839 = vmatmul.mubr.bf16.gmra.mrb[0].mxu0 %v1764
      %v1840 = vpop.f32.mrb[0].mxu0
      %v1841 = vadd.f32 0.0, %v1840
      %v1842 = vpop.f32.mrb[0].mxu0
      %v1843 = vpop.f32.mrb[0].mxu0
      %v1844 = vadd.f32 0.0, %v1843
      %v1845 = vpop.f32.mrb[0].mxu0
      %1846 = vmatprep.mubr.bf16.mxu0 0
      %1847 = vmatmul.mubr.bf16.gmra.mrb[0].mxu0 %v1767
      %v1848 = vpop.f32.mrb[0].mxu0
      %v1849 = vadd.f32 0.0, %v1848
      %v1850 = vpop.f32.mrb[0].mxu0
      %v1851 = vpop.f32.mrb[0].mxu0
      %v1852 = vadd.f32 0.0, %v1851
      %v1853 = vpop.f32.mrb[0].mxu0
      %1854 = vmatprep.mubr.bf16.mxu0 0
      %1855 = vmatmul.mubr.bf16.gmra.mrb[0].mxu0 %v1770
      %v1856 = vpop.f32.mrb[0].mxu0
      %v1857 = vadd.f32 0.0, %v1856
      %v1858 = vpop.f32.mrb[0].mxu0
      %v1859 = vpop.f32.mrb[0].mxu0
      %v1860 = vadd.f32 0.0, %v1859
      %v1861 = vpop.f32.mrb[0].mxu0
      %1862 = vmatprep.mubr.bf16.mxu0 0
      %1863 = vmatmul.mubr.bf16.gmra.mrb[0].mxu0 %v1773
      %v1864 = vpop.f32.mrb[0].mxu0
      %v1865 = vadd.f32 0.0, %v1864
      %v1866 = vpop.f32.mrb[0].mxu0
      %v1867 = vpop.f32.mrb[0].mxu0
      %v1868 = vadd.f32 0.0, %v1867
      %v1869 = vpop.f32.mrb[0].mxu0
      %1870 = vmatprep.mubr.bf16.mxu0 0
      %1871 = vmatmul.mubr.bf16.gmra.mrb[0].mxu0 %v1776
      %v1872 = vpop.f32.mrb[0].mxu0
      %v1873 = vadd.f32 0.0, %v1872
      %v1874 = vpop.f32.mrb[0].mxu0
      %v1875 = vpop.f32.mrb[0].mxu0
      %v1876 = vadd.f32 0.0, %v1875
      %v1877 = vpop.f32.mrb[0].mxu0
      %1878 = vmatprep.mubr.bf16.mxu0 0
      %1879 = vmatmul.mubr.bf16.gmra.mrb[0].mxu0 %v1779
      %v1880 = vpop.f32.mrb[0].mxu0
      %v1881 = vadd.f32 0.0, %v1880
      %v1882 = vpop.f32.mrb[0].mxu0
      %v1883 = vpop.f32.mrb[0].mxu0
      %v1884 = vadd.f32 0.0, %v1883
      %v1885 = vpop.f32.mrb[0].mxu0
      %1886 = vmatprep.mubr.bf16.mxu0 0
      %1887 = vmatmul.mubr.bf16.gmra.mrb[0].mxu0 %v1782
      %v1888 = vpop.f32.mrb[0].mxu0
      %v1889 = vadd.f32 0.0, %v1888
      %v1890 = vpop.f32.mrb[0].mxu0
      %v1891 = vpop.f32.mrb[0].mxu0
      %v1892 = vadd.f32 0.0, %v1891
      %v1893 = vpop.f32.mrb[0].mxu0
      %1894 = vmatprep.mubr.bf16.mxu0 0
      %1895 = vmatmul.mubr.bf16.gmra.mrb[0].mxu0 %v1785
      %v1896 = vpop.f32.mrb[0].mxu0
      %v1897 = vadd.f32 0.0, %v1896
      %v1898 = vpop.f32.mrb[0].mxu0
      %v1899 = vpop.f32.mrb[0].mxu0
      %v1900 = vadd.f32 0.0, %v1899
      %v1901 = vpop.f32.mrb[0].mxu0
      %1902 = vdwg.mxu0
      %v1903 = vadd.f32 %v1435, %v1825
      %v1904 = vadd.f32 %v1436, %v1828
      %v1905 = vadd.f32 %v1437, %v1833
      %v1906 = vadd.f32 %v1438, %v1836
      %v1907 = vadd.f32 %v1439, %v1841
      %v1908 = vadd.f32 %v1440, %v1844
      %v1909 = vadd.f32 %v1441, %v1849
      %v1910 = vadd.f32 %v1442, %v1852
      %v1911 = vadd.f32 %v1443, %v1857
      %v1912 = vadd.f32 %v1444, %v1860
      %v1913 = vadd.f32 %v1445, %v1865
      %v1914 = vadd.f32 %v1446, %v1868
      %v1915 = vadd.f32 %v1447, %v1873
      %v1916 = vadd.f32 %v1448, %v1876
      %v1917 = vadd.f32 %v1449, %v1881
      %v1918 = vadd.f32 %v1450, %v1884
      %v1919 = vadd.f32 %v1451, %v1889
      %v1920 = vadd.f32 %v1452, %v1892
      %v1921 = vadd.f32 %v1453, %v1897
      %v1922 = vadd.f32 %v1454, %v1900
      %v1923 = vld [vmem:[%s1216] sm:$0xe]
      %v1924 = vld [vmem:[%s1216 + $0xc] sm:$0xe]
      %v1925 = vld [vmem:[%s1216 + $0x18] sm:$0xe]
      %v1926 = vld [vmem:[%s1216 + $0x24] sm:$0xe]
      %v1927 = vld [vmem:[%s1216 + $0x30] sm:$0xe]
      %v1928 = vld [vmem:[%s1216 + $0x3c] sm:$0xe]
      %v1929 = vld [vmem:[%s1216 + $0x48] sm:$0xe]
      %v1930 = vld [vmem:[%s1216 + $0x54] sm:$0xe]
      %v1931 = vld [vmem:[%s1216 + $0x60] sm:$0xe]
      %v1932 = vld [vmem:[%s1216 + $0x6c] sm:$0xe]
      %v1963 = vrot.slane %v1923, 5
      %v1964 = vrot.slane %v1963, 4
      %v1965 = vrot.slane %v1456, 5
      %v1966 = vsel %vm947, %v1964, %v1965
      %v1967 = vrot.slane %v1965, 4
      %v1968 = vrot.slane %v1457, 5
      %v1969 = vsel %vm947, %v1967, %v1968
      %v1970 = vrot.slane %v1924, 5
      %v1971 = vrot.slane %v1970, 4
      %v1972 = vrot.slane %v1459, 5
      %v1973 = vsel %vm947, %v1971, %v1972
      %v1974 = vrot.slane %v1972, 4
      %v1975 = vrot.slane %v1460, 5
      %v1976 = vsel %vm947, %v1974, %v1975
      %v1977 = vrot.slane %v1925, 5
      %v1978 = vrot.slane %v1977, 4
      %v1979 = vrot.slane %v1462, 5
      %v1980 = vsel %vm947, %v1978, %v1979
      %v1981 = vrot.slane %v1979, 4
      %v1982 = vrot.slane %v1463, 5
      %v1983 = vsel %vm947, %v1981, %v1982
      %v1984 = vrot.slane %v1926, 5
      %v1985 = vrot.slane %v1984, 4
      %v1986 = vrot.slane %v1465, 5
      %v1987 = vsel %vm947, %v1985, %v1986
      %v1988 = vrot.slane %v1986, 4
      %v1989 = vrot.slane %v1466, 5
      %v1990 = vsel %vm947, %v1988, %v1989
      %v1991 = vrot.slane %v1927, 5
      %v1992 = vrot.slane %v1991, 4
      %v1993 = vrot.slane %v1468, 5
      %v1994 = vsel %vm947, %v1992, %v1993
      %v1995 = vrot.slane %v1993, 4
      %v1996 = vrot.slane %v1469, 5
      %v1997 = vsel %vm947, %v1995, %v1996
      %v1998 = vrot.slane %v1928, 5
      %v1999 = vrot.slane %v1998, 4
      %v2000 = vrot.slane %v1471, 5
      %v2001 = vsel %vm947, %v1999, %v2000
      %v2002 = vrot.slane %v2000, 4
      %v2003 = vrot.slane %v1472, 5
      %v2004 = vsel %vm947, %v2002, %v2003
      %v2005 = vrot.slane %v1929, 5
      %v2006 = vrot.slane %v2005, 4
      %v2007 = vrot.slane %v1474, 5
      %v2008 = vsel %vm947, %v2006, %v2007
      %v2009 = vrot.slane %v2007, 4
      %v2010 = vrot.slane %v1475, 5
      %v2011 = vsel %vm947, %v2009, %v2010
      %v2012 = vrot.slane %v1930, 5
      %v2013 = vrot.slane %v2012, 4
      %v2014 = vrot.slane %v1477, 5
      %v2015 = vsel %vm947, %v2013, %v2014
      %v2016 = vrot.slane %v2014, 4
      %v2017 = vrot.slane %v1478, 5
      %v2018 = vsel %vm947, %v2016, %v2017
      %v2019 = vrot.slane %v1931, 5
      %v2020 = vrot.slane %v2019, 4
      %v2021 = vrot.slane %v1480, 5
      %v2022 = vsel %vm947, %v2020, %v2021
      %v2023 = vrot.slane %v2021, 4
      %v2024 = vrot.slane %v1481, 5
      %v2025 = vsel %vm947, %v2023, %v2024
      %v2026 = vrot.slane %v1932, 5
      %v2027 = vrot.slane %v2026, 4
      %v2028 = vrot.slane %v1483, 5
      %v2029 = vsel %vm947, %v2027, %v2028
      %v2030 = vrot.slane %v2028, 4
      %v2031 = vrot.slane %v1484, 5
      %v2032 = vsel %vm947, %v2030, %v2031
      %s2033 = scalar_lea.vmem %s1, 10
      %v2034 = vld [vmem:[%s2033] sm:$0x3]
      %v2035 = vunpack.c.l.b16 %v1966
      %v2036 = vunpack.c.l.b16 %v1969
      %v2037 = vunpack.c.l.b16 %v1973
      %v2038 = vunpack.c.l.b16 %v1976
      %v2039 = vunpack.c.l.b16 %v1980
      %v2040 = vunpack.c.l.b16 %v1983
      %v2041 = vunpack.c.l.b16 %v1987
      %v2042 = vunpack.c.l.b16 %v1990
      %v2043 = vunpack.c.l.b16 %v1994
      %v2044 = vunpack.c.l.b16 %v1997
      %v2045 = vunpack.c.l.b16 %v2001
      %v2046 = vunpack.c.l.b16 %v2004
      %v2047 = vunpack.c.l.b16 %v2008
      %v2048 = vunpack.c.l.b16 %v2011
      %v2049 = vunpack.c.l.b16 %v2015
      %v2050 = vunpack.c.l.b16 %v2018
      %v2051 = vunpack.c.l.b16 %v2022
      %v2052 = vunpack.c.l.b16 %v2025
      %v2053 = vunpack.c.l.b16 %v2029
      %v2054 = vunpack.c.l.b16 %v2032
      %v2055 = vpack.c.b16 %v2036, %v2035
      %v2056 = vpack.c.b16 %v2038, %v2037
      %v2057 = vpack.c.b16 %v2040, %v2039
      %v2058 = vpack.c.b16 %v2042, %v2041
      %v2059 = vpack.c.b16 %v2044, %v2043
      %v2060 = vpack.c.b16 %v2046, %v2045
      %v2061 = vpack.c.b16 %v2048, %v2047
      %v2062 = vpack.c.b16 %v2050, %v2049
      %v2063 = vpack.c.b16 %v2052, %v2051
      %v2064 = vpack.c.b16 %v2054, %v2053
      %v2066 = vsel %vm571, %v2055, 0
      %v2069 = vsel %vm571, %v2056, 0
      %v2072 = vsel %vm571, %v2057, 0
      %v2075 = vsel %vm571, %v2058, 0
      %v2078 = vsel %vm571, %v2059, 0
      %v2081 = vsel %vm571, %v2060, 0
      %v2084 = vsel %vm571, %v2061, 0
      %v2087 = vsel %vm571, %v2062, 0
      %v2090 = vsel %vm571, %v2063, 0
      %v2093 = vsel %vm571, %v2064, 0
      %v2096 = vsel %vm602, %v2034, 0
      %2098 = vmatprep.subr.bf16.mxu0 0
      %2099 = vmatpush1.bf16.msra.mxu0 %v2096
      %2100 = vmatprep.subr.bf16.mxu0 0
      %2101 = vmatpush1.bf16.msra.mxu0 0
      %2102 = vmatprep.subr.bf16.mxu0 0
      %2103 = vmatpush1.bf16.msra.mxu0 0
      %2104 = vmatprep.subr.bf16.mxu0 0
      %2105 = vmatpush1.bf16.msra.mxu0 0
      %2106 = vmatprep.subr.bf16.mxu0 0
      %2107 = vmatpush1.bf16.msra.mxu0 0
      %2108 = vmatprep.subr.bf16.mxu0 0
      %2109 = vmatpush1.bf16.msra.mxu0 0
      %2110 = vmatprep.subr.bf16.mxu0 0
      %2111 = vmatpush1.bf16.msra.mxu0 0
      %2112 = vmatprep.subr.bf16.mxu0 0
      %2113 = vmatpush1.bf16.msra.mxu0 0
      %2114 = vmatprep.subr.bf16.mxu0 0
      %2115 = vmatpush1.bf16.msra.mxu0 0
      %2116 = vmatprep.subr.bf16.mxu0 0
      %2117 = vmatpush1.bf16.msra.mxu0 0
      %2118 = vmatprep.subr.bf16.mxu0 0
      %2119 = vmatpush1.bf16.msra.mxu0 0
      %2120 = vmatprep.subr.bf16.mxu0 0
      %2121 = vmatpush1.bf16.msra.mxu0 0
      %2122 = vmatprep.subr.bf16.mxu0 0
      %2123 = vmatpush1.bf16.msra.mxu0 0
      %2124 = vmatprep.subr.bf16.mxu0 0
      %2125 = vmatpush1.bf16.msra.mxu0 0
      %2126 = vmatprep.subr.bf16.mxu0 0
      %2127 = vmatpush1.bf16.msra.mxu0 0
      %2128 = vmatprep.subr.bf16.mxu0 0
      %2129 = vmatpush1.bf16.msra.mxu0 0
      %2130 = vmatprep.mubr.bf16.mxu0 0
      %2131 = vmatmul.mubr.bf16.gmra.mrb[0].mxu0 %v2066
      %v2132 = vpop.f32.mrb[0].mxu0
      %v2133 = vadd.f32 0.0, %v2132
      %v2134 = vpop.f32.mrb[0].mxu0
      %v2135 = vpop.f32.mrb[0].mxu0
      %v2136 = vadd.f32 0.0, %v2135
      %v2137 = vpop.f32.mrb[0].mxu0
      %2138 = vmatprep.mubr.bf16.mxu0 0
      %2139 = vmatmul.mubr.bf16.gmra.mrb[0].mxu0 %v2069
      %v2140 = vpop.f32.mrb[0].mxu0
      %v2141 = vadd.f32 0.0, %v2140
      %v2142 = vpop.f32.mrb[0].mxu0
      %v2143 = vpop.f32.mrb[0].mxu0
      %v2144 = vadd.f32 0.0, %v2143
      %v2145 = vpop.f32.mrb[0].mxu0
      %2146 = vmatprep.mubr.bf16.mxu0 0
      %2147 = vmatmul.mubr.bf16.gmra.mrb[0].mxu0 %v2072
      %v2148 = vpop.f32.mrb[0].mxu0
      %v2149 = vadd.f32 0.0, %v2148
      %v2150 = vpop.f32.mrb[0].mxu0
      %v2151 = vpop.f32.mrb[0].mxu0
      %v2152 = vadd.f32 0.0, %v2151
      %v2153 = vpop.f32.mrb[0].mxu0
      %2154 = vmatprep.mubr.bf16.mxu0 0
      %2155 = vmatmul.mubr.bf16.gmra.mrb[0].mxu0 %v2075
      %v2156 = vpop.f32.mrb[0].mxu0
      %v2157 = vadd.f32 0.0, %v2156
      %v2158 = vpop.f32.mrb[0].mxu0
      %v2159 = vpop.f32.mrb[0].mxu0
      %v2160 = vadd.f32 0.0, %v2159
      %v2161 = vpop.f32.mrb[0].mxu0
      %2162 = vmatprep.mubr.bf16.mxu0 0
      %2163 = vmatmul.mubr.bf16.gmra.mrb[0].mxu0 %v2078
      %v2164 = vpop.f32.mrb[0].mxu0
      %v2165 = vadd.f32 0.0, %v2164
      %v2166 = vpop.f32.mrb[0].mxu0
      %v2167 = vpop.f32.mrb[0].mxu0
      %v2168 = vadd.f32 0.0, %v2167
      %v2169 = vpop.f32.mrb[0].mxu0
      %2170 = vmatprep.mubr.bf16.mxu0 0
      %2171 = vmatmul.mubr.bf16.gmra.mrb[0].mxu0 %v2081
      %v2172 = vpop.f32.mrb[0].mxu0
      %v2173 = vadd.f32 0.0, %v2172
      %v2174 = vpop.f32.mrb[0].mxu0
      %v2175 = vpop.f32.mrb[0].mxu0
      %v2176 = vadd.f32 0.0, %v2175
      %v2177 = vpop.f32.mrb[0].mxu0
      %2178 = vmatprep.mubr.bf16.mxu0 0
      %2179 = vmatmul.mubr.bf16.gmra.mrb[0].mxu0 %v2084
      %v2180 = vpop.f32.mrb[0].mxu0
      %v2181 = vadd.f32 0.0, %v2180
      %v2182 = vpop.f32.mrb[0].mxu0
      %v2183 = vpop.f32.mrb[0].mxu0
      %v2184 = vadd.f32 0.0, %v2183
      %v2185 = vpop.f32.mrb[0].mxu0
      %2186 = vmatprep.mubr.bf16.mxu0 0
      %2187 = vmatmul.mubr.bf16.gmra.mrb[0].mxu0 %v2087
      %v2188 = vpop.f32.mrb[0].mxu0
      %v2189 = vadd.f32 0.0, %v2188
      %v2190 = vpop.f32.mrb[0].mxu0
      %v2191 = vpop.f32.mrb[0].mxu0
      %v2192 = vadd.f32 0.0, %v2191
      %v2193 = vpop.f32.mrb[0].mxu0
      %2194 = vmatprep.mubr.bf16.mxu0 0
      %2195 = vmatmul.mubr.bf16.gmra.mrb[0].mxu0 %v2090
      %v2196 = vpop.f32.mrb[0].mxu0
      %v2197 = vadd.f32 0.0, %v2196
      %v2198 = vpop.f32.mrb[0].mxu0
      %v2199 = vpop.f32.mrb[0].mxu0
      %v2200 = vadd.f32 0.0, %v2199
      %v2201 = vpop.f32.mrb[0].mxu0
      %2202 = vmatprep.mubr.bf16.mxu0 0
      %2203 = vmatmul.mubr.bf16.gmra.mrb[0].mxu0 %v2093
      %v2204 = vpop.f32.mrb[0].mxu0
      %v2205 = vadd.f32 0.0, %v2204
      %v2206 = vpop.f32.mrb[0].mxu0
      %v2207 = vpop.f32.mrb[0].mxu0
      %v2208 = vadd.f32 0.0, %v2207
      %v2209 = vpop.f32.mrb[0].mxu0
      %2210 = vdwg.mxu0
      %v2211 = vadd.f32 %v1903, %v2133
      %v2212 = vadd.f32 %v1904, %v2136
      %v2213 = vadd.f32 %v1905, %v2141
      %v2214 = vadd.f32 %v1906, %v2144
      %v2215 = vadd.f32 %v1907, %v2149
      %v2216 = vadd.f32 %v1908, %v2152
      %v2217 = vadd.f32 %v1909, %v2157
      %v2218 = vadd.f32 %v1910, %v2160
      %v2219 = vadd.f32 %v1911, %v2165
      %v2220 = vadd.f32 %v1912, %v2168
      %v2221 = vadd.f32 %v1913, %v2173
      %v2222 = vadd.f32 %v1914, %v2176
      %v2223 = vadd.f32 %v1915, %v2181
      %v2224 = vadd.f32 %v1916, %v2184
      %v2225 = vadd.f32 %v1917, %v2189
      %v2226 = vadd.f32 %v1918, %v2192
      %v2227 = vadd.f32 %v1919, %v2197
      %v2228 = vadd.f32 %v1920, %v2200
      %v2229 = vadd.f32 %v1921, %v2205
      %v2230 = vadd.f32 %v1922, %v2208
      %s2231 = scalar_lea.vmem %s252, 24
      %v2232 = vld [vmem:[%s2231] sm:$0xf]
      %v2233 = vld [vmem:[%s2231 + $0x4] sm:$0xf]
      %v2234 = vld [vmem:[%s2231 + $0xc] sm:$0xf]
      %v2235 = vld [vmem:[%s2231 + $0x10] sm:$0xf]
      %v2236 = vld [vmem:[%s2231 + $0x18] sm:$0xf]
      %v2237 = vld [vmem:[%s2231 + $0x1c] sm:$0xf]
      %v2238 = vld [vmem:[%s2231 + $0x24] sm:$0xf]
      %v2239 = vld [vmem:[%s2231 + $0x28] sm:$0xf]
      %v2240 = vld [vmem:[%s2231 + $0x30] sm:$0xf]
      %v2241 = vld [vmem:[%s2231 + $0x34] sm:$0xf]
      %v2242 = vld [vmem:[%s2231 + $0x3c] sm:$0xf]
      %v2243 = vld [vmem:[%s2231 + $0x40] sm:$0xf]
      %v2244 = vld [vmem:[%s2231 + $0x48] sm:$0xf]
      %v2245 = vld [vmem:[%s2231 + $0x4c] sm:$0xf]
      %v2246 = vld [vmem:[%s2231 + $0x54] sm:$0xf]
      %v2247 = vld [vmem:[%s2231 + $0x58] sm:$0xf]
      %v2248 = vld [vmem:[%s2231 + $0x60] sm:$0xf]
      %v2249 = vld [vmem:[%s2231 + $0x64] sm:$0xf]
      %v2250 = vld [vmem:[%s2231 + $0x6c] sm:$0xf]
      %v2251 = vld [vmem:[%s2231 + $0x70] sm:$0xf]
      %s2252 = scalar_lea.vmem %s1, 12
      %v2253 = vld [vmem:[%s2252] sm:$0x3]
      %v2274 = vunpack.c.l.b16 %v2232
      %v2275 = vunpack.c.l.b16 %v2233
      %v2276 = vunpack.c.l.b16 %v2234
      %v2277 = vunpack.c.l.b16 %v2235
      %v2278 = vunpack.c.l.b16 %v2236
      %v2279 = vunpack.c.l.b16 %v2237
      %v2280 = vunpack.c.l.b16 %v2238
      %v2281 = vunpack.c.l.b16 %v2239
      %v2282 = vunpack.c.l.b16 %v2240
      %v2283 = vunpack.c.l.b16 %v2241
      %v2284 = vunpack.c.l.b16 %v2242
      %v2285 = vunpack.c.l.b16 %v2243
      %v2286 = vunpack.c.l.b16 %v2244
      %v2287 = vunpack.c.l.b16 %v2245
      %v2288 = vunpack.c.l.b16 %v2246
      %v2289 = vunpack.c.l.b16 %v2247
      %v2290 = vunpack.c.l.b16 %v2248
      %v2291 = vunpack.c.l.b16 %v2249
      %v2292 = vunpack.c.l.b16 %v2250
      %v2293 = vunpack.c.l.b16 %v2251
      %v2294 = vpack.c.b16 %v2275, %v2274
      %v2295 = vpack.c.b16 %v2277, %v2276
      %v2296 = vpack.c.b16 %v2279, %v2278
      %v2297 = vpack.c.b16 %v2281, %v2280
      %v2298 = vpack.c.b16 %v2283, %v2282
      %v2299 = vpack.c.b16 %v2285, %v2284
      %v2300 = vpack.c.b16 %v2287, %v2286
      %v2301 = vpack.c.b16 %v2289, %v2288
      %v2302 = vpack.c.b16 %v2291, %v2290
      %v2303 = vpack.c.b16 %v2293, %v2292
      %v2305 = vsel %vm571, %v2294, 0
      %v2308 = vsel %vm571, %v2295, 0
      %v2311 = vsel %vm571, %v2296, 0
      %v2314 = vsel %vm571, %v2297, 0
      %v2317 = vsel %vm571, %v2298, 0
      %v2320 = vsel %vm571, %v2299, 0
      %v2323 = vsel %vm571, %v2300, 0
      %v2326 = vsel %vm571, %v2301, 0
      %v2329 = vsel %vm571, %v2302, 0
      %v2332 = vsel %vm571, %v2303, 0
      %v2335 = vsel %vm602, %v2253, 0
      %2337 = vmatprep.subr.bf16.mxu0 0
      %2338 = vmatpush1.bf16.msra.mxu0 %v2335
      %2339 = vmatprep.subr.bf16.mxu0 0
      %2340 = vmatpush1.bf16.msra.mxu0 0
      %2341 = vmatprep.subr.bf16.mxu0 0
      %2342 = vmatpush1.bf16.msra.mxu0 0
      %2343 = vmatprep.subr.bf16.mxu0 0
      %2344 = vmatpush1.bf16.msra.mxu0 0
      %2345 = vmatprep.subr.bf16.mxu0 0
      %2346 = vmatpush1.bf16.msra.mxu0 0
      %2347 = vmatprep.subr.bf16.mxu0 0
      %2348 = vmatpush1.bf16.msra.mxu0 0
      %2349 = vmatprep.subr.bf16.mxu0 0
      %2350 = vmatpush1.bf16.msra.mxu0 0
      %2351 = vmatprep.subr.bf16.mxu0 0
      %2352 = vmatpush1.bf16.msra.mxu0 0
      %2353 = vmatprep.subr.bf16.mxu0 0
      %2354 = vmatpush1.bf16.msra.mxu0 0
      %2355 = vmatprep.subr.bf16.mxu0 0
      %2356 = vmatpush1.bf16.msra.mxu0 0
      %2357 = vmatprep.subr.bf16.mxu0 0
      %2358 = vmatpush1.bf16.msra.mxu0 0
      %2359 = vmatprep.subr.bf16.mxu0 0
      %2360 = vmatpush1.bf16.msra.mxu0 0
      %2361 = vmatprep.subr.bf16.mxu0 0
      %2362 = vmatpush1.bf16.msra.mxu0 0
      %2363 = vmatprep.subr.bf16.mxu0 0
      %2364 = vmatpush1.bf16.msra.mxu0 0
      %2365 = vmatprep.subr.bf16.mxu0 0
      %2366 = vmatpush1.bf16.msra.mxu0 0
      %2367 = vmatprep.subr.bf16.mxu0 0
      %2368 = vmatpush1.bf16.msra.mxu0 0
      %2369 = vmatprep.mubr.bf16.mxu0 0
      %2370 = vmatmul.mubr.bf16.gmra.mrb[0].mxu0 %v2305
      %v2371 = vpop.f32.mrb[0].mxu0
      %v2372 = vadd.f32 0.0, %v2371
      %v2373 = vpop.f32.mrb[0].mxu0
      %v2374 = vpop.f32.mrb[0].mxu0
      %v2375 = vadd.f32 0.0, %v2374
      %v2376 = vpop.f32.mrb[0].mxu0
      %2377 = vmatprep.mubr.bf16.mxu0 0
      %2378 = vmatmul.mubr.bf16.gmra.mrb[0].mxu0 %v2308
      %v2379 = vpop.f32.mrb[0].mxu0
      %v2380 = vadd.f32 0.0, %v2379
      %v2381 = vpop.f32.mrb[0].mxu0
      %v2382 = vpop.f32.mrb[0].mxu0
      %v2383 = vadd.f32 0.0, %v2382
      %v2384 = vpop.f32.mrb[0].mxu0
      %2385 = vmatprep.mubr.bf16.mxu0 0
      %2386 = vmatmul.mubr.bf16.gmra.mrb[0].mxu0 %v2311
      %v2387 = vpop.f32.mrb[0].mxu0
      %v2388 = vadd.f32 0.0, %v2387
      %v2389 = vpop.f32.mrb[0].mxu0
      %v2390 = vpop.f32.mrb[0].mxu0
      %v2391 = vadd.f32 0.0, %v2390
      %v2392 = vpop.f32.mrb[0].mxu0
      %2393 = vmatprep.mubr.bf16.mxu0 0
      %2394 = vmatmul.mubr.bf16.gmra.mrb[0].mxu0 %v2314
      %v2395 = vpop.f32.mrb[0].mxu0
      %v2396 = vadd.f32 0.0, %v2395
      %v2397 = vpop.f32.mrb[0].mxu0
      %v2398 = vpop.f32.mrb[0].mxu0
      %v2399 = vadd.f32 0.0, %v2398
      %v2400 = vpop.f32.mrb[0].mxu0
      %2401 = vmatprep.mubr.bf16.mxu0 0
      %2402 = vmatmul.mubr.bf16.gmra.mrb[0].mxu0 %v2317
      %v2403 = vpop.f32.mrb[0].mxu0
      %v2404 = vadd.f32 0.0, %v2403
      %v2405 = vpop.f32.mrb[0].mxu0
      %v2406 = vpop.f32.mrb[0].mxu0
      %v2407 = vadd.f32 0.0, %v2406
      %v2408 = vpop.f32.mrb[0].mxu0
      %2409 = vmatprep.mubr.bf16.mxu0 0
      %2410 = vmatmul.mubr.bf16.gmra.mrb[0].mxu0 %v2320
      %v2411 = vpop.f32.mrb[0].mxu0
      %v2412 = vadd.f32 0.0, %v2411
      %v2413 = vpop.f32.mrb[0].mxu0
      %v2414 = vpop.f32.mrb[0].mxu0
      %v2415 = vadd.f32 0.0, %v2414
      %v2416 = vpop.f32.mrb[0].mxu0
      %2417 = vmatprep.mubr.bf16.mxu0 0
      %2418 = vmatmul.mubr.bf16.gmra.mrb[0].mxu0 %v2323
      %v2419 = vpop.f32.mrb[0].mxu0
      %v2420 = vadd.f32 0.0, %v2419
      %v2421 = vpop.f32.mrb[0].mxu0
      %v2422 = vpop.f32.mrb[0].mxu0
      %v2423 = vadd.f32 0.0, %v2422
      %v2424 = vpop.f32.mrb[0].mxu0
      %2425 = vmatprep.mubr.bf16.mxu0 0
      %2426 = vmatmul.mubr.bf16.gmra.mrb[0].mxu0 %v2326
      %v2427 = vpop.f32.mrb[0].mxu0
      %v2428 = vadd.f32 0.0, %v2427
      %v2429 = vpop.f32.mrb[0].mxu0
      %v2430 = vpop.f32.mrb[0].mxu0
      %v2431 = vadd.f32 0.0, %v2430
      %v2432 = vpop.f32.mrb[0].mxu0
      %2433 = vmatprep.mubr.bf16.mxu0 0
      %2434 = vmatmul.mubr.bf16.gmra.mrb[0].mxu0 %v2329
      %v2435 = vpop.f32.mrb[0].mxu0
      %v2436 = vadd.f32 0.0, %v2435
      %v2437 = vpop.f32.mrb[0].mxu0
      %v2438 = vpop.f32.mrb[0].mxu0
      %v2439 = vadd.f32 0.0, %v2438
      %v2440 = vpop.f32.mrb[0].mxu0
      %2441 = vmatprep.mubr.bf16.mxu0 0
      %2442 = vmatmul.mubr.bf16.gmra.mrb[0].mxu0 %v2332
      %v2443 = vpop.f32.mrb[0].mxu0
      %v2444 = vadd.f32 0.0, %v2443
      %v2445 = vpop.f32.mrb[0].mxu0
      %v2446 = vpop.f32.mrb[0].mxu0
      %v2447 = vadd.f32 0.0, %v2446
      %v2448 = vpop.f32.mrb[0].mxu0
      %2449 = vdwg.mxu0
      %v2450 = vadd.f32 %v2211, %v2372
      %v2451 = vadd.f32 %v2212, %v2375
      %v2452 = vadd.f32 %v2213, %v2380
      %v2453 = vadd.f32 %v2214, %v2383
      %v2454 = vadd.f32 %v2215, %v2388
      %v2455 = vadd.f32 %v2216, %v2391
      %v2456 = vadd.f32 %v2217, %v2396
      %v2457 = vadd.f32 %v2218, %v2399
      %v2458 = vadd.f32 %v2219, %v2404
      %v2459 = vadd.f32 %v2220, %v2407
      %v2460 = vadd.f32 %v2221, %v2412
      %v2461 = vadd.f32 %v2222, %v2415
      %v2462 = vadd.f32 %v2223, %v2420
      %v2463 = vadd.f32 %v2224, %v2423
      %v2464 = vadd.f32 %v2225, %v2428
      %v2465 = vadd.f32 %v2226, %v2431
      %v2466 = vadd.f32 %v2227, %v2436
      %v2467 = vadd.f32 %v2228, %v2439
      %v2468 = vadd.f32 %v2229, %v2444
      %v2469 = vadd.f32 %v2230, %v2447
      %v2470 = vld [vmem:[%s2231] sm:$0xf]
      %v2471 = vld [vmem:[%s2231 + $0x4] sm:$0xf]
      %v2472 = vld [vmem:[%s2231 + $0x8] sm:$0x1]
      %v2473 = vld [vmem:[%s2231 + $0xc] sm:$0xf]
      %v2474 = vld [vmem:[%s2231 + $0x10] sm:$0xf]
      %v2475 = vld [vmem:[%s2231 + $0x14] sm:$0x1]
      %v2476 = vld [vmem:[%s2231 + $0x18] sm:$0xf]
      %v2477 = vld [vmem:[%s2231 + $0x1c] sm:$0xf]
      %v2478 = vld [vmem:[%s2231 + $0x20] sm:$0x1]
      %v2479 = vld [vmem:[%s2231 + $0x24] sm:$0xf]
      %v2480 = vld [vmem:[%s2231 + $0x28] sm:$0xf]
      %v2481 = vld [vmem:[%s2231 + $0x2c] sm:$0x1]
      %v2482 = vld [vmem:[%s2231 + $0x30] sm:$0xf]
      %v2483 = vld [vmem:[%s2231 + $0x34] sm:$0xf]
      %v2484 = vld [vmem:[%s2231 + $0x38] sm:$0x1]
      %v2485 = vld [vmem:[%s2231 + $0x3c] sm:$0xf]
      %v2486 = vld [vmem:[%s2231 + $0x40] sm:$0xf]
      %v2487 = vld [vmem:[%s2231 + $0x44] sm:$0x1]
      %v2488 = vld [vmem:[%s2231 + $0x48] sm:$0xf]
      %v2489 = vld [vmem:[%s2231 + $0x4c] sm:$0xf]
      %v2490 = vld [vmem:[%s2231 + $0x50] sm:$0x1]
      %v2491 = vld [vmem:[%s2231 + $0x54] sm:$0xf]
      %v2492 = vld [vmem:[%s2231 + $0x58] sm:$0xf]
      %v2493 = vld [vmem:[%s2231 + $0x5c] sm:$0x1]
      %v2494 = vld [vmem:[%s2231 + $0x60] sm:$0xf]
      %v2495 = vld [vmem:[%s2231 + $0x64] sm:$0xf]
      %v2496 = vld [vmem:[%s2231 + $0x68] sm:$0x1]
      %v2497 = vld [vmem:[%s2231 + $0x6c] sm:$0xf]
      %v2498 = vld [vmem:[%s2231 + $0x70] sm:$0xf]
      %v2499 = vld [vmem:[%s2231 + $0x74] sm:$0x1]
      %v2501 = vshrl.u32 %v2470, 16
      %v2503 = vrot.slane %v2501, 4
      %v2504 = vshll.u32 %v2470, 16
      %v2506 = vrot.slane %v2504, 5
      %v2507 = vor.u32 %v2503, %v2506
      %v2508 = vrot.slane %v2507, 4
      %v2510 = vshll.u32 %v2471, 16
      %v2512 = vrot.slane %v2510, 5
      %v2513 = vsel %vm298, %v2508, %v2512
      %v2514 = vshrl.u32 %v2471, 16
      %v2516 = vrot.slane %v2514, 4
      %v2517 = vor.u32 %v2516, %v2512
      %v2518 = vrot.slane %v2517, 4
      %v2520 = vshll.u32 %v2472, 16
      %v2522 = vrot.slane %v2520, 5
      %v2523 = vsel %vm298, %v2518, %v2522
      %v2525 = vshrl.u32 %v2473, 16
      %v2527 = vrot.slane %v2525, 4
      %v2528 = vshll.u32 %v2473, 16
      %v2530 = vrot.slane %v2528, 5
      %v2531 = vor.u32 %v2527, %v2530
      %v2532 = vrot.slane %v2531, 4
      %v2534 = vshll.u32 %v2474, 16
      %v2536 = vrot.slane %v2534, 5
      %v2537 = vsel %vm298, %v2532, %v2536
      %v2538 = vshrl.u32 %v2474, 16
      %v2540 = vrot.slane %v2538, 4
      %v2541 = vor.u32 %v2540, %v2536
      %v2542 = vrot.slane %v2541, 4
      %v2544 = vshll.u32 %v2475, 16
      %v2546 = vrot.slane %v2544, 5
      %v2547 = vsel %vm298, %v2542, %v2546
      %v2549 = vshrl.u32 %v2476, 16
      %v2551 = vrot.slane %v2549, 4
      %v2552 = vshll.u32 %v2476, 16
      %v2554 = vrot.slane %v2552, 5
      %v2555 = vor.u32 %v2551, %v2554
      %v2556 = vrot.slane %v2555, 4
      %v2558 = vshll.u32 %v2477, 16
      %v2560 = vrot.slane %v2558, 5
      %v2561 = vsel %vm298, %v2556, %v2560
      %v2562 = vshrl.u32 %v2477, 16
      %v2564 = vrot.slane %v2562, 4
      %v2565 = vor.u32 %v2564, %v2560
      %v2566 = vrot.slane %v2565, 4
      %v2568 = vshll.u32 %v2478, 16
      %v2570 = vrot.slane %v2568, 5
      %v2571 = vsel %vm298, %v2566, %v2570
      %v2573 = vshrl.u32 %v2479, 16
      %v2575 = vrot.slane %v2573, 4
      %v2576 = vshll.u32 %v2479, 16
      %v2578 = vrot.slane %v2576, 5
      %v2579 = vor.u32 %v2575, %v2578
      %v2580 = vrot.slane %v2579, 4
      %v2582 = vshll.u32 %v2480, 16
      %v2584 = vrot.slane %v2582, 5
      %v2585 = vsel %vm298, %v2580, %v2584
      %v2586 = vshrl.u32 %v2480, 16
      %v2588 = vrot.slane %v2586, 4
      %v2589 = vor.u32 %v2588, %v2584
      %v2590 = vrot.slane %v2589, 4
      %v2592 = vshll.u32 %v2481, 16
      %v2594 = vrot.slane %v2592, 5
      %v2595 = vsel %vm298, %v2590, %v2594
      %v2597 = vshrl.u32 %v2482, 16
      %v2599 = vrot.slane %v2597, 4
      %v2600 = vshll.u32 %v2482, 16
      %v2602 = vrot.slane %v2600, 5
      %v2603 = vor.u32 %v2599, %v2602
      %v2604 = vrot.slane %v2603, 4
      %v2606 = vshll.u32 %v2483, 16
      %v2608 = vrot.slane %v2606, 5
      %v2609 = vsel %vm298, %v2604, %v2608
      %v2610 = vshrl.u32 %v2483, 16
      %v2612 = vrot.slane %v2610, 4
      %v2613 = vor.u32 %v2612, %v2608
      %v2614 = vrot.slane %v2613, 4
      %v2616 = vshll.u32 %v2484, 16
      %v2618 = vrot.slane %v2616, 5
      %v2619 = vsel %vm298, %v2614, %v2618
      %v2621 = vshrl.u32 %v2485, 16
      %v2623 = vrot.slane %v2621, 4
      %v2624 = vshll.u32 %v2485, 16
      %v2626 = vrot.slane %v2624, 5
      %v2627 = vor.u32 %v2623, %v2626
      %v2628 = vrot.slane %v2627, 4
      %v2630 = vshll.u32 %v2486, 16
      %v2632 = vrot.slane %v2630, 5
      %v2633 = vsel %vm298, %v2628, %v2632
      %v2634 = vshrl.u32 %v2486, 16
      %v2636 = vrot.slane %v2634, 4
      %v2637 = vor.u32 %v2636, %v2632
      %v2638 = vrot.slane %v2637, 4
      %v2640 = vshll.u32 %v2487, 16
      %v2642 = vrot.slane %v2640, 5
      %v2643 = vsel %vm298, %v2638, %v2642
      %v2645 = vshrl.u32 %v2488, 16
      %v2647 = vrot.slane %v2645, 4
      %v2648 = vshll.u32 %v2488, 16
      %v2650 = vrot.slane %v2648, 5
      %v2651 = vor.u32 %v2647, %v2650
      %v2652 = vrot.slane %v2651, 4
      %v2654 = vshll.u32 %v2489, 16
      %v2656 = vrot.slane %v2654, 5
      %v2657 = vsel %vm298, %v2652, %v2656
      %v2658 = vshrl.u32 %v2489, 16
      %v2660 = vrot.slane %v2658, 4
      %v2661 = vor.u32 %v2660, %v2656
      %v2662 = vrot.slane %v2661, 4
      %v2664 = vshll.u32 %v2490, 16
      %v2666 = vrot.slane %v2664, 5
      %v2667 = vsel %vm298, %v2662, %v2666
      %v2669 = vshrl.u32 %v2491, 16
      %v2671 = vrot.slane %v2669, 4
      %v2672 = vshll.u32 %v2491, 16
      %v2674 = vrot.slane %v2672, 5
      %v2675 = vor.u32 %v2671, %v2674
      %v2676 = vrot.slane %v2675, 4
      %v2678 = vshll.u32 %v2492, 16
      %v2680 = vrot.slane %v2678, 5
      %v2681 = vsel %vm298, %v2676, %v2680
      %v2682 = vshrl.u32 %v2492, 16
      %v2684 = vrot.slane %v2682, 4
      %v2685 = vor.u32 %v2684, %v2680
      %v2686 = vrot.slane %v2685, 4
      %v2688 = vshll.u32 %v2493, 16
      %v2690 = vrot.slane %v2688, 5
      %v2691 = vsel %vm298, %v2686, %v2690
      %v2693 = vshrl.u32 %v2494, 16
      %v2695 = vrot.slane %v2693, 4
      %v2696 = vshll.u32 %v2494, 16
      %v2698 = vrot.slane %v2696, 5
      %v2699 = vor.u32 %v2695, %v2698
      %v2700 = vrot.slane %v2699, 4
      %v2702 = vshll.u32 %v2495, 16
      %v2704 = vrot.slane %v2702, 5
      %v2705 = vsel %vm298, %v2700, %v2704
      %v2706 = vshrl.u32 %v2495, 16
      %v2708 = vrot.slane %v2706, 4
      %v2709 = vor.u32 %v2708, %v2704
      %v2710 = vrot.slane %v2709, 4
      %v2712 = vshll.u32 %v2496, 16
      %v2714 = vrot.slane %v2712, 5
      %v2715 = vsel %vm298, %v2710, %v2714
      %v2717 = vshrl.u32 %v2497, 16
      %v2719 = vrot.slane %v2717, 4
      %v2720 = vshll.u32 %v2497, 16
      %v2722 = vrot.slane %v2720, 5
      %v2723 = vor.u32 %v2719, %v2722
      %v2724 = vrot.slane %v2723, 4
      %v2726 = vshll.u32 %v2498, 16
      %v2728 = vrot.slane %v2726, 5
      %v2729 = vsel %vm298, %v2724, %v2728
      %v2730 = vshrl.u32 %v2498, 16
      %v2732 = vrot.slane %v2730, 4
      %v2733 = vor.u32 %v2732, %v2728
      %v2734 = vrot.slane %v2733, 4
      %v2736 = vshll.u32 %v2499, 16
      %v2738 = vrot.slane %v2736, 5
      %v2739 = vsel %vm298, %v2734, %v2738
      %s2740 = scalar_lea.vmem %s1, 14
      %v2741 = vld [vmem:[%s2740] sm:$0x3]
      %v2742 = vunpack.c.l.b16 %v2513
      %v2743 = vunpack.c.l.b16 %v2523
      %v2744 = vunpack.c.l.b16 %v2537
      %v2745 = vunpack.c.l.b16 %v2547
      %v2746 = vunpack.c.l.b16 %v2561
      %v2747 = vunpack.c.l.b16 %v2571
      %v2748 = vunpack.c.l.b16 %v2585
      %v2749 = vunpack.c.l.b16 %v2595
      %v2750 = vunpack.c.l.b16 %v2609
      %v2751 = vunpack.c.l.b16 %v2619
      %v2752 = vunpack.c.l.b16 %v2633
      %v2753 = vunpack.c.l.b16 %v2643
      %v2754 = vunpack.c.l.b16 %v2657
      %v2755 = vunpack.c.l.b16 %v2667
      %v2756 = vunpack.c.l.b16 %v2681
      %v2757 = vunpack.c.l.b16 %v2691
      %v2758 = vunpack.c.l.b16 %v2705
      %v2759 = vunpack.c.l.b16 %v2715
      %v2760 = vunpack.c.l.b16 %v2729
      %v2761 = vunpack.c.l.b16 %v2739
      %v2762 = vpack.c.b16 %v2743, %v2742
      %v2763 = vpack.c.b16 %v2745, %v2744
      %v2764 = vpack.c.b16 %v2747, %v2746
      %v2765 = vpack.c.b16 %v2749, %v2748
      %v2766 = vpack.c.b16 %v2751, %v2750
      %v2767 = vpack.c.b16 %v2753, %v2752
      %v2768 = vpack.c.b16 %v2755, %v2754
      %v2769 = vpack.c.b16 %v2757, %v2756
      %v2770 = vpack.c.b16 %v2759, %v2758
      %v2771 = vpack.c.b16 %v2761, %v2760
      %v2773 = vsel %vm571, %v2762, 0
      %v2776 = vsel %vm571, %v2763, 0
      %v2779 = vsel %vm571, %v2764, 0
      %v2782 = vsel %vm571, %v2765, 0
      %v2785 = vsel %vm571, %v2766, 0
      %v2788 = vsel %vm571, %v2767, 0
      %v2791 = vsel %vm571, %v2768, 0
      %v2794 = vsel %vm571, %v2769, 0
      %v2797 = vsel %vm571, %v2770, 0
      %v2800 = vsel %vm571, %v2771, 0
      %v2803 = vsel %vm602, %v2741, 0
      %2805 = vmatprep.subr.bf16.mxu0 0
      %2806 = vmatpush1.bf16.msra.mxu0 %v2803
      %2807 = vmatprep.subr.bf16.mxu0 0
      %2808 = vmatpush1.bf16.msra.mxu0 0
      %2809 = vmatprep.subr.bf16.mxu0 0
      %2810 = vmatpush1.bf16.msra.mxu0 0
      %2811 = vmatprep.subr.bf16.mxu0 0
      %2812 = vmatpush1.bf16.msra.mxu0 0
      %2813 = vmatprep.subr.bf16.mxu0 0
      %2814 = vmatpush1.bf16.msra.mxu0 0
      %2815 = vmatprep.subr.bf16.mxu0 0
      %2816 = vmatpush1.bf16.msra.mxu0 0
      %2817 = vmatprep.subr.bf16.mxu0 0
      %2818 = vmatpush1.bf16.msra.mxu0 0
      %2819 = vmatprep.subr.bf16.mxu0 0
      %2820 = vmatpush1.bf16.msra.mxu0 0
      %2821 = vmatprep.subr.bf16.mxu0 0
      %2822 = vmatpush1.bf16.msra.mxu0 0
      %2823 = vmatprep.subr.bf16.mxu0 0
      %2824 = vmatpush1.bf16.msra.mxu0 0
      %2825 = vmatprep.subr.bf16.mxu0 0
      %2826 = vmatpush1.bf16.msra.mxu0 0
      %2827 = vmatprep.subr.bf16.mxu0 0
      %2828 = vmatpush1.bf16.msra.mxu0 0
      %2829 = vmatprep.subr.bf16.mxu0 0
      %2830 = vmatpush1.bf16.msra.mxu0 0
      %2831 = vmatprep.subr.bf16.mxu0 0
      %2832 = vmatpush1.bf16.msra.mxu0 0
      %2833 = vmatprep.subr.bf16.mxu0 0
      %2834 = vmatpush1.bf16.msra.mxu0 0
      %2835 = vmatprep.subr.bf16.mxu0 0
      %2836 = vmatpush1.bf16.msra.mxu0 0
      %2837 = vmatprep.mubr.bf16.mxu0 0
      %2838 = vmatmul.mubr.bf16.gmra.mrb[0].mxu0 %v2773
      %v2839 = vpop.f32.mrb[0].mxu0
      %v2840 = vadd.f32 0.0, %v2839
      %v2841 = vpop.f32.mrb[0].mxu0
      %v2842 = vpop.f32.mrb[0].mxu0
      %v2843 = vadd.f32 0.0, %v2842
      %v2844 = vpop.f32.mrb[0].mxu0
      %2845 = vmatprep.mubr.bf16.mxu0 0
      %2846 = vmatmul.mubr.bf16.gmra.mrb[0].mxu0 %v2776
      %v2847 = vpop.f32.mrb[0].mxu0
      %v2848 = vadd.f32 0.0, %v2847
      %v2849 = vpop.f32.mrb[0].mxu0
      %v2850 = vpop.f32.mrb[0].mxu0
      %v2851 = vadd.f32 0.0, %v2850
      %v2852 = vpop.f32.mrb[0].mxu0
      %2853 = vmatprep.mubr.bf16.mxu0 0
      %2854 = vmatmul.mubr.bf16.gmra.mrb[0].mxu0 %v2779
      %v2855 = vpop.f32.mrb[0].mxu0
      %v2856 = vadd.f32 0.0, %v2855
      %v2857 = vpop.f32.mrb[0].mxu0
      %v2858 = vpop.f32.mrb[0].mxu0
      %v2859 = vadd.f32 0.0, %v2858
      %v2860 = vpop.f32.mrb[0].mxu0
      %2861 = vmatprep.mubr.bf16.mxu0 0
      %2862 = vmatmul.mubr.bf16.gmra.mrb[0].mxu0 %v2782
      %v2863 = vpop.f32.mrb[0].mxu0
      %v2864 = vadd.f32 0.0, %v2863
      %v2865 = vpop.f32.mrb[0].mxu0
      %v2866 = vpop.f32.mrb[0].mxu0
      %v2867 = vadd.f32 0.0, %v2866
      %v2868 = vpop.f32.mrb[0].mxu0
      %2869 = vmatprep.mubr.bf16.mxu0 0
      %2870 = vmatmul.mubr.bf16.gmra.mrb[0].mxu0 %v2785
      %v2871 = vpop.f32.mrb[0].mxu0
      %v2872 = vadd.f32 0.0, %v2871
      %v2873 = vpop.f32.mrb[0].mxu0
      %v2874 = vpop.f32.mrb[0].mxu0
      %v2875 = vadd.f32 0.0, %v2874
      %v2876 = vpop.f32.mrb[0].mxu0
      %2877 = vmatprep.mubr.bf16.mxu0 0
      %2878 = vmatmul.mubr.bf16.gmra.mrb[0].mxu0 %v2788
      %v2879 = vpop.f32.mrb[0].mxu0
      %v2880 = vadd.f32 0.0, %v2879
      %v2881 = vpop.f32.mrb[0].mxu0
      %v2882 = vpop.f32.mrb[0].mxu0
      %v2883 = vadd.f32 0.0, %v2882
      %v2884 = vpop.f32.mrb[0].mxu0
      %2885 = vmatprep.mubr.bf16.mxu0 0
      %2886 = vmatmul.mubr.bf16.gmra.mrb[0].mxu0 %v2791
      %v2887 = vpop.f32.mrb[0].mxu0
      %v2888 = vadd.f32 0.0, %v2887
      %v2889 = vpop.f32.mrb[0].mxu0
      %v2890 = vpop.f32.mrb[0].mxu0
      %v2891 = vadd.f32 0.0, %v2890
      %v2892 = vpop.f32.mrb[0].mxu0
      %2893 = vmatprep.mubr.bf16.mxu0 0
      %2894 = vmatmul.mubr.bf16.gmra.mrb[0].mxu0 %v2794
      %v2895 = vpop.f32.mrb[0].mxu0
      %v2896 = vadd.f32 0.0, %v2895
      %v2897 = vpop.f32.mrb[0].mxu0
      %v2898 = vpop.f32.mrb[0].mxu0
      %v2899 = vadd.f32 0.0, %v2898
      %v2900 = vpop.f32.mrb[0].mxu0
      %2901 = vmatprep.mubr.bf16.mxu0 0
      %2902 = vmatmul.mubr.bf16.gmra.mrb[0].mxu0 %v2797
      %v2903 = vpop.f32.mrb[0].mxu0
      %v2904 = vadd.f32 0.0, %v2903
      %v2905 = vpop.f32.mrb[0].mxu0
      %v2906 = vpop.f32.mrb[0].mxu0
      %v2907 = vadd.f32 0.0, %v2906
      %v2908 = vpop.f32.mrb[0].mxu0
      %2909 = vmatprep.mubr.bf16.mxu0 0
      %2910 = vmatmul.mubr.bf16.gmra.mrb[0].mxu0 %v2800
      %v2911 = vpop.f32.mrb[0].mxu0
      %v2912 = vadd.f32 0.0, %v2911
      %v2913 = vpop.f32.mrb[0].mxu0
      %v2914 = vpop.f32.mrb[0].mxu0
      %v2915 = vadd.f32 0.0, %v2914
      %v2916 = vpop.f32.mrb[0].mxu0
      %2917 = vdwg.mxu0
      %v2918 = vadd.f32 %v2450, %v2840
      %v2919 = vadd.f32 %v2451, %v2843
      %v2920 = vadd.f32 %v2452, %v2848
      %v2921 = vadd.f32 %v2453, %v2851
      %v2922 = vadd.f32 %v2454, %v2856
      %v2923 = vadd.f32 %v2455, %v2859
      %v2924 = vadd.f32 %v2456, %v2864
      %v2925 = vadd.f32 %v2457, %v2867
      %v2926 = vadd.f32 %v2458, %v2872
      %v2927 = vadd.f32 %v2459, %v2875
      %v2928 = vadd.f32 %v2460, %v2880
      %v2929 = vadd.f32 %v2461, %v2883
      %v2930 = vadd.f32 %v2462, %v2888
      %v2931 = vadd.f32 %v2463, %v2891
      %v2932 = vadd.f32 %v2464, %v2896
      %v2933 = vadd.f32 %v2465, %v2899
      %v2934 = vadd.f32 %v2466, %v2904
      %v2935 = vadd.f32 %v2467, %v2907
      %v2936 = vadd.f32 %v2468, %v2912
      %v2937 = vadd.f32 %v2469, %v2915
      %v2938 = vld [vmem:[%s2231] sm:$0xe]
      %v2939 = vld [vmem:[%s2231 + $0xc] sm:$0xe]
      %v2940 = vld [vmem:[%s2231 + $0x18] sm:$0xe]
      %v2941 = vld [vmem:[%s2231 + $0x24] sm:$0xe]
      %v2942 = vld [vmem:[%s2231 + $0x30] sm:$0xe]
      %v2943 = vld [vmem:[%s2231 + $0x3c] sm:$0xe]
      %v2944 = vld [vmem:[%s2231 + $0x48] sm:$0xe]
      %v2945 = vld [vmem:[%s2231 + $0x54] sm:$0xe]
      %v2946 = vld [vmem:[%s2231 + $0x60] sm:$0xe]
      %v2947 = vld [vmem:[%s2231 + $0x6c] sm:$0xe]
      %v2978 = vrot.slane %v2938, 5
      %v2979 = vrot.slane %v2978, 4
      %v2980 = vrot.slane %v2471, 5
      %v2981 = vsel %vm947, %v2979, %v2980
      %v2982 = vrot.slane %v2980, 4
      %v2983 = vrot.slane %v2472, 5
      %v2984 = vsel %vm947, %v2982, %v2983
      %v2985 = vrot.slane %v2939, 5
      %v2986 = vrot.slane %v2985, 4
      %v2987 = vrot.slane %v2474, 5
      %v2988 = vsel %vm947, %v2986, %v2987
      %v2989 = vrot.slane %v2987, 4
      %v2990 = vrot.slane %v2475, 5
      %v2991 = vsel %vm947, %v2989, %v2990
      %v2992 = vrot.slane %v2940, 5
      %v2993 = vrot.slane %v2992, 4
      %v2994 = vrot.slane %v2477, 5
      %v2995 = vsel %vm947, %v2993, %v2994
      %v2996 = vrot.slane %v2994, 4
      %v2997 = vrot.slane %v2478, 5
      %v2998 = vsel %vm947, %v2996, %v2997
      %v2999 = vrot.slane %v2941, 5
      %v3000 = vrot.slane %v2999, 4
      %v3001 = vrot.slane %v2480, 5
      %v3002 = vsel %vm947, %v3000, %v3001
      %v3003 = vrot.slane %v3001, 4
      %v3004 = vrot.slane %v2481, 5
      %v3005 = vsel %vm947, %v3003, %v3004
      %v3006 = vrot.slane %v2942, 5
      %v3007 = vrot.slane %v3006, 4
      %v3008 = vrot.slane %v2483, 5
      %v3009 = vsel %vm947, %v3007, %v3008
      %v3010 = vrot.slane %v3008, 4
      %v3011 = vrot.slane %v2484, 5
      %v3012 = vsel %vm947, %v3010, %v3011
      %v3013 = vrot.slane %v2943, 5
      %v3014 = vrot.slane %v3013, 4
      %v3015 = vrot.slane %v2486, 5
      %v3016 = vsel %vm947, %v3014, %v3015
      %v3017 = vrot.slane %v3015, 4
      %v3018 = vrot.slane %v2487, 5
      %v3019 = vsel %vm947, %v3017, %v3018
      %v3020 = vrot.slane %v2944, 5
      %v3021 = vrot.slane %v3020, 4
      %v3022 = vrot.slane %v2489, 5
      %v3023 = vsel %vm947, %v3021, %v3022
      %v3024 = vrot.slane %v3022, 4
      %v3025 = vrot.slane %v2490, 5
      %v3026 = vsel %vm947, %v3024, %v3025
      %v3027 = vrot.slane %v2945, 5
      %v3028 = vrot.slane %v3027, 4
      %v3029 = vrot.slane %v2492, 5
      %v3030 = vsel %vm947, %v3028, %v3029
      %v3031 = vrot.slane %v3029, 4
      %v3032 = vrot.slane %v2493, 5
      %v3033 = vsel %vm947, %v3031, %v3032
      %v3034 = vrot.slane %v2946, 5
      %v3035 = vrot.slane %v3034, 4
      %v3036 = vrot.slane %v2495, 5
      %v3037 = vsel %vm947, %v3035, %v3036
      %v3038 = vrot.slane %v3036, 4
      %v3039 = vrot.slane %v2496, 5
      %v3040 = vsel %vm947, %v3038, %v3039
      %v3041 = vrot.slane %v2947, 5
      %v3042 = vrot.slane %v3041, 4
      %v3043 = vrot.slane %v2498, 5
      %v3044 = vsel %vm947, %v3042, %v3043
      %v3045 = vrot.slane %v3043, 4
      %v3046 = vrot.slane %v2499, 5
      %v3047 = vsel %vm947, %v3045, %v3046
      %s3048 = scalar_lea.vmem %s1, 16
      %v3049 = vld [vmem:[%s3048] sm:$0x3]
      %v3050 = vunpack.c.l.b16 %v2981
      %v3051 = vunpack.c.l.b16 %v2984
      %v3052 = vunpack.c.l.b16 %v2988
      %v3053 = vunpack.c.l.b16 %v2991
      %v3054 = vunpack.c.l.b16 %v2995
      %v3055 = vunpack.c.l.b16 %v2998
      %v3056 = vunpack.c.l.b16 %v3002
      %v3057 = vunpack.c.l.b16 %v3005
      %v3058 = vunpack.c.l.b16 %v3009
      %v3059 = vunpack.c.l.b16 %v3012
      %v3060 = vunpack.c.l.b16 %v3016
      %v3061 = vunpack.c.l.b16 %v3019
      %v3062 = vunpack.c.l.b16 %v3023
      %v3063 = vunpack.c.l.b16 %v3026
      %v3064 = vunpack.c.l.b16 %v3030
      %v3065 = vunpack.c.l.b16 %v3033
      %v3066 = vunpack.c.l.b16 %v3037
      %v3067 = vunpack.c.l.b16 %v3040
      %v3068 = vunpack.c.l.b16 %v3044
      %v3069 = vunpack.c.l.b16 %v3047
      %v3070 = vpack.c.b16 %v3051, %v3050
      %v3071 = vpack.c.b16 %v3053, %v3052
      %v3072 = vpack.c.b16 %v3055, %v3054
      %v3073 = vpack.c.b16 %v3057, %v3056
      %v3074 = vpack.c.b16 %v3059, %v3058
      %v3075 = vpack.c.b16 %v3061, %v3060
      %v3076 = vpack.c.b16 %v3063, %v3062
      %v3077 = vpack.c.b16 %v3065, %v3064
      %v3078 = vpack.c.b16 %v3067, %v3066
      %v3079 = vpack.c.b16 %v3069, %v3068
      %v3081 = vsel %vm571, %v3070, 0
      %v3084 = vsel %vm571, %v3071, 0
      %v3087 = vsel %vm571, %v3072, 0
      %v3090 = vsel %vm571, %v3073, 0
      %v3093 = vsel %vm571, %v3074, 0
      %v3096 = vsel %vm571, %v3075, 0
      %v3099 = vsel %vm571, %v3076, 0
      %v3102 = vsel %vm571, %v3077, 0
      %v3105 = vsel %vm571, %v3078, 0
      %v3108 = vsel %vm571, %v3079, 0
      %v3111 = vsel %vm602, %v3049, 0
      %3113 = vmatprep.subr.bf16.mxu0 0
      %3114 = vmatpush1.bf16.msra.mxu0 %v3111
      %3115 = vmatprep.subr.bf16.mxu0 0
      %3116 = vmatpush1.bf16.msra.mxu0 0
      %3117 = vmatprep.subr.bf16.mxu0 0
      %3118 = vmatpush1.bf16.msra.mxu0 0
      %3119 = vmatprep.subr.bf16.mxu0 0
      %3120 = vmatpush1.bf16.msra.mxu0 0
      %3121 = vmatprep.subr.bf16.mxu0 0
      %3122 = vmatpush1.bf16.msra.mxu0 0
      %3123 = vmatprep.subr.bf16.mxu0 0
      %3124 = vmatpush1.bf16.msra.mxu0 0
      %3125 = vmatprep.subr.bf16.mxu0 0
      %3126 = vmatpush1.bf16.msra.mxu0 0
      %3127 = vmatprep.subr.bf16.mxu0 0
      %3128 = vmatpush1.bf16.msra.mxu0 0
      %3129 = vmatprep.subr.bf16.mxu0 0
      %3130 = vmatpush1.bf16.msra.mxu0 0
      %3131 = vmatprep.subr.bf16.mxu0 0
      %3132 = vmatpush1.bf16.msra.mxu0 0
      %3133 = vmatprep.subr.bf16.mxu0 0
      %3134 = vmatpush1.bf16.msra.mxu0 0
      %3135 = vmatprep.subr.bf16.mxu0 0
      %3136 = vmatpush1.bf16.msra.mxu0 0
      %3137 = vmatprep.subr.bf16.mxu0 0
      %3138 = vmatpush1.bf16.msra.mxu0 0
      %3139 = vmatprep.subr.bf16.mxu0 0
      %3140 = vmatpush1.bf16.msra.mxu0 0
      %3141 = vmatprep.subr.bf16.mxu0 0
      %3142 = vmatpush1.bf16.msra.mxu0 0
      %3143 = vmatprep.subr.bf16.mxu0 0
      %3144 = vmatpush1.bf16.msra.mxu0 0
      %3145 = vmatprep.mubr.bf16.mxu0 0
      %3146 = vmatmul.mubr.bf16.gmra.mrb[0].mxu0 %v3081
      %v3147 = vpop.f32.mrb[0].mxu0
      %v3148 = vadd.f32 0.0, %v3147
      %v3149 = vpop.f32.mrb[0].mxu0
      %v3150 = vpop.f32.mrb[0].mxu0
      %v3151 = vadd.f32 0.0, %v3150
      %v3152 = vpop.f32.mrb[0].mxu0
      %3153 = vmatprep.mubr.bf16.mxu0 0
      %3154 = vmatmul.mubr.bf16.gmra.mrb[0].mxu0 %v3084
      %v3155 = vpop.f32.mrb[0].mxu0
      %v3156 = vadd.f32 0.0, %v3155
      %v3157 = vpop.f32.mrb[0].mxu0
      %v3158 = vpop.f32.mrb[0].mxu0
      %v3159 = vadd.f32 0.0, %v3158
      %v3160 = vpop.f32.mrb[0].mxu0
      %3161 = vmatprep.mubr.bf16.mxu0 0
      %3162 = vmatmul.mubr.bf16.gmra.mrb[0].mxu0 %v3087
      %v3163 = vpop.f32.mrb[0].mxu0
      %v3164 = vadd.f32 0.0, %v3163
      %v3165 = vpop.f32.mrb[0].mxu0
      %v3166 = vpop.f32.mrb[0].mxu0
      %v3167 = vadd.f32 0.0, %v3166
      %v3168 = vpop.f32.mrb[0].mxu0
      %3169 = vmatprep.mubr.bf16.mxu0 0
      %3170 = vmatmul.mubr.bf16.gmra.mrb[0].mxu0 %v3090
      %v3171 = vpop.f32.mrb[0].mxu0
      %v3172 = vadd.f32 0.0, %v3171
      %v3173 = vpop.f32.mrb[0].mxu0
      %v3174 = vpop.f32.mrb[0].mxu0
      %v3175 = vadd.f32 0.0, %v3174
      %v3176 = vpop.f32.mrb[0].mxu0
      %3177 = vmatprep.mubr.bf16.mxu0 0
      %3178 = vmatmul.mubr.bf16.gmra.mrb[0].mxu0 %v3093
      %v3179 = vpop.f32.mrb[0].mxu0
      %v3180 = vadd.f32 0.0, %v3179
      %v3181 = vpop.f32.mrb[0].mxu0
      %v3182 = vpop.f32.mrb[0].mxu0
      %v3183 = vadd.f32 0.0, %v3182
      %v3184 = vpop.f32.mrb[0].mxu0
      %3185 = vmatprep.mubr.bf16.mxu0 0
      %3186 = vmatmul.mubr.bf16.gmra.mrb[0].mxu0 %v3096
      %v3187 = vpop.f32.mrb[0].mxu0
      %v3188 = vadd.f32 0.0, %v3187
      %v3189 = vpop.f32.mrb[0].mxu0
      %v3190 = vpop.f32.mrb[0].mxu0
      %v3191 = vadd.f32 0.0, %v3190
      %v3192 = vpop.f32.mrb[0].mxu0
      %3193 = vmatprep.mubr.bf16.mxu0 0
      %3194 = vmatmul.mubr.bf16.gmra.mrb[0].mxu0 %v3099
      %v3195 = vpop.f32.mrb[0].mxu0
      %v3196 = vadd.f32 0.0, %v3195
      %v3197 = vpop.f32.mrb[0].mxu0
      %v3198 = vpop.f32.mrb[0].mxu0
      %v3199 = vadd.f32 0.0, %v3198
      %v3200 = vpop.f32.mrb[0].mxu0
      %3201 = vmatprep.mubr.bf16.mxu0 0
      %3202 = vmatmul.mubr.bf16.gmra.mrb[0].mxu0 %v3102
      %v3203 = vpop.f32.mrb[0].mxu0
      %v3204 = vadd.f32 0.0, %v3203
      %v3205 = vpop.f32.mrb[0].mxu0
      %v3206 = vpop.f32.mrb[0].mxu0
      %v3207 = vadd.f32 0.0, %v3206
      %v3208 = vpop.f32.mrb[0].mxu0
      %3209 = vmatprep.mubr.bf16.mxu0 0
      %3210 = vmatmul.mubr.bf16.gmra.mrb[0].mxu0 %v3105
      %v3211 = vpop.f32.mrb[0].mxu0
      %v3212 = vadd.f32 0.0, %v3211
      %v3213 = vpop.f32.mrb[0].mxu0
      %v3214 = vpop.f32.mrb[0].mxu0
      %v3215 = vadd.f32 0.0, %v3214
      %v3216 = vpop.f32.mrb[0].mxu0
      %3217 = vmatprep.mubr.bf16.mxu0 0
      %3218 = vmatmul.mubr.bf16.gmra.mrb[0].mxu0 %v3108
      %v3219 = vpop.f32.mrb[0].mxu0
      %v3220 = vadd.f32 0.0, %v3219
      %v3221 = vpop.f32.mrb[0].mxu0
      %v3222 = vpop.f32.mrb[0].mxu0
      %v3223 = vadd.f32 0.0, %v3222
      %v3224 = vpop.f32.mrb[0].mxu0
      %3225 = vdwg.mxu0
      %v3226 = vadd.f32 %v2918, %v3148
      %v3227 = vadd.f32 %v2919, %v3151
      %v3228 = vadd.f32 %v2920, %v3156
      %v3229 = vadd.f32 %v2921, %v3159
      %v3230 = vadd.f32 %v2922, %v3164
      %v3231 = vadd.f32 %v2923, %v3167
      %v3232 = vadd.f32 %v2924, %v3172
      %v3233 = vadd.f32 %v2925, %v3175
      %v3234 = vadd.f32 %v2926, %v3180
      %v3235 = vadd.f32 %v2927, %v3183
      %v3236 = vadd.f32 %v2928, %v3188
      %v3237 = vadd.f32 %v2929, %v3191
      %v3238 = vadd.f32 %v2930, %v3196
      %v3239 = vadd.f32 %v2931, %v3199
      %v3240 = vadd.f32 %v2932, %v3204
      %v3241 = vadd.f32 %v2933, %v3207
      %v3242 = vadd.f32 %v2934, %v3212
      %v3243 = vadd.f32 %v2935, %v3215
      %v3244 = vadd.f32 %v2936, %v3220
      %v3245 = vadd.f32 %v2937, %v3223
      %v3246 = vld [vmem:[%s2] sm:$0x1]
      %v3248 = vlaneseq
      %v3249 = vshrl.u32 %v3248, 7
      %v3250 = vsub.s32 0, %v3249
      %v3251 = vrot.slane %v3246, %v3250
      %v3253 = vadd.f32 %v3226, %v3251
      %v3254 = vadd.f32 %v3227, %v3251
      %v3255 = vadd.f32 %v3228, %v3251
      %v3256 = vadd.f32 %v3229, %v3251
      %v3257 = vadd.f32 %v3230, %v3251
      %v3258 = vadd.f32 %v3231, %v3251
      %v3259 = vadd.f32 %v3232, %v3251
      %v3260 = vadd.f32 %v3233, %v3251
      %v3261 = vadd.f32 %v3234, %v3251
      %v3262 = vadd.f32 %v3235, %v3251
      %v3263 = vadd.f32 %v3236, %v3251
      %v3264 = vadd.f32 %v3237, %v3251
      %v3265 = vadd.f32 %v3238, %v3251
      %v3266 = vadd.f32 %v3239, %v3251
      %v3267 = vadd.f32 %v3240, %v3251
      %v3268 = vadd.f32 %v3241, %v3251
      %v3269 = vadd.f32 %v3242, %v3251
      %v3270 = vadd.f32 %v3243, %v3251
      %v3271 = vadd.f32 %v3244, %v3251
      %v3272 = vadd.f32 %v3245, %v3251
      %v3273 = vmax.f32 %v3253, 0.0
      %v3274 = vmax.f32 %v3254, 0.0
      %v3275 = vmax.f32 %v3255, 0.0
      %v3276 = vmax.f32 %v3256, 0.0
      %v3277 = vmax.f32 %v3257, 0.0
      %v3278 = vmax.f32 %v3258, 0.0
      %v3279 = vmax.f32 %v3259, 0.0
      %v3280 = vmax.f32 %v3260, 0.0
      %v3281 = vmax.f32 %v3261, 0.0
      %v3282 = vmax.f32 %v3262, 0.0
      %v3283 = vmax.f32 %v3263, 0.0
      %v3284 = vmax.f32 %v3264, 0.0
      %v3285 = vmax.f32 %v3265, 0.0
      %v3286 = vmax.f32 %v3266, 0.0
      %v3287 = vmax.f32 %v3267, 0.0
      %v3288 = vmax.f32 %v3268, 0.0
      %v3289 = vmax.f32 %v3269, 0.0
      %v3290 = vmax.f32 %v3270, 0.0
      %v3291 = vmax.f32 %v3271, 0.0
      %v3292 = vmax.f32 %v3272, 0.0
      %v3293 = vpack.c.bf16 %v3274, %v3273
      %v3294 = vpack.c.bf16 %v3276, %v3275
      %v3295 = vpack.c.bf16 %v3278, %v3277
      %v3296 = vpack.c.bf16 %v3280, %v3279
      %v3297 = vpack.c.bf16 %v3282, %v3281
      %v3298 = vpack.c.bf16 %v3284, %v3283
      %v3299 = vpack.c.bf16 %v3286, %v3285
      %v3300 = vpack.c.bf16 %v3288, %v3287
      %v3301 = vpack.c.bf16 %v3290, %v3289
      %v3302 = vpack.c.bf16 %v3292, %v3291
      %v3313 = vunpack.c.l.b16 %v3293
      %v3314 = vunpack.c.h.b16 %v3293
      %v3315 = vunpack.c.l.b16 %v3294
      %v3316 = vunpack.c.h.b16 %v3294
      %v3317 = vunpack.c.l.b16 %v3295
      %v3318 = vunpack.c.h.b16 %v3295
      %v3319 = vunpack.c.l.b16 %v3296
      %v3320 = vunpack.c.h.b16 %v3296
      %v3321 = vunpack.c.l.b16 %v3297
      %v3322 = vunpack.c.h.b16 %v3297
      %v3323 = vunpack.c.l.b16 %v3298
      %v3324 = vunpack.c.h.b16 %v3298
      %v3325 = vunpack.c.l.b16 %v3299
      %v3326 = vunpack.c.h.b16 %v3299
      %v3327 = vunpack.c.l.b16 %v3300
      %v3328 = vunpack.c.h.b16 %v3300
      %v3329 = vunpack.c.l.b16 %v3301
      %v3330 = vunpack.c.h.b16 %v3301
      %v3331 = vunpack.c.l.b16 %v3302
      %v3332 = vunpack.c.h.b16 %v3302
      %v3333 = vpack.c.b16 %v3313, %v3313
      %v3334 = vpack.c.b16 %v3314, %v3314
      %v3335 = vpack.c.b16 %v3315, %v3315
      %v3336 = vpack.c.b16 %v3316, %v3316
      %v3337 = vpack.c.b16 %v3317, %v3317
      %v3338 = vpack.c.b16 %v3318, %v3318
      %v3339 = vpack.c.b16 %v3319, %v3319
      %v3340 = vpack.c.b16 %v3320, %v3320
      %v3341 = vpack.c.b16 %v3321, %v3321
      %v3342 = vpack.c.b16 %v3322, %v3322
      %v3343 = vpack.c.b16 %v3323, %v3323
      %v3344 = vpack.c.b16 %v3324, %v3324
      %v3345 = vpack.c.b16 %v3325, %v3325
      %v3346 = vpack.c.b16 %v3326, %v3326
      %v3347 = vpack.c.b16 %v3327, %v3327
      %v3348 = vpack.c.b16 %v3328, %v3328
      %v3349 = vpack.c.b16 %v3329, %v3329
      %v3350 = vpack.c.b16 %v3330, %v3330
      %v3351 = vpack.c.b16 %v3331, %v3331
      %v3352 = vpack.c.b16 %v3332, %v3332
      %vm3353 = vsmask.f32 256
      %vm3354 = vsmask.f32 4368
      %vm3355 = vmor %vm3353, %vm3354
      %v3357 = vshrl.u32 %v3333, 16
      %v3359 = vrot.slane %v3357, 7
      %v3360 = vshll.u32 %v3333, 16
      %v3362 = vor.u32 %v3359, %v3360
      %v3363 = vrot.slane %v3359, 4
      %v3365 = vshrl.u32 %v3334, 16
      %v3367 = vrot.slane %v3365, 7
      %v3368 = vshll.u32 %v3334, 16
      %v3370 = vor.u32 %v3367, %v3368
      %v3371 = vsel %vm3355, %v3363, %v3370
      %v3372 = vrot.slane %v3367, 4
      %v3374 = vshrl.u32 %v3335, 16
      %v3376 = vrot.slane %v3374, 7
      %v3377 = vshll.u32 %v3335, 16
      %v3379 = vor.u32 %v3376, %v3377
      %v3380 = vrot.slane %v3376, 4
      %v3382 = vshrl.u32 %v3336, 16
      %v3384 = vrot.slane %v3382, 7
      %v3385 = vshll.u32 %v3336, 16
      %v3387 = vor.u32 %v3384, %v3385
      %v3388 = vsel %vm3355, %v3380, %v3387
      %v3389 = vrot.slane %v3384, 4
      %v3391 = vshrl.u32 %v3337, 16
      %v3393 = vrot.slane %v3391, 7
      %v3394 = vshll.u32 %v3337, 16
      %v3396 = vor.u32 %v3393, %v3394
      %v3397 = vrot.slane %v3393, 4
      %v3399 = vshrl.u32 %v3338, 16
      %v3401 = vrot.slane %v3399, 7
      %v3402 = vshll.u32 %v3338, 16
      %v3404 = vor.u32 %v3401, %v3402
      %v3405 = vsel %vm3355, %v3397, %v3404
      %v3406 = vrot.slane %v3401, 4
      %v3408 = vshrl.u32 %v3339, 16
      %v3410 = vrot.slane %v3408, 7
      %v3411 = vshll.u32 %v3339, 16
      %v3413 = vor.u32 %v3410, %v3411
      %v3414 = vrot.slane %v3410, 4
      %v3416 = vshrl.u32 %v3340, 16
      %v3418 = vrot.slane %v3416, 7
      %v3419 = vshll.u32 %v3340, 16
      %v3421 = vor.u32 %v3418, %v3419
      %v3422 = vsel %vm3355, %v3414, %v3421
      %v3423 = vrot.slane %v3418, 4
      %v3425 = vshrl.u32 %v3341, 16
      %v3427 = vrot.slane %v3425, 7
      %v3428 = vshll.u32 %v3341, 16
      %v3430 = vor.u32 %v3427, %v3428
      %v3431 = vrot.slane %v3427, 4
      %v3433 = vshrl.u32 %v3342, 16
      %v3435 = vrot.slane %v3433, 7
      %v3436 = vshll.u32 %v3342, 16
      %v3438 = vor.u32 %v3435, %v3436
      %v3439 = vsel %vm3355, %v3431, %v3438
      %v3440 = vrot.slane %v3435, 4
      %v3442 = vshrl.u32 %v3343, 16
      %v3444 = vrot.slane %v3442, 7
      %v3445 = vshll.u32 %v3343, 16
      %v3447 = vor.u32 %v3444, %v3445
      %v3448 = vrot.slane %v3444, 4
      %v3450 = vshrl.u32 %v3344, 16
      %v3452 = vrot.slane %v3450, 7
      %v3453 = vshll.u32 %v3344, 16
      %v3455 = vor.u32 %v3452, %v3453
      %v3456 = vsel %vm3355, %v3448, %v3455
      %v3457 = vrot.slane %v3452, 4
      %v3459 = vshrl.u32 %v3345, 16
      %v3461 = vrot.slane %v3459, 7
      %v3462 = vshll.u32 %v3345, 16
      %v3464 = vor.u32 %v3461, %v3462
      %v3465 = vrot.slane %v3461, 4
      %v3467 = vshrl.u32 %v3346, 16
      %v3469 = vrot.slane %v3467, 7
      %v3470 = vshll.u32 %v3346, 16
      %v3472 = vor.u32 %v3469, %v3470
      %v3473 = vsel %vm3355, %v3465, %v3472
      %v3474 = vrot.slane %v3469, 4
      %v3476 = vshrl.u32 %v3347, 16
      %v3478 = vrot.slane %v3476, 7
      %v3479 = vshll.u32 %v3347, 16
      %v3481 = vor.u32 %v3478, %v3479
      %v3482 = vrot.slane %v3478, 4
      %v3484 = vshrl.u32 %v3348, 16
      %v3486 = vrot.slane %v3484, 7
      %v3487 = vshll.u32 %v3348, 16
      %v3489 = vor.u32 %v3486, %v3487
      %v3490 = vsel %vm3355, %v3482, %v3489
      %v3491 = vrot.slane %v3486, 4
      %v3493 = vshrl.u32 %v3349, 16
      %v3495 = vrot.slane %v3493, 7
      %v3496 = vshll.u32 %v3349, 16
      %v3498 = vor.u32 %v3495, %v3496
      %v3499 = vrot.slane %v3495, 4
      %v3501 = vshrl.u32 %v3350, 16
      %v3503 = vrot.slane %v3501, 7
      %v3504 = vshll.u32 %v3350, 16
      %v3506 = vor.u32 %v3503, %v3504
      %v3507 = vsel %vm3355, %v3499, %v3506
      %v3508 = vrot.slane %v3503, 4
      %v3510 = vshrl.u32 %v3351, 16
      %v3512 = vrot.slane %v3510, 7
      %v3513 = vshll.u32 %v3351, 16
      %v3515 = vor.u32 %v3512, %v3513
      %v3516 = vrot.slane %v3512, 4
      %v3518 = vshrl.u32 %v3352, 16
      %v3520 = vrot.slane %v3518, 7
      %v3521 = vshll.u32 %v3352, 16
      %v3523 = vor.u32 %v3520, %v3521
      %v3524 = vsel %vm3355, %v3516, %v3523
      %v3525 = vrot.slane %v3520, 4
      %vm3556 = vcmask 1043456
      %vm3557 = vsmask.f32 7938
      %vm3558 = vmand %vm3556, %vm3557
      %v3559 = vld [vmem:[#allocation2] sm:$0xf]
      %v3560 = vsel %vm3558, %v3362, %v3559
      %3561 = vst [vmem:[#allocation2] sm:$0xf] %v3560
      %3562 = vst [vmem:[#allocation2 + $0x4] sm:$0xf] %v3371
      %vm3563 = vcmask 1040384
      %vm3564 = vmand %vm3563, %vm3353
      %v3565 = vld [vmem:[#allocation2 + $0x8] sm:$0x1]
      %v3566 = vsel %vm3564, %v3372, %v3565
      %3567 = vst [vmem:[#allocation2 + $0x8] sm:$0x1] %v3566
      %v3568 = vld [vmem:[#allocation2 + $0xc] sm:$0xf]
      %v3569 = vsel %vm3558, %v3379, %v3568
      %3570 = vst [vmem:[#allocation2 + $0xc] sm:$0xf] %v3569
      %3571 = vst [vmem:[#allocation2 + $0x10] sm:$0xf] %v3388
      %v3572 = vld [vmem:[#allocation2 + $0x14] sm:$0x1]
      %v3573 = vsel %vm3564, %v3389, %v3572
      %3574 = vst [vmem:[#allocation2 + $0x14] sm:$0x1] %v3573
      %v3575 = vld [vmem:[#allocation2 + $0x18] sm:$0xf]
      %v3576 = vsel %vm3558, %v3396, %v3575
      %3577 = vst [vmem:[#allocation2 + $0x18] sm:$0xf] %v3576
      %3578 = vst [vmem:[#allocation2 + $0x1c] sm:$0xf] %v3405
      %v3579 = vld [vmem:[#allocation2 + $0x20] sm:$0x1]
      %v3580 = vsel %vm3564, %v3406, %v3579
      %3581 = vst [vmem:[#allocation2 + $0x20] sm:$0x1] %v3580
      %v3582 = vld [vmem:[#allocation2 + $0x24] sm:$0xf]
      %v3583 = vsel %vm3558, %v3413, %v3582
      %3584 = vst [vmem:[#allocation2 + $0x24] sm:$0xf] %v3583
      %3585 = vst [vmem:[#allocation2 + $0x28] sm:$0xf] %v3422
      %v3586 = vld [vmem:[#allocation2 + $0x2c] sm:$0x1]
      %v3587 = vsel %vm3564, %v3423, %v3586
      %3588 = vst [vmem:[#allocation2 + $0x2c] sm:$0x1] %v3587
      %v3589 = vld [vmem:[#allocation2 + $0x30] sm:$0xf]
      %v3590 = vsel %vm3558, %v3430, %v3589
      %3591 = vst [vmem:[#allocation2 + $0x30] sm:$0xf] %v3590
      %3592 = vst [vmem:[#allocation2 + $0x34] sm:$0xf] %v3439
      %v3593 = vld [vmem:[#allocation2 + $0x38] sm:$0x1]
      %v3594 = vsel %vm3564, %v3440, %v3593
      %3595 = vst [vmem:[#allocation2 + $0x38] sm:$0x1] %v3594
      %v3596 = vld [vmem:[#allocation2 + $0x3c] sm:$0xf]
      %v3597 = vsel %vm3558, %v3447, %v3596
      %3598 = vst [vmem:[#allocation2 + $0x3c] sm:$0xf] %v3597
      %3599 = vst [vmem:[#allocation2 + $0x40] sm:$0xf] %v3456
      %v3600 = vld [vmem:[#allocation2 + $0x44] sm:$0x1]
      %v3601 = vsel %vm3564, %v3457, %v3600
      %3602 = vst [vmem:[#allocation2 + $0x44] sm:$0x1] %v3601
      %v3603 = vld [vmem:[#allocation2 + $0x48] sm:$0xf]
      %v3604 = vsel %vm3558, %v3464, %v3603
      %3605 = vst [vmem:[#allocation2 + $0x48] sm:$0xf] %v3604
      %3606 = vst [vmem:[#allocation2 + $0x4c] sm:$0xf] %v3473
      %v3607 = vld [vmem:[#allocation2 + $0x50] sm:$0x1]
      %v3608 = vsel %vm3564, %v3474, %v3607
      %3609 = vst [vmem:[#allocation2 + $0x50] sm:$0x1] %v3608
      %v3610 = vld [vmem:[#allocation2 + $0x54] sm:$0xf]
      %v3611 = vsel %vm3558, %v3481, %v3610
      %3612 = vst [vmem:[#allocation2 + $0x54] sm:$0xf] %v3611
      %3613 = vst [vmem:[#allocation2 + $0x58] sm:$0xf] %v3490
      %v3614 = vld [vmem:[#allocation2 + $0x5c] sm:$0x1]
      %v3615 = vsel %vm3564, %v3491, %v3614
      %3616 = vst [vmem:[#allocation2 + $0x5c] sm:$0x1] %v3615
      %v3617 = vld [vmem:[#allocation2 + $0x60] sm:$0xf]
      %v3618 = vsel %vm3558, %v3498, %v3617
      %3619 = vst [vmem:[#allocation2 + $0x60] sm:$0xf] %v3618
      %3620 = vst [vmem:[#allocation2 + $0x64] sm:$0xf] %v3507
      %v3621 = vld [vmem:[#allocation2 + $0x68] sm:$0x1]
      %v3622 = vsel %vm3564, %v3508, %v3621
      %3623 = vst [vmem:[#allocation2 + $0x68] sm:$0x1] %v3622
      %v3624 = vld [vmem:[#allocation2 + $0x6c] sm:$0xf]
      %v3625 = vsel %vm3558, %v3515, %v3624
      %3626 = vst [vmem:[#allocation2 + $0x6c] sm:$0xf] %v3625
      %3627 = vst [vmem:[#allocation2 + $0x70] sm:$0xf] %v3524
      %v3628 = vld [vmem:[#allocation2 + $0x74] sm:$0x1]
      %v3629 = vsel %vm3564, %v3525, %v3628
      %3630 = vst [vmem:[#allocation2 + $0x74] sm:$0x1] %v3629
      %v3631 = vld [vmem:[#allocation2] sm:$0x1]
      %v3632 = vsel %vm3564, 0, %v3631
      %3633 = vst [vmem:[#allocation2] sm:$0x1] %v3632
      %v3634 = vld [vmem:[#allocation2 + $0xc] sm:$0x1]
      %v3635 = vsel %vm3564, 0, %v3634
      %3636 = vst [vmem:[#allocation2 + $0xc] sm:$0x1] %v3635
      %v3637 = vld [vmem:[#allocation2 + $0x18] sm:$0x1]
      %v3638 = vsel %vm3564, 0, %v3637
      %3639 = vst [vmem:[#allocation2 + $0x18] sm:$0x1] %v3638
      %v3640 = vld [vmem:[#allocation2 + $0x24] sm:$0x1]
      %v3641 = vsel %vm3564, 0, %v3640
      %3642 = vst [vmem:[#allocation2 + $0x24] sm:$0x1] %v3641
      %v3643 = vld [vmem:[#allocation2 + $0x30] sm:$0x1]
      %v3644 = vsel %vm3564, 0, %v3643
      %3645 = vst [vmem:[#allocation2 + $0x30] sm:$0x1] %v3644
      %v3646 = vld [vmem:[#allocation2 + $0x3c] sm:$0x1]
      %v3647 = vsel %vm3564, 0, %v3646
      %3648 = vst [vmem:[#allocation2 + $0x3c] sm:$0x1] %v3647
      %v3649 = vld [vmem:[#allocation2 + $0x48] sm:$0x1]
      %v3650 = vsel %vm3564, 0, %v3649
      %3651 = vst [vmem:[#allocation2 + $0x48] sm:$0x1] %v3650
      %v3652 = vld [vmem:[#allocation2 + $0x54] sm:$0x1]
      %v3653 = vsel %vm3564, 0, %v3652
      %3654 = vst [vmem:[#allocation2 + $0x54] sm:$0x1] %v3653
      %v3655 = vld [vmem:[#allocation2 + $0x60] sm:$0x1]
      %v3656 = vsel %vm3564, 0, %v3655
      %3657 = vst [vmem:[#allocation2 + $0x60] sm:$0x1] %v3656
      %v3658 = vld [vmem:[#allocation2 + $0x6c] sm:$0x1]
      %v3659 = vsel %vm3564, 0, %v3658
      %3660 = vst [vmem:[#allocation2 + $0x6c] sm:$0x1] %v3659
      %vm3661 = vmand %vm3563, %vm3557
      %v3662 = vld [vmem:[#allocation2 + $0x8] sm:$0x1]
      %v3663 = vsel %vm3661, 0, %v3662
      %3664 = vst [vmem:[#allocation2 + $0x8] sm:$0x1] %v3663
      %v3665 = vld [vmem:[#allocation2 + $0x14] sm:$0x1]
      %v3666 = vsel %vm3661, 0, %v3665
      %3667 = vst [vmem:[#allocation2 + $0x14] sm:$0x1] %v3666
      %v3668 = vld [vmem:[#allocation2 + $0x20] sm:$0x1]
      %v3669 = vsel %vm3661, 0, %v3668
      %3670 = vst [vmem:[#allocation2 + $0x20] sm:$0x1] %v3669
      %v3671 = vld [vmem:[#allocation2 + $0x2c] sm:$0x1]
      %v3672 = vsel %vm3661, 0, %v3671
      %3673 = vst [vmem:[#allocation2 + $0x2c] sm:$0x1] %v3672
      %v3674 = vld [vmem:[#allocation2 + $0x38] sm:$0x1]
      %v3675 = vsel %vm3661, 0, %v3674
      %3676 = vst [vmem:[#allocation2 + $0x38] sm:$0x1] %v3675
      %v3677 = vld [vmem:[#allocation2 + $0x44] sm:$0x1]
      %v3678 = vsel %vm3661, 0, %v3677
      %3679 = vst [vmem:[#allocation2 + $0x44] sm:$0x1] %v3678
      %v3680 = vld [vmem:[#allocation2 + $0x50] sm:$0x1]
      %v3681 = vsel %vm3661, 0, %v3680
      %3682 = vst [vmem:[#allocation2 + $0x50] sm:$0x1] %v3681
      %v3683 = vld [vmem:[#allocation2 + $0x5c] sm:$0x1]
      %v3684 = vsel %vm3661, 0, %v3683
      %3685 = vst [vmem:[#allocation2 + $0x5c] sm:$0x1] %v3684
      %v3686 = vld [vmem:[#allocation2 + $0x68] sm:$0x1]
      %v3687 = vsel %vm3661, 0, %v3686
      %3688 = vst [vmem:[#allocation2 + $0x68] sm:$0x1] %v3687
      %v3689 = vld [vmem:[#allocation2 + $0x74] sm:$0x1]
      %v3690 = vsel %vm3661, 0, %v3689
      %3691 = vst [vmem:[#allocation2 + $0x74] sm:$0x1] %v3690
      %p3692 = scmp.eq.s32.totalorder %s21, 0
      // Predicated region
      $region41: #{double_conv.1} parent=39 // pred_check
        %p3693 = pneg %p3692
      $region42: #{double_conv.1} parent=39 // pred_check_branch
        %3695 = sbr.rel (%p3693) target = $region44
      $region43: #{double_conv.1} parent=39 // pred_region
        %3696 = vst [vmem:[#allocation2] sm:$0xf] 0
        %3697 = vst [vmem:[#allocation2 + $0x4] sm:$0xf] 0
        %3698 = vst [vmem:[#allocation2 + $0x8] sm:$0x1] 0
      $region44: #{double_conv.1} parent=39 // pred_fallthru
        _
      %p3699 = scmp.eq.s32.totalorder %s21, 1
      // Predicated region
      $region45: #{double_conv.1} parent=39 // pred_check
        %p3700 = pneg %p3699
      $region46: #{double_conv.1} parent=39 // pred_check_branch
        %3702 = sbr.rel (%p3700) target = $region48
      $region47: #{double_conv.1} parent=39 // pred_region
        %s3703 = scalar_lea.vmem [#allocation2], 108
        %3704 = vst [vmem:[%s3703] sm:$0xf] 0
        %3705 = vst [vmem:[%s3703 + $0x4] sm:$0xf] 0
        %3706 = vst [vmem:[%s3703 + $0x8] sm:$0x1] 0
      $region48: #{double_conv.1} parent=39 // pred_fallthru
        _
      %v3707 = vld [vmem:[#allocation2] sm:$0xf]
      %v3708 = vld [vmem:[#allocation2 + $0x4] sm:$0xf]
      %v3709 = vld [vmem:[#allocation2 + $0xc] sm:$0xf]
      %v3710 = vld [vmem:[#allocation2 + $0x10] sm:$0xf]
      %v3711 = vld [vmem:[#allocation2 + $0x18] sm:$0xf]
      %v3712 = vld [vmem:[#allocation2 + $0x1c] sm:$0xf]
      %v3713 = vld [vmem:[#allocation2 + $0x24] sm:$0xf]
      %v3714 = vld [vmem:[#allocation2 + $0x28] sm:$0xf]
      %v3715 = vld [vmem:[#allocation2 + $0x30] sm:$0xf]
      %v3716 = vld [vmem:[#allocation2 + $0x34] sm:$0xf]
      %v3717 = vld [vmem:[#allocation2 + $0x3c] sm:$0xf]
      %v3718 = vld [vmem:[#allocation2 + $0x40] sm:$0xf]
      %v3719 = vld [vmem:[#allocation2 + $0x48] sm:$0xf]
      %v3720 = vld [vmem:[#allocation2 + $0x4c] sm:$0xf]
      %v3721 = vld [vmem:[#allocation2 + $0x54] sm:$0xf]
      %v3722 = vld [vmem:[#allocation2 + $0x58] sm:$0xf]
      %v3723 = vld [vmem:[%s3] sm:$0xf]
      %v3724 = vld [vmem:[%s3 + $0x4] sm:$0xf]
      %v3725 = vld [vmem:[%s3 + $0x8] sm:$0xf]
      %v3726 = vld [vmem:[%s3 + $0xc] sm:$0xf]
      %v3727 = vld [vmem:[%s3 + $0x10] sm:$0xf]
      %v3728 = vld [vmem:[%s3 + $0x14] sm:$0xf]
      %v3729 = vld [vmem:[%s3 + $0x18] sm:$0xf]
      %v3730 = vld [vmem:[%s3 + $0x1c] sm:$0xf]
      %v3731 = vld [vmem:[%s3 + $0x20] sm:$0xf]
      %v3732 = vld [vmem:[%s3 + $0x24] sm:$0xf]
      %v3733 = vld [vmem:[%s3 + $0x28] sm:$0xf]
      %v3734 = vld [vmem:[%s3 + $0x2c] sm:$0xf]
      %v3735 = vld [vmem:[%s3 + $0x30] sm:$0xf]
      %v3736 = vld [vmem:[%s3 + $0x34] sm:$0xf]
      %v3737 = vld [vmem:[%s3 + $0x38] sm:$0xf]
      %v3738 = vld [vmem:[%s3 + $0x3c] sm:$0xf]
      %v3739 = vld [vmem:[#allocation2 + $0x8] sm:$0x1]
      %v3740 = vld [vmem:[#allocation2 + $0x14] sm:$0x1]
      %v3741 = vld [vmem:[#allocation2 + $0x20] sm:$0x1]
      %v3742 = vld [vmem:[#allocation2 + $0x2c] sm:$0x1]
      %v3743 = vld [vmem:[#allocation2 + $0x38] sm:$0x1]
      %v3744 = vld [vmem:[#allocation2 + $0x44] sm:$0x1]
      %v3745 = vld [vmem:[#allocation2 + $0x50] sm:$0x1]
      %v3746 = vld [vmem:[#allocation2 + $0x5c] sm:$0x1]
      %v3748 = vshrl.u32 %v3707, 16
      %v3750 = vrot.slane %v3748, 4
      %v3751 = vshll.u32 %v3707, 16
      %v3753 = vrot.slane %v3751, 5
      %v3754 = vor.u32 %v3750, %v3753
      %v3755 = vrot.slane %v3754, 4
      %v3757 = vshll.u32 %v3708, 16
      %v3759 = vrot.slane %v3757, 5
      %v3760 = vsel %vm298, %v3755, %v3759
      %v3761 = vshrl.u32 %v3708, 16
      %v3763 = vrot.slane %v3761, 4
      %v3764 = vor.u32 %v3763, %v3759
      %v3765 = vrot.slane %v3764, 4
      %v3767 = vshll.u32 %v3739, 16
      %v3769 = vrot.slane %v3767, 5
      %v3770 = vsel %vm298, %v3765, %v3769
      %v3772 = vshrl.u32 %v3709, 16
      %v3774 = vrot.slane %v3772, 4
      %v3775 = vshll.u32 %v3709, 16
      %v3777 = vrot.slane %v3775, 5
      %v3778 = vor.u32 %v3774, %v3777
      %v3779 = vrot.slane %v3778, 4
      %v3781 = vshll.u32 %v3710, 16
      %v3783 = vrot.slane %v3781, 5
      %v3784 = vsel %vm298, %v3779, %v3783
      %v3785 = vshrl.u32 %v3710, 16
      %v3787 = vrot.slane %v3785, 4
      %v3788 = vor.u32 %v3787, %v3783
      %v3789 = vrot.slane %v3788, 4
      %v3791 = vshll.u32 %v3740, 16
      %v3793 = vrot.slane %v3791, 5
      %v3794 = vsel %vm298, %v3789, %v3793
      %v3796 = vshrl.u32 %v3711, 16
      %v3798 = vrot.slane %v3796, 4
      %v3799 = vshll.u32 %v3711, 16
      %v3801 = vrot.slane %v3799, 5
      %v3802 = vor.u32 %v3798, %v3801
      %v3803 = vrot.slane %v3802, 4
      %v3805 = vshll.u32 %v3712, 16
      %v3807 = vrot.slane %v3805, 5
      %v3808 = vsel %vm298, %v3803, %v3807
      %v3809 = vshrl.u32 %v3712, 16
      %v3811 = vrot.slane %v3809, 4
      %v3812 = vor.u32 %v3811, %v3807
      %v3813 = vrot.slane %v3812, 4
      %v3815 = vshll.u32 %v3741, 16
      %v3817 = vrot.slane %v3815, 5
      %v3818 = vsel %vm298, %v3813, %v3817
      %v3820 = vshrl.u32 %v3713, 16
      %v3822 = vrot.slane %v3820, 4
      %v3823 = vshll.u32 %v3713, 16
      %v3825 = vrot.slane %v3823, 5
      %v3826 = vor.u32 %v3822, %v3825
      %v3827 = vrot.slane %v3826, 4
      %v3829 = vshll.u32 %v3714, 16
      %v3831 = vrot.slane %v3829, 5
      %v3832 = vsel %vm298, %v3827, %v3831
      %v3833 = vshrl.u32 %v3714, 16
      %v3835 = vrot.slane %v3833, 4
      %v3836 = vor.u32 %v3835, %v3831
      %v3837 = vrot.slane %v3836, 4
      %v3839 = vshll.u32 %v3742, 16
      %v3841 = vrot.slane %v3839, 5
      %v3842 = vsel %vm298, %v3837, %v3841
      %v3844 = vshrl.u32 %v3715, 16
      %v3846 = vrot.slane %v3844, 4
      %v3847 = vshll.u32 %v3715, 16
      %v3849 = vrot.slane %v3847, 5
      %v3850 = vor.u32 %v3846, %v3849
      %v3851 = vrot.slane %v3850, 4
      %v3853 = vshll.u32 %v3716, 16
      %v3855 = vrot.slane %v3853, 5
      %v3856 = vsel %vm298, %v3851, %v3855
      %v3857 = vshrl.u32 %v3716, 16
      %v3859 = vrot.slane %v3857, 4
      %v3860 = vor.u32 %v3859, %v3855
      %v3861 = vrot.slane %v3860, 4
      %v3863 = vshll.u32 %v3743, 16
      %v3865 = vrot.slane %v3863, 5
      %v3866 = vsel %vm298, %v3861, %v3865
      %v3868 = vshrl.u32 %v3717, 16
      %v3870 = vrot.slane %v3868, 4
      %v3871 = vshll.u32 %v3717, 16
      %v3873 = vrot.slane %v3871, 5
      %v3874 = vor.u32 %v3870, %v3873
      %v3875 = vrot.slane %v3874, 4
      %v3877 = vshll.u32 %v3718, 16
      %v3879 = vrot.slane %v3877, 5
      %v3880 = vsel %vm298, %v3875, %v3879
      %v3881 = vshrl.u32 %v3718, 16
      %v3883 = vrot.slane %v3881, 4
      %v3884 = vor.u32 %v3883, %v3879
      %v3885 = vrot.slane %v3884, 4
      %v3887 = vshll.u32 %v3744, 16
      %v3889 = vrot.slane %v3887, 5
      %v3890 = vsel %vm298, %v3885, %v3889
      %v3892 = vshrl.u32 %v3719, 16
      %v3894 = vrot.slane %v3892, 4
      %v3895 = vshll.u32 %v3719, 16
      %v3897 = vrot.slane %v3895, 5
      %v3898 = vor.u32 %v3894, %v3897
      %v3899 = vrot.slane %v3898, 4
      %v3901 = vshll.u32 %v3720, 16
      %v3903 = vrot.slane %v3901, 5
      %v3904 = vsel %vm298, %v3899, %v3903
      %v3905 = vshrl.u32 %v3720, 16
      %v3907 = vrot.slane %v3905, 4
      %v3908 = vor.u32 %v3907, %v3903
      %v3909 = vrot.slane %v3908, 4
      %v3911 = vshll.u32 %v3745, 16
      %v3913 = vrot.slane %v3911, 5
      %v3914 = vsel %vm298, %v3909, %v3913
      %v3916 = vshrl.u32 %v3721, 16
      %v3918 = vrot.slane %v3916, 4
      %v3919 = vshll.u32 %v3721, 16
      %v3921 = vrot.slane %v3919, 5
      %v3922 = vor.u32 %v3918, %v3921
      %v3923 = vrot.slane %v3922, 4
      %v3925 = vshll.u32 %v3722, 16
      %v3927 = vrot.slane %v3925, 5
      %v3928 = vsel %vm298, %v3923, %v3927
      %v3929 = vshrl.u32 %v3722, 16
      %v3931 = vrot.slane %v3929, 4
      %v3932 = vor.u32 %v3931, %v3927
      %v3933 = vrot.slane %v3932, 4
      %v3935 = vshll.u32 %v3746, 16
      %v3937 = vrot.slane %v3935, 5
      %v3938 = vsel %vm298, %v3933, %v3937
      %s3939 = scalar_lea.vmem %s3, 64
      %v3940 = vld [vmem:[%s3939] sm:$0xf]
      %v3941 = vld [vmem:[%s3939 + $0x4] sm:$0xf]
      %v3942 = vld [vmem:[%s3939 + $0x8] sm:$0xf]
      %v3943 = vld [vmem:[%s3939 + $0xc] sm:$0xf]
      %v3944 = vld [vmem:[%s3939 + $0x10] sm:$0xf]
      %v3945 = vld [vmem:[%s3939 + $0x14] sm:$0xf]
      %v3946 = vld [vmem:[%s3939 + $0x18] sm:$0xf]
      %v3947 = vld [vmem:[%s3939 + $0x1c] sm:$0xf]
      %v3948 = vld [vmem:[%s3939 + $0x20] sm:$0xf]
      %v3949 = vld [vmem:[%s3939 + $0x24] sm:$0xf]
      %v3950 = vld [vmem:[%s3939 + $0x28] sm:$0xf]
      %v3951 = vld [vmem:[%s3939 + $0x2c] sm:$0xf]
      %v3952 = vld [vmem:[%s3939 + $0x30] sm:$0xf]
      %v3953 = vld [vmem:[%s3939 + $0x34] sm:$0xf]
      %v3954 = vld [vmem:[%s3939 + $0x38] sm:$0xf]
      %v3955 = vld [vmem:[%s3939 + $0x3c] sm:$0xf]
      %v3956 = vunpack.c.l.b16 %v3760
      %v3957 = vunpack.c.l.b16 %v3770
      %v3958 = vunpack.c.l.b16 %v3784
      %v3959 = vunpack.c.l.b16 %v3794
      %v3960 = vunpack.c.l.b16 %v3808
      %v3961 = vunpack.c.l.b16 %v3818
      %v3962 = vunpack.c.l.b16 %v3832
      %v3963 = vunpack.c.l.b16 %v3842
      %v3964 = vunpack.c.l.b16 %v3856
      %v3965 = vunpack.c.l.b16 %v3866
      %v3966 = vunpack.c.l.b16 %v3880
      %v3967 = vunpack.c.l.b16 %v3890
      %v3968 = vunpack.c.l.b16 %v3904
      %v3969 = vunpack.c.l.b16 %v3914
      %v3970 = vunpack.c.l.b16 %v3928
      %v3971 = vunpack.c.l.b16 %v3938
      %v3972 = vpack.c.b16 %v3957, %v3956
      %v3973 = vpack.c.b16 %v3959, %v3958
      %v3974 = vpack.c.b16 %v3961, %v3960
      %v3975 = vpack.c.b16 %v3963, %v3962
      %v3976 = vpack.c.b16 %v3965, %v3964
      %v3977 = vpack.c.b16 %v3967, %v3966
      %v3978 = vpack.c.b16 %v3969, %v3968
      %v3979 = vpack.c.b16 %v3971, %v3970
      %v4004 = vunpack.c.l.b16 %v3940
      %v4005 = vunpack.c.l.b16 %v3941
      %v4006 = vunpack.c.l.b16 %v3942
      %v4007 = vunpack.c.l.b16 %v3943
      %v4008 = vunpack.c.l.b16 %v3944
      %v4009 = vunpack.c.l.b16 %v3945
      %v4010 = vunpack.c.l.b16 %v3946
      %v4011 = vunpack.c.l.b16 %v3947
      %v4012 = vunpack.c.l.b16 %v3948
      %v4013 = vunpack.c.l.b16 %v3949
      %v4014 = vunpack.c.l.b16 %v3950
      %v4015 = vunpack.c.l.b16 %v3951
      %v4016 = vunpack.c.l.b16 %v3952
      %v4017 = vunpack.c.l.b16 %v3953
      %v4018 = vunpack.c.l.b16 %v3954
      %v4019 = vunpack.c.l.b16 %v3955
      %v4020 = vpack.c.b16 %v4005, %v4004
      %v4021 = vpack.c.b16 %v4007, %v4006
      %v4022 = vpack.c.b16 %v4009, %v4008
      %v4023 = vpack.c.b16 %v4011, %v4010
      %v4024 = vpack.c.b16 %v4013, %v4012
      %v4025 = vpack.c.b16 %v4015, %v4014
      %v4026 = vpack.c.b16 %v4017, %v4016
      %v4027 = vpack.c.b16 %v4019, %v4018
      %4036 = vmatprep.subr.bf16.mxu0 0
      %4037 = vmatpush1.bf16.msra.mxu0 %v4020
      %4038 = vmatprep.subr.bf16.mxu0 0
      %4039 = vmatpush1.bf16.msra.mxu0 %v4021
      %4040 = vmatprep.subr.bf16.mxu0 0
      %4041 = vmatpush1.bf16.msra.mxu0 %v4022
      %4042 = vmatprep.subr.bf16.mxu0 0
      %4043 = vmatpush1.bf16.msra.mxu0 %v4023
      %4044 = vmatprep.subr.bf16.mxu0 0
      %4045 = vmatpush1.bf16.msra.mxu0 %v4024
      %4046 = vmatprep.subr.bf16.mxu0 0
      %4047 = vmatpush1.bf16.msra.mxu0 %v4025
      %4048 = vmatprep.subr.bf16.mxu0 0
      %4049 = vmatpush1.bf16.msra.mxu0 %v4026
      %4050 = vmatprep.subr.bf16.mxu0 0
      %4051 = vmatpush1.bf16.msra.mxu0 %v4027
      %4052 = vmatprep.subr.bf16.mxu0 0
      %4053 = vmatpush1.bf16.msra.mxu0 0
      %4054 = vmatprep.subr.bf16.mxu0 0
      %4055 = vmatpush1.bf16.msra.mxu0 0
      %4056 = vmatprep.subr.bf16.mxu0 0
      %4057 = vmatpush1.bf16.msra.mxu0 0
      %4058 = vmatprep.subr.bf16.mxu0 0
      %4059 = vmatpush1.bf16.msra.mxu0 0
      %4060 = vmatprep.subr.bf16.mxu0 0
      %4061 = vmatpush1.bf16.msra.mxu0 0
      %4062 = vmatprep.subr.bf16.mxu0 0
      %4063 = vmatpush1.bf16.msra.mxu0 0
      %4064 = vmatprep.subr.bf16.mxu0 0
      %4065 = vmatpush1.bf16.msra.mxu0 0
      %4066 = vmatprep.subr.bf16.mxu0 0
      %4067 = vmatpush1.bf16.msra.mxu0 0
      %4068 = vmatprep.mubr.bf16.mxu0 0
      %4069 = vmatmul.mubr.bf16.gmra.mrb[0].mxu0 %v3972
      %v4070 = vpop.f32.mrb[0].mxu0
      %v4071 = vadd.f32 0.0, %v4070
      %v4072 = vpop.f32.mrb[0].mxu0
      %v4073 = vpop.f32.mrb[0].mxu0
      %v4074 = vadd.f32 0.0, %v4073
      %v4075 = vpop.f32.mrb[0].mxu0
      %4076 = vmatprep.mubr.bf16.mxu0 0
      %4077 = vmatmul.mubr.bf16.gmra.mrb[0].mxu0 %v3973
      %v4078 = vpop.f32.mrb[0].mxu0
      %v4079 = vadd.f32 0.0, %v4078
      %v4080 = vpop.f32.mrb[0].mxu0
      %v4081 = vpop.f32.mrb[0].mxu0
      %v4082 = vadd.f32 0.0, %v4081
      %v4083 = vpop.f32.mrb[0].mxu0
      %4084 = vmatprep.mubr.bf16.mxu0 0
      %4085 = vmatmul.mubr.bf16.gmra.mrb[0].mxu0 %v3974
      %v4086 = vpop.f32.mrb[0].mxu0
      %v4087 = vadd.f32 0.0, %v4086
      %v4088 = vpop.f32.mrb[0].mxu0
      %v4089 = vpop.f32.mrb[0].mxu0
      %v4090 = vadd.f32 0.0, %v4089
      %v4091 = vpop.f32.mrb[0].mxu0
      %4092 = vmatprep.mubr.bf16.mxu0 0
      %4093 = vmatmul.mubr.bf16.gmra.mrb[0].mxu0 %v3975
      %v4094 = vpop.f32.mrb[0].mxu0
      %v4095 = vadd.f32 0.0, %v4094
      %v4096 = vpop.f32.mrb[0].mxu0
      %v4097 = vpop.f32.mrb[0].mxu0
      %v4098 = vadd.f32 0.0, %v4097
      %v4099 = vpop.f32.mrb[0].mxu0
      %4100 = vmatprep.mubr.bf16.mxu0 0
      %4101 = vmatmul.mubr.bf16.gmra.mrb[0].mxu0 %v3976
      %v4102 = vpop.f32.mrb[0].mxu0
      %v4103 = vadd.f32 0.0, %v4102
      %v4104 = vpop.f32.mrb[0].mxu0
      %v4105 = vpop.f32.mrb[0].mxu0
      %v4106 = vadd.f32 0.0, %v4105
      %v4107 = vpop.f32.mrb[0].mxu0
      %4108 = vmatprep.mubr.bf16.mxu0 0
      %4109 = vmatmul.mubr.bf16.gmra.mrb[0].mxu0 %v3977
      %v4110 = vpop.f32.mrb[0].mxu0
      %v4111 = vadd.f32 0.0, %v4110
      %v4112 = vpop.f32.mrb[0].mxu0
      %v4113 = vpop.f32.mrb[0].mxu0
      %v4114 = vadd.f32 0.0, %v4113
      %v4115 = vpop.f32.mrb[0].mxu0
      %4116 = vmatprep.mubr.bf16.mxu0 0
      %4117 = vmatmul.mubr.bf16.gmra.mrb[0].mxu0 %v3978
      %v4118 = vpop.f32.mrb[0].mxu0
      %v4119 = vadd.f32 0.0, %v4118
      %v4120 = vpop.f32.mrb[0].mxu0
      %v4121 = vpop.f32.mrb[0].mxu0
      %v4122 = vadd.f32 0.0, %v4121
      %v4123 = vpop.f32.mrb[0].mxu0
      %4124 = vmatprep.mubr.bf16.mxu0 0
      %4125 = vmatmul.mubr.bf16.gmra.mrb[0].mxu0 %v3979
      %v4126 = vpop.f32.mrb[0].mxu0
      %v4127 = vadd.f32 0.0, %v4126
      %v4128 = vpop.f32.mrb[0].mxu0
      %v4129 = vpop.f32.mrb[0].mxu0
      %v4130 = vadd.f32 0.0, %v4129
      %v4131 = vpop.f32.mrb[0].mxu0
      %4132 = vdwg.mxu0
      %v4149 = vunpack.c.l.b16 %v3707
      %v4150 = vunpack.c.l.b16 %v3708
      %v4151 = vunpack.c.l.b16 %v3709
      %v4152 = vunpack.c.l.b16 %v3710
      %v4153 = vunpack.c.l.b16 %v3711
      %v4154 = vunpack.c.l.b16 %v3712
      %v4155 = vunpack.c.l.b16 %v3713
      %v4156 = vunpack.c.l.b16 %v3714
      %v4157 = vunpack.c.l.b16 %v3715
      %v4158 = vunpack.c.l.b16 %v3716
      %v4159 = vunpack.c.l.b16 %v3717
      %v4160 = vunpack.c.l.b16 %v3718
      %v4161 = vunpack.c.l.b16 %v3719
      %v4162 = vunpack.c.l.b16 %v3720
      %v4163 = vunpack.c.l.b16 %v3721
      %v4164 = vunpack.c.l.b16 %v3722
      %v4165 = vpack.c.b16 %v4150, %v4149
      %v4166 = vpack.c.b16 %v4152, %v4151
      %v4167 = vpack.c.b16 %v4154, %v4153
      %v4168 = vpack.c.b16 %v4156, %v4155
      %v4169 = vpack.c.b16 %v4158, %v4157
      %v4170 = vpack.c.b16 %v4160, %v4159
      %v4171 = vpack.c.b16 %v4162, %v4161
      %v4172 = vpack.c.b16 %v4164, %v4163
      %v4197 = vunpack.c.l.b16 %v3723
      %v4198 = vunpack.c.l.b16 %v3724
      %v4199 = vunpack.c.l.b16 %v3725
      %v4200 = vunpack.c.l.b16 %v3726
      %v4201 = vunpack.c.l.b16 %v3727
      %v4202 = vunpack.c.l.b16 %v3728
      %v4203 = vunpack.c.l.b16 %v3729
      %v4204 = vunpack.c.l.b16 %v3730
      %v4205 = vunpack.c.l.b16 %v3731
      %v4206 = vunpack.c.l.b16 %v3732
      %v4207 = vunpack.c.l.b16 %v3733
      %v4208 = vunpack.c.l.b16 %v3734
      %v4209 = vunpack.c.l.b16 %v3735
      %v4210 = vunpack.c.l.b16 %v3736
      %v4211 = vunpack.c.l.b16 %v3737
      %v4212 = vunpack.c.l.b16 %v3738
      %v4213 = vpack.c.b16 %v4198, %v4197
      %v4214 = vpack.c.b16 %v4200, %v4199
      %v4215 = vpack.c.b16 %v4202, %v4201
      %v4216 = vpack.c.b16 %v4204, %v4203
      %v4217 = vpack.c.b16 %v4206, %v4205
      %v4218 = vpack.c.b16 %v4208, %v4207
      %v4219 = vpack.c.b16 %v4210, %v4209
      %v4220 = vpack.c.b16 %v4212, %v4211
      %4229 = vmatprep.subr.bf16.mxu0 0
      %4230 = vmatpush1.bf16.msra.mxu0 %v4213
      %4231 = vmatprep.subr.bf16.mxu0 0
      %4232 = vmatpush1.bf16.msra.mxu0 %v4214
      %4233 = vmatprep.subr.bf16.mxu0 0
      %4234 = vmatpush1.bf16.msra.mxu0 %v4215
      %4235 = vmatprep.subr.bf16.mxu0 0
      %4236 = vmatpush1.bf16.msra.mxu0 %v4216
      %4237 = vmatprep.subr.bf16.mxu0 0
      %4238 = vmatpush1.bf16.msra.mxu0 %v4217
      %4239 = vmatprep.subr.bf16.mxu0 0
      %4240 = vmatpush1.bf16.msra.mxu0 %v4218
      %4241 = vmatprep.subr.bf16.mxu0 0
      %4242 = vmatpush1.bf16.msra.mxu0 %v4219
      %4243 = vmatprep.subr.bf16.mxu0 0
      %4244 = vmatpush1.bf16.msra.mxu0 %v4220
      %4245 = vmatprep.subr.bf16.mxu0 0
      %4246 = vmatpush1.bf16.msra.mxu0 0
      %4247 = vmatprep.subr.bf16.mxu0 0
      %4248 = vmatpush1.bf16.msra.mxu0 0
      %4249 = vmatprep.subr.bf16.mxu0 0
      %4250 = vmatpush1.bf16.msra.mxu0 0
      %4251 = vmatprep.subr.bf16.mxu0 0
      %4252 = vmatpush1.bf16.msra.mxu0 0
      %4253 = vmatprep.subr.bf16.mxu0 0
      %4254 = vmatpush1.bf16.msra.mxu0 0
      %4255 = vmatprep.subr.bf16.mxu0 0
      %4256 = vmatpush1.bf16.msra.mxu0 0
      %4257 = vmatprep.subr.bf16.mxu0 0
      %4258 = vmatpush1.bf16.msra.mxu0 0
      %4259 = vmatprep.subr.bf16.mxu0 0
      %4260 = vmatpush1.bf16.msra.mxu0 0
      %4261 = vmatprep.mubr.bf16.mxu0 0
      %4262 = vmatmul.mubr.bf16.gmra.mrb[0].mxu0 %v4165
      %v4263 = vpop.f32.mrb[0].mxu0
      %v4264 = vadd.f32 %v4071, %v4263
      %v4265 = vpop.f32.mrb[0].mxu0
      %v4266 = vpop.f32.mrb[0].mxu0
      %v4267 = vadd.f32 %v4074, %v4266
      %v4268 = vpop.f32.mrb[0].mxu0
      %4269 = vmatprep.mubr.bf16.mxu0 0
      %4270 = vmatmul.mubr.bf16.gmra.mrb[0].mxu0 %v4166
      %v4271 = vpop.f32.mrb[0].mxu0
      %v4272 = vadd.f32 %v4079, %v4271
      %v4273 = vpop.f32.mrb[0].mxu0
      %v4274 = vpop.f32.mrb[0].mxu0
      %v4275 = vadd.f32 %v4082, %v4274
      %v4276 = vpop.f32.mrb[0].mxu0
      %4277 = vmatprep.mubr.bf16.mxu0 0
      %4278 = vmatmul.mubr.bf16.gmra.mrb[0].mxu0 %v4167
      %v4279 = vpop.f32.mrb[0].mxu0
      %v4280 = vadd.f32 %v4087, %v4279
      %v4281 = vpop.f32.mrb[0].mxu0
      %v4282 = vpop.f32.mrb[0].mxu0
      %v4283 = vadd.f32 %v4090, %v4282
      %v4284 = vpop.f32.mrb[0].mxu0
      %4285 = vmatprep.mubr.bf16.mxu0 0
      %4286 = vmatmul.mubr.bf16.gmra.mrb[0].mxu0 %v4168
      %v4287 = vpop.f32.mrb[0].mxu0
      %v4288 = vadd.f32 %v4095, %v4287
      %v4289 = vpop.f32.mrb[0].mxu0
      %v4290 = vpop.f32.mrb[0].mxu0
      %v4291 = vadd.f32 %v4098, %v4290
      %v4292 = vpop.f32.mrb[0].mxu0
      %4293 = vmatprep.mubr.bf16.mxu0 0
      %4294 = vmatmul.mubr.bf16.gmra.mrb[0].mxu0 %v4169
      %v4295 = vpop.f32.mrb[0].mxu0
      %v4296 = vadd.f32 %v4103, %v4295
      %v4297 = vpop.f32.mrb[0].mxu0
      %v4298 = vpop.f32.mrb[0].mxu0
      %v4299 = vadd.f32 %v4106, %v4298
      %v4300 = vpop.f32.mrb[0].mxu0
      %4301 = vmatprep.mubr.bf16.mxu0 0
      %4302 = vmatmul.mubr.bf16.gmra.mrb[0].mxu0 %v4170
      %v4303 = vpop.f32.mrb[0].mxu0
      %v4304 = vadd.f32 %v4111, %v4303
      %v4305 = vpop.f32.mrb[0].mxu0
      %v4306 = vpop.f32.mrb[0].mxu0
      %v4307 = vadd.f32 %v4114, %v4306
      %v4308 = vpop.f32.mrb[0].mxu0
      %4309 = vmatprep.mubr.bf16.mxu0 0
      %4310 = vmatmul.mubr.bf16.gmra.mrb[0].mxu0 %v4171
      %v4311 = vpop.f32.mrb[0].mxu0
      %v4312 = vadd.f32 %v4119, %v4311
      %v4313 = vpop.f32.mrb[0].mxu0
      %v4314 = vpop.f32.mrb[0].mxu0
      %v4315 = vadd.f32 %v4122, %v4314
      %v4316 = vpop.f32.mrb[0].mxu0
      %4317 = vmatprep.mubr.bf16.mxu0 0
      %4318 = vmatmul.mubr.bf16.gmra.mrb[0].mxu0 %v4172
      %v4319 = vpop.f32.mrb[0].mxu0
      %v4320 = vadd.f32 %v4127, %v4319
      %v4321 = vpop.f32.mrb[0].mxu0
      %v4322 = vpop.f32.mrb[0].mxu0
      %v4323 = vadd.f32 %v4130, %v4322
      %v4324 = vpop.f32.mrb[0].mxu0
      %4325 = vdwg.mxu0
      %v4326 = vld [vmem:[#allocation2] sm:$0xe]
      %v4327 = vld [vmem:[#allocation2 + $0xc] sm:$0xe]
      %v4328 = vld [vmem:[#allocation2 + $0x18] sm:$0xe]
      %v4329 = vld [vmem:[#allocation2 + $0x24] sm:$0xe]
      %v4330 = vld [vmem:[#allocation2 + $0x30] sm:$0xe]
      %v4331 = vld [vmem:[#allocation2 + $0x3c] sm:$0xe]
      %v4332 = vld [vmem:[#allocation2 + $0x48] sm:$0xe]
      %v4333 = vld [vmem:[#allocation2 + $0x54] sm:$0xe]
      %v4350 = vrot.slane %v4326, 5
      %v4351 = vrot.slane %v4350, 4
      %v4352 = vrot.slane %v3708, 5
      %v4353 = vsel %vm947, %v4351, %v4352
      %v4354 = vrot.slane %v4352, 4
      %v4355 = vrot.slane %v3739, 5
      %v4356 = vsel %vm947, %v4354, %v4355
      %v4357 = vrot.slane %v4327, 5
      %v4358 = vrot.slane %v4357, 4
      %v4359 = vrot.slane %v3710, 5
      %v4360 = vsel %vm947, %v4358, %v4359
      %v4361 = vrot.slane %v4359, 4
      %v4362 = vrot.slane %v3740, 5
      %v4363 = vsel %vm947, %v4361, %v4362
      %v4364 = vrot.slane %v4328, 5
      %v4365 = vrot.slane %v4364, 4
      %v4366 = vrot.slane %v3712, 5
      %v4367 = vsel %vm947, %v4365, %v4366
      %v4368 = vrot.slane %v4366, 4
      %v4369 = vrot.slane %v3741, 5
      %v4370 = vsel %vm947, %v4368, %v4369
      %v4371 = vrot.slane %v4329, 5
      %v4372 = vrot.slane %v4371, 4
      %v4373 = vrot.slane %v3714, 5
      %v4374 = vsel %vm947, %v4372, %v4373
      %v4375 = vrot.slane %v4373, 4
      %v4376 = vrot.slane %v3742, 5
      %v4377 = vsel %vm947, %v4375, %v4376
      %v4378 = vrot.slane %v4330, 5
      %v4379 = vrot.slane %v4378, 4
      %v4380 = vrot.slane %v3716, 5
      %v4381 = vsel %vm947, %v4379, %v4380
      %v4382 = vrot.slane %v4380, 4
      %v4383 = vrot.slane %v3743, 5
      %v4384 = vsel %vm947, %v4382, %v4383
      %v4385 = vrot.slane %v4331, 5
      %v4386 = vrot.slane %v4385, 4
      %v4387 = vrot.slane %v3718, 5
      %v4388 = vsel %vm947, %v4386, %v4387
      %v4389 = vrot.slane %v4387, 4
      %v4390 = vrot.slane %v3744, 5
      %v4391 = vsel %vm947, %v4389, %v4390
      %v4392 = vrot.slane %v4332, 5
      %v4393 = vrot.slane %v4392, 4
      %v4394 = vrot.slane %v3720, 5
      %v4395 = vsel %vm947, %v4393, %v4394
      %v4396 = vrot.slane %v4394, 4
      %v4397 = vrot.slane %v3745, 5
      %v4398 = vsel %vm947, %v4396, %v4397
      %v4399 = vrot.slane %v4333, 5
      %v4400 = vrot.slane %v4399, 4
      %v4401 = vrot.slane %v3722, 5
      %v4402 = vsel %vm947, %v4400, %v4401
      %v4403 = vrot.slane %v4401, 4
      %v4404 = vrot.slane %v3746, 5
      %v4405 = vsel %vm947, %v4403, %v4404
      %s4406 = scalar_lea.vmem %s3, 128
      %v4407 = vld [vmem:[%s4406] sm:$0xf]
      %v4408 = vld [vmem:[%s4406 + $0x4] sm:$0xf]
      %v4409 = vld [vmem:[%s4406 + $0x8] sm:$0xf]
      %v4410 = vld [vmem:[%s4406 + $0xc] sm:$0xf]
      %v4411 = vld [vmem:[%s4406 + $0x10] sm:$0xf]
      %v4412 = vld [vmem:[%s4406 + $0x14] sm:$0xf]
      %v4413 = vld [vmem:[%s4406 + $0x18] sm:$0xf]
      %v4414 = vld [vmem:[%s4406 + $0x1c] sm:$0xf]
      %v4415 = vld [vmem:[%s4406 + $0x20] sm:$0xf]
      %v4416 = vld [vmem:[%s4406 + $0x24] sm:$0xf]
      %v4417 = vld [vmem:[%s4406 + $0x28] sm:$0xf]
      %v4418 = vld [vmem:[%s4406 + $0x2c] sm:$0xf]
      %v4419 = vld [vmem:[%s4406 + $0x30] sm:$0xf]
      %v4420 = vld [vmem:[%s4406 + $0x34] sm:$0xf]
      %v4421 = vld [vmem:[%s4406 + $0x38] sm:$0xf]
      %v4422 = vld [vmem:[%s4406 + $0x3c] sm:$0xf]
      %v4423 = vunpack.c.l.b16 %v4353
      %v4424 = vunpack.c.l.b16 %v4356
      %v4425 = vunpack.c.l.b16 %v4360
      %v4426 = vunpack.c.l.b16 %v4363
      %v4427 = vunpack.c.l.b16 %v4367
      %v4428 = vunpack.c.l.b16 %v4370
      %v4429 = vunpack.c.l.b16 %v4374
      %v4430 = vunpack.c.l.b16 %v4377
      %v4431 = vunpack.c.l.b16 %v4381
      %v4432 = vunpack.c.l.b16 %v4384
      %v4433 = vunpack.c.l.b16 %v4388
      %v4434 = vunpack.c.l.b16 %v4391
      %v4435 = vunpack.c.l.b16 %v4395
      %v4436 = vunpack.c.l.b16 %v4398
      %v4437 = vunpack.c.l.b16 %v4402
      %v4438 = vunpack.c.l.b16 %v4405
      %v4439 = vpack.c.b16 %v4424, %v4423
      %v4440 = vpack.c.b16 %v4426, %v4425
      %v4441 = vpack.c.b16 %v4428, %v4427
      %v4442 = vpack.c.b16 %v4430, %v4429
      %v4443 = vpack.c.b16 %v4432, %v4431
      %v4444 = vpack.c.b16 %v4434, %v4433
      %v4445 = vpack.c.b16 %v4436, %v4435
      %v4446 = vpack.c.b16 %v4438, %v4437
      %v4471 = vunpack.c.l.b16 %v4407
      %v4472 = vunpack.c.l.b16 %v4408
      %v4473 = vunpack.c.l.b16 %v4409
      %v4474 = vunpack.c.l.b16 %v4410
      %v4475 = vunpack.c.l.b16 %v4411
      %v4476 = vunpack.c.l.b16 %v4412
      %v4477 = vunpack.c.l.b16 %v4413
      %v4478 = vunpack.c.l.b16 %v4414
      %v4479 = vunpack.c.l.b16 %v4415
      %v4480 = vunpack.c.l.b16 %v4416
      %v4481 = vunpack.c.l.b16 %v4417
      %v4482 = vunpack.c.l.b16 %v4418
      %v4483 = vunpack.c.l.b16 %v4419
      %v4484 = vunpack.c.l.b16 %v4420
      %v4485 = vunpack.c.l.b16 %v4421
      %v4486 = vunpack.c.l.b16 %v4422
      %v4487 = vpack.c.b16 %v4472, %v4471
      %v4488 = vpack.c.b16 %v4474, %v4473
      %v4489 = vpack.c.b16 %v4476, %v4475
      %v4490 = vpack.c.b16 %v4478, %v4477
      %v4491 = vpack.c.b16 %v4480, %v4479
      %v4492 = vpack.c.b16 %v4482, %v4481
      %v4493 = vpack.c.b16 %v4484, %v4483
      %v4494 = vpack.c.b16 %v4486, %v4485
      %4503 = vmatprep.subr.bf16.mxu0 0
      %4504 = vmatpush1.bf16.msra.mxu0 %v4487
      %4505 = vmatprep.subr.bf16.mxu0 0
      %4506 = vmatpush1.bf16.msra.mxu0 %v4488
      %4507 = vmatprep.subr.bf16.mxu0 0
      %4508 = vmatpush1.bf16.msra.mxu0 %v4489
      %4509 = vmatprep.subr.bf16.mxu0 0
      %4510 = vmatpush1.bf16.msra.mxu0 %v4490
      %4511 = vmatprep.subr.bf16.mxu0 0
      %4512 = vmatpush1.bf16.msra.mxu0 %v4491
      %4513 = vmatprep.subr.bf16.mxu0 0
      %4514 = vmatpush1.bf16.msra.mxu0 %v4492
      %4515 = vmatprep.subr.bf16.mxu0 0
      %4516 = vmatpush1.bf16.msra.mxu0 %v4493
      %4517 = vmatprep.subr.bf16.mxu0 0
      %4518 = vmatpush1.bf16.msra.mxu0 %v4494
      %4519 = vmatprep.subr.bf16.mxu0 0
      %4520 = vmatpush1.bf16.msra.mxu0 0
      %4521 = vmatprep.subr.bf16.mxu0 0
      %4522 = vmatpush1.bf16.msra.mxu0 0
      %4523 = vmatprep.subr.bf16.mxu0 0
      %4524 = vmatpush1.bf16.msra.mxu0 0
      %4525 = vmatprep.subr.bf16.mxu0 0
      %4526 = vmatpush1.bf16.msra.mxu0 0
      %4527 = vmatprep.subr.bf16.mxu0 0
      %4528 = vmatpush1.bf16.msra.mxu0 0
      %4529 = vmatprep.subr.bf16.mxu0 0
      %4530 = vmatpush1.bf16.msra.mxu0 0
      %4531 = vmatprep.subr.bf16.mxu0 0
      %4532 = vmatpush1.bf16.msra.mxu0 0
      %4533 = vmatprep.subr.bf16.mxu0 0
      %4534 = vmatpush1.bf16.msra.mxu0 0
      %4535 = vmatprep.mubr.bf16.mxu0 0
      %4536 = vmatmul.mubr.bf16.gmra.mrb[0].mxu0 %v4439
      %v4537 = vpop.f32.mrb[0].mxu0
      %v4538 = vadd.f32 0.0, %v4537
      %v4539 = vpop.f32.mrb[0].mxu0
      %v4540 = vpop.f32.mrb[0].mxu0
      %v4541 = vadd.f32 0.0, %v4540
      %v4542 = vpop.f32.mrb[0].mxu0
      %4543 = vmatprep.mubr.bf16.mxu0 0
      %4544 = vmatmul.mubr.bf16.gmra.mrb[0].mxu0 %v4440
      %v4545 = vpop.f32.mrb[0].mxu0
      %v4546 = vadd.f32 0.0, %v4545
      %v4547 = vpop.f32.mrb[0].mxu0
      %v4548 = vpop.f32.mrb[0].mxu0
      %v4549 = vadd.f32 0.0, %v4548
      %v4550 = vpop.f32.mrb[0].mxu0
      %4551 = vmatprep.mubr.bf16.mxu0 0
      %4552 = vmatmul.mubr.bf16.gmra.mrb[0].mxu0 %v4441
      %v4553 = vpop.f32.mrb[0].mxu0
      %v4554 = vadd.f32 0.0, %v4553
      %v4555 = vpop.f32.mrb[0].mxu0
      %v4556 = vpop.f32.mrb[0].mxu0
      %v4557 = vadd.f32 0.0, %v4556
      %v4558 = vpop.f32.mrb[0].mxu0
      %4559 = vmatprep.mubr.bf16.mxu0 0
      %4560 = vmatmul.mubr.bf16.gmra.mrb[0].mxu0 %v4442
      %v4561 = vpop.f32.mrb[0].mxu0
      %v4562 = vadd.f32 0.0, %v4561
      %v4563 = vpop.f32.mrb[0].mxu0
      %v4564 = vpop.f32.mrb[0].mxu0
      %v4565 = vadd.f32 0.0, %v4564
      %v4566 = vpop.f32.mrb[0].mxu0
      %4567 = vmatprep.mubr.bf16.mxu0 0
      %4568 = vmatmul.mubr.bf16.gmra.mrb[0].mxu0 %v4443
      %v4569 = vpop.f32.mrb[0].mxu0
      %v4570 = vadd.f32 0.0, %v4569
      %v4571 = vpop.f32.mrb[0].mxu0
      %v4572 = vpop.f32.mrb[0].mxu0
      %v4573 = vadd.f32 0.0, %v4572
      %v4574 = vpop.f32.mrb[0].mxu0
      %4575 = vmatprep.mubr.bf16.mxu0 0
      %4576 = vmatmul.mubr.bf16.gmra.mrb[0].mxu0 %v4444
      %v4577 = vpop.f32.mrb[0].mxu0
      %v4578 = vadd.f32 0.0, %v4577
      %v4579 = vpop.f32.mrb[0].mxu0
      %v4580 = vpop.f32.mrb[0].mxu0
      %v4581 = vadd.f32 0.0, %v4580
      %v4582 = vpop.f32.mrb[0].mxu0
      %4583 = vmatprep.mubr.bf16.mxu0 0
      %4584 = vmatmul.mubr.bf16.gmra.mrb[0].mxu0 %v4445
      %v4585 = vpop.f32.mrb[0].mxu0
      %v4586 = vadd.f32 0.0, %v4585
      %v4587 = vpop.f32.mrb[0].mxu0
      %v4588 = vpop.f32.mrb[0].mxu0
      %v4589 = vadd.f32 0.0, %v4588
      %v4590 = vpop.f32.mrb[0].mxu0
      %4591 = vmatprep.mubr.bf16.mxu0 0
      %4592 = vmatmul.mubr.bf16.gmra.mrb[0].mxu0 %v4446
      %v4593 = vpop.f32.mrb[0].mxu0
      %v4594 = vadd.f32 0.0, %v4593
      %v4595 = vpop.f32.mrb[0].mxu0
      %v4596 = vpop.f32.mrb[0].mxu0
      %v4597 = vadd.f32 0.0, %v4596
      %v4598 = vpop.f32.mrb[0].mxu0
      %4599 = vdwg.mxu0
      %v4600 = vadd.f32 %v4264, %v4538
      %v4601 = vadd.f32 %v4267, %v4541
      %v4602 = vadd.f32 %v4272, %v4546
      %v4603 = vadd.f32 %v4275, %v4549
      %v4604 = vadd.f32 %v4280, %v4554
      %v4605 = vadd.f32 %v4283, %v4557
      %v4606 = vadd.f32 %v4288, %v4562
      %v4607 = vadd.f32 %v4291, %v4565
      %v4608 = vadd.f32 %v4296, %v4570
      %v4609 = vadd.f32 %v4299, %v4573
      %v4610 = vadd.f32 %v4304, %v4578
      %v4611 = vadd.f32 %v4307, %v4581
      %v4612 = vadd.f32 %v4312, %v4586
      %v4613 = vadd.f32 %v4315, %v4589
      %v4614 = vadd.f32 %v4320, %v4594
      %v4615 = vadd.f32 %v4323, %v4597
      %s4616 = scalar_lea.vmem [#allocation2], 12
      %v4617 = vld [vmem:[%s4616] sm:$0xf]
      %v4618 = vld [vmem:[%s4616 + $0x4] sm:$0xf]
      %v4619 = vld [vmem:[%s4616 + $0xc] sm:$0xf]
      %v4620 = vld [vmem:[%s4616 + $0x10] sm:$0xf]
      %v4621 = vld [vmem:[%s4616 + $0x18] sm:$0xf]
      %v4622 = vld [vmem:[%s4616 + $0x1c] sm:$0xf]
      %v4623 = vld [vmem:[%s4616 + $0x24] sm:$0xf]
      %v4624 = vld [vmem:[%s4616 + $0x28] sm:$0xf]
      %v4625 = vld [vmem:[%s4616 + $0x30] sm:$0xf]
      %v4626 = vld [vmem:[%s4616 + $0x34] sm:$0xf]
      %v4627 = vld [vmem:[%s4616 + $0x3c] sm:$0xf]
      %v4628 = vld [vmem:[%s4616 + $0x40] sm:$0xf]
      %v4629 = vld [vmem:[%s4616 + $0x48] sm:$0xf]
      %v4630 = vld [vmem:[%s4616 + $0x4c] sm:$0xf]
      %v4631 = vld [vmem:[%s4616 + $0x54] sm:$0xf]
      %v4632 = vld [vmem:[%s4616 + $0x58] sm:$0xf]
      %s4633 = scalar_lea.vmem %s3, 192
      %v4634 = vld [vmem:[%s4633] sm:$0xf]
      %v4635 = vld [vmem:[%s4633 + $0x4] sm:$0xf]
      %v4636 = vld [vmem:[%s4633 + $0x8] sm:$0xf]
      %v4637 = vld [vmem:[%s4633 + $0xc] sm:$0xf]
      %v4638 = vld [vmem:[%s4633 + $0x10] sm:$0xf]
      %v4639 = vld [vmem:[%s4633 + $0x14] sm:$0xf]
      %v4640 = vld [vmem:[%s4633 + $0x18] sm:$0xf]
      %v4641 = vld [vmem:[%s4633 + $0x1c] sm:$0xf]
      %v4642 = vld [vmem:[%s4633 + $0x20] sm:$0xf]
      %v4643 = vld [vmem:[%s4633 + $0x24] sm:$0xf]
      %v4644 = vld [vmem:[%s4633 + $0x28] sm:$0xf]
      %v4645 = vld [vmem:[%s4633 + $0x2c] sm:$0xf]
      %v4646 = vld [vmem:[%s4633 + $0x30] sm:$0xf]
      %v4647 = vld [vmem:[%s4633 + $0x34] sm:$0xf]
      %v4648 = vld [vmem:[%s4633 + $0x38] sm:$0xf]
      %v4649 = vld [vmem:[%s4633 + $0x3c] sm:$0xf]
      %v4666 = vunpack.c.l.b16 %v4617
      %v4667 = vunpack.c.l.b16 %v4618
      %v4668 = vunpack.c.l.b16 %v4619
      %v4669 = vunpack.c.l.b16 %v4620
      %v4670 = vunpack.c.l.b16 %v4621
      %v4671 = vunpack.c.l.b16 %v4622
      %v4672 = vunpack.c.l.b16 %v4623
      %v4673 = vunpack.c.l.b16 %v4624
      %v4674 = vunpack.c.l.b16 %v4625
      %v4675 = vunpack.c.l.b16 %v4626
      %v4676 = vunpack.c.l.b16 %v4627
      %v4677 = vunpack.c.l.b16 %v4628
      %v4678 = vunpack.c.l.b16 %v4629
      %v4679 = vunpack.c.l.b16 %v4630
      %v4680 = vunpack.c.l.b16 %v4631
      %v4681 = vunpack.c.l.b16 %v4632
      %v4682 = vpack.c.b16 %v4667, %v4666
      %v4683 = vpack.c.b16 %v4669, %v4668
      %v4684 = vpack.c.b16 %v4671, %v4670
      %v4685 = vpack.c.b16 %v4673, %v4672
      %v4686 = vpack.c.b16 %v4675, %v4674
      %v4687 = vpack.c.b16 %v4677, %v4676
      %v4688 = vpack.c.b16 %v4679, %v4678
      %v4689 = vpack.c.b16 %v4681, %v4680
      %v4714 = vunpack.c.l.b16 %v4634
      %v4715 = vunpack.c.l.b16 %v4635
      %v4716 = vunpack.c.l.b16 %v4636
      %v4717 = vunpack.c.l.b16 %v4637
      %v4718 = vunpack.c.l.b16 %v4638
      %v4719 = vunpack.c.l.b16 %v4639
      %v4720 = vunpack.c.l.b16 %v4640
      %v4721 = vunpack.c.l.b16 %v4641
      %v4722 = vunpack.c.l.b16 %v4642
      %v4723 = vunpack.c.l.b16 %v4643
      %v4724 = vunpack.c.l.b16 %v4644
      %v4725 = vunpack.c.l.b16 %v4645
      %v4726 = vunpack.c.l.b16 %v4646
      %v4727 = vunpack.c.l.b16 %v4647
      %v4728 = vunpack.c.l.b16 %v4648
      %v4729 = vunpack.c.l.b16 %v4649
      %v4730 = vpack.c.b16 %v4715, %v4714
      %v4731 = vpack.c.b16 %v4717, %v4716
      %v4732 = vpack.c.b16 %v4719, %v4718
      %v4733 = vpack.c.b16 %v4721, %v4720
      %v4734 = vpack.c.b16 %v4723, %v4722
      %v4735 = vpack.c.b16 %v4725, %v4724
      %v4736 = vpack.c.b16 %v4727, %v4726
      %v4737 = vpack.c.b16 %v4729, %v4728
      %4746 = vmatprep.subr.bf16.mxu0 0
      %4747 = vmatpush1.bf16.msra.mxu0 %v4730
      %4748 = vmatprep.subr.bf16.mxu0 0
      %4749 = vmatpush1.bf16.msra.mxu0 %v4731
      %4750 = vmatprep.subr.bf16.mxu0 0
      %4751 = vmatpush1.bf16.msra.mxu0 %v4732
      %4752 = vmatprep.subr.bf16.mxu0 0
      %4753 = vmatpush1.bf16.msra.mxu0 %v4733
      %4754 = vmatprep.subr.bf16.mxu0 0
      %4755 = vmatpush1.bf16.msra.mxu0 %v4734
      %4756 = vmatprep.subr.bf16.mxu0 0
      %4757 = vmatpush1.bf16.msra.mxu0 %v4735
      %4758 = vmatprep.subr.bf16.mxu0 0
      %4759 = vmatpush1.bf16.msra.mxu0 %v4736
      %4760 = vmatprep.subr.bf16.mxu0 0
      %4761 = vmatpush1.bf16.msra.mxu0 %v4737
      %4762 = vmatprep.subr.bf16.mxu0 0
      %4763 = vmatpush1.bf16.msra.mxu0 0
      %4764 = vmatprep.subr.bf16.mxu0 0
      %4765 = vmatpush1.bf16.msra.mxu0 0
      %4766 = vmatprep.subr.bf16.mxu0 0
      %4767 = vmatpush1.bf16.msra.mxu0 0
      %4768 = vmatprep.subr.bf16.mxu0 0
      %4769 = vmatpush1.bf16.msra.mxu0 0
      %4770 = vmatprep.subr.bf16.mxu0 0
      %4771 = vmatpush1.bf16.msra.mxu0 0
      %4772 = vmatprep.subr.bf16.mxu0 0
      %4773 = vmatpush1.bf16.msra.mxu0 0
      %4774 = vmatprep.subr.bf16.mxu0 0
      %4775 = vmatpush1.bf16.msra.mxu0 0
      %4776 = vmatprep.subr.bf16.mxu0 0
      %4777 = vmatpush1.bf16.msra.mxu0 0
      %4778 = vmatprep.mubr.bf16.mxu0 0
      %4779 = vmatmul.mubr.bf16.gmra.mrb[0].mxu0 %v4682
      %v4780 = vpop.f32.mrb[0].mxu0
      %v4781 = vadd.f32 0.0, %v4780
      %v4782 = vpop.f32.mrb[0].mxu0
      %v4783 = vpop.f32.mrb[0].mxu0
      %v4784 = vadd.f32 0.0, %v4783
      %v4785 = vpop.f32.mrb[0].mxu0
      %4786 = vmatprep.mubr.bf16.mxu0 0
      %4787 = vmatmul.mubr.bf16.gmra.mrb[0].mxu0 %v4683
      %v4788 = vpop.f32.mrb[0].mxu0
      %v4789 = vadd.f32 0.0, %v4788
      %v4790 = vpop.f32.mrb[0].mxu0
      %v4791 = vpop.f32.mrb[0].mxu0
      %v4792 = vadd.f32 0.0, %v4791
      %v4793 = vpop.f32.mrb[0].mxu0
      %4794 = vmatprep.mubr.bf16.mxu0 0
      %4795 = vmatmul.mubr.bf16.gmra.mrb[0].mxu0 %v4684
      %v4796 = vpop.f32.mrb[0].mxu0
      %v4797 = vadd.f32 0.0, %v4796
      %v4798 = vpop.f32.mrb[0].mxu0
      %v4799 = vpop.f32.mrb[0].mxu0
      %v4800 = vadd.f32 0.0, %v4799
      %v4801 = vpop.f32.mrb[0].mxu0
      %4802 = vmatprep.mubr.bf16.mxu0 0
      %4803 = vmatmul.mubr.bf16.gmra.mrb[0].mxu0 %v4685
      %v4804 = vpop.f32.mrb[0].mxu0
      %v4805 = vadd.f32 0.0, %v4804
      %v4806 = vpop.f32.mrb[0].mxu0
      %v4807 = vpop.f32.mrb[0].mxu0
      %v4808 = vadd.f32 0.0, %v4807
      %v4809 = vpop.f32.mrb[0].mxu0
      %4810 = vmatprep.mubr.bf16.mxu0 0
      %4811 = vmatmul.mubr.bf16.gmra.mrb[0].mxu0 %v4686
      %v4812 = vpop.f32.mrb[0].mxu0
      %v4813 = vadd.f32 0.0, %v4812
      %v4814 = vpop.f32.mrb[0].mxu0
      %v4815 = vpop.f32.mrb[0].mxu0
      %v4816 = vadd.f32 0.0, %v4815
      %v4817 = vpop.f32.mrb[0].mxu0
      %4818 = vmatprep.mubr.bf16.mxu0 0
      %4819 = vmatmul.mubr.bf16.gmra.mrb[0].mxu0 %v4687
      %v4820 = vpop.f32.mrb[0].mxu0
      %v4821 = vadd.f32 0.0, %v4820
      %v4822 = vpop.f32.mrb[0].mxu0
      %v4823 = vpop.f32.mrb[0].mxu0
      %v4824 = vadd.f32 0.0, %v4823
      %v4825 = vpop.f32.mrb[0].mxu0
      %4826 = vmatprep.mubr.bf16.mxu0 0
      %4827 = vmatmul.mubr.bf16.gmra.mrb[0].mxu0 %v4688
      %v4828 = vpop.f32.mrb[0].mxu0
      %v4829 = vadd.f32 0.0, %v4828
      %v4830 = vpop.f32.mrb[0].mxu0
      %v4831 = vpop.f32.mrb[0].mxu0
      %v4832 = vadd.f32 0.0, %v4831
      %v4833 = vpop.f32.mrb[0].mxu0
      %4834 = vmatprep.mubr.bf16.mxu0 0
      %4835 = vmatmul.mubr.bf16.gmra.mrb[0].mxu0 %v4689
      %v4836 = vpop.f32.mrb[0].mxu0
      %v4837 = vadd.f32 0.0, %v4836
      %v4838 = vpop.f32.mrb[0].mxu0
      %v4839 = vpop.f32.mrb[0].mxu0
      %v4840 = vadd.f32 0.0, %v4839
      %v4841 = vpop.f32.mrb[0].mxu0
      %4842 = vdwg.mxu0
      %v4843 = vadd.f32 %v4600, %v4781
      %v4844 = vadd.f32 %v4601, %v4784
      %v4845 = vadd.f32 %v4602, %v4789
      %v4846 = vadd.f32 %v4603, %v4792
      %v4847 = vadd.f32 %v4604, %v4797
      %v4848 = vadd.f32 %v4605, %v4800
      %v4849 = vadd.f32 %v4606, %v4805
      %v4850 = vadd.f32 %v4607, %v4808
      %v4851 = vadd.f32 %v4608, %v4813
      %v4852 = vadd.f32 %v4609, %v4816
      %v4853 = vadd.f32 %v4610, %v4821
      %v4854 = vadd.f32 %v4611, %v4824
      %v4855 = vadd.f32 %v4612, %v4829
      %v4856 = vadd.f32 %v4613, %v4832
      %v4857 = vadd.f32 %v4614, %v4837
      %v4858 = vadd.f32 %v4615, %v4840
      %v4859 = vld [vmem:[%s4616] sm:$0xf]
      %v4860 = vld [vmem:[%s4616 + $0x4] sm:$0xf]
      %v4861 = vld [vmem:[%s4616 + $0x8] sm:$0x1]
      %v4862 = vld [vmem:[%s4616 + $0xc] sm:$0xf]
      %v4863 = vld [vmem:[%s4616 + $0x10] sm:$0xf]
      %v4864 = vld [vmem:[%s4616 + $0x14] sm:$0x1]
      %v4865 = vld [vmem:[%s4616 + $0x18] sm:$0xf]
      %v4866 = vld [vmem:[%s4616 + $0x1c] sm:$0xf]
      %v4867 = vld [vmem:[%s4616 + $0x20] sm:$0x1]
      %v4868 = vld [vmem:[%s4616 + $0x24] sm:$0xf]
      %v4869 = vld [vmem:[%s4616 + $0x28] sm:$0xf]
      %v4870 = vld [vmem:[%s4616 + $0x2c] sm:$0x1]
      %v4871 = vld [vmem:[%s4616 + $0x30] sm:$0xf]
      %v4872 = vld [vmem:[%s4616 + $0x34] sm:$0xf]
      %v4873 = vld [vmem:[%s4616 + $0x38] sm:$0x1]
      %v4874 = vld [vmem:[%s4616 + $0x3c] sm:$0xf]
      %v4875 = vld [vmem:[%s4616 + $0x40] sm:$0xf]
      %v4876 = vld [vmem:[%s4616 + $0x44] sm:$0x1]
      %v4877 = vld [vmem:[%s4616 + $0x48] sm:$0xf]
      %v4878 = vld [vmem:[%s4616 + $0x4c] sm:$0xf]
      %v4879 = vld [vmem:[%s4616 + $0x50] sm:$0x1]
      %v4880 = vld [vmem:[%s4616 + $0x54] sm:$0xf]
      %v4881 = vld [vmem:[%s4616 + $0x58] sm:$0xf]
      %v4882 = vld [vmem:[%s4616 + $0x5c] sm:$0x1]
      %v4884 = vshrl.u32 %v4859, 16
      %v4886 = vrot.slane %v4884, 4
      %v4887 = vshll.u32 %v4859, 16
      %v4889 = vrot.slane %v4887, 5
      %v4890 = vor.u32 %v4886, %v4889
      %v4891 = vrot.slane %v4890, 4
      %v4893 = vshll.u32 %v4860, 16
      %v4895 = vrot.slane %v4893, 5
      %v4896 = vsel %vm298, %v4891, %v4895
      %v4897 = vshrl.u32 %v4860, 16
      %v4899 = vrot.slane %v4897, 4
      %v4900 = vor.u32 %v4899, %v4895
      %v4901 = vrot.slane %v4900, 4
      %v4903 = vshll.u32 %v4861, 16
      %v4905 = vrot.slane %v4903, 5
      %v4906 = vsel %vm298, %v4901, %v4905
      %v4908 = vshrl.u32 %v4862, 16
      %v4910 = vrot.slane %v4908, 4
      %v4911 = vshll.u32 %v4862, 16
      %v4913 = vrot.slane %v4911, 5
      %v4914 = vor.u32 %v4910, %v4913
      %v4915 = vrot.slane %v4914, 4
      %v4917 = vshll.u32 %v4863, 16
      %v4919 = vrot.slane %v4917, 5
      %v4920 = vsel %vm298, %v4915, %v4919
      %v4921 = vshrl.u32 %v4863, 16
      %v4923 = vrot.slane %v4921, 4
      %v4924 = vor.u32 %v4923, %v4919
      %v4925 = vrot.slane %v4924, 4
      %v4927 = vshll.u32 %v4864, 16
      %v4929 = vrot.slane %v4927, 5
      %v4930 = vsel %vm298, %v4925, %v4929
      %v4932 = vshrl.u32 %v4865, 16
      %v4934 = vrot.slane %v4932, 4
      %v4935 = vshll.u32 %v4865, 16
      %v4937 = vrot.slane %v4935, 5
      %v4938 = vor.u32 %v4934, %v4937
      %v4939 = vrot.slane %v4938, 4
      %v4941 = vshll.u32 %v4866, 16
      %v4943 = vrot.slane %v4941, 5
      %v4944 = vsel %vm298, %v4939, %v4943
      %v4945 = vshrl.u32 %v4866, 16
      %v4947 = vrot.slane %v4945, 4
      %v4948 = vor.u32 %v4947, %v4943
      %v4949 = vrot.slane %v4948, 4
      %v4951 = vshll.u32 %v4867, 16
      %v4953 = vrot.slane %v4951, 5
      %v4954 = vsel %vm298, %v4949, %v4953
      %v4956 = vshrl.u32 %v4868, 16
      %v4958 = vrot.slane %v4956, 4
      %v4959 = vshll.u32 %v4868, 16
      %v4961 = vrot.slane %v4959, 5
      %v4962 = vor.u32 %v4958, %v4961
      %v4963 = vrot.slane %v4962, 4
      %v4965 = vshll.u32 %v4869, 16
      %v4967 = vrot.slane %v4965, 5
      %v4968 = vsel %vm298, %v4963, %v4967
      %v4969 = vshrl.u32 %v4869, 16
      %v4971 = vrot.slane %v4969, 4
      %v4972 = vor.u32 %v4971, %v4967
      %v4973 = vrot.slane %v4972, 4
      %v4975 = vshll.u32 %v4870, 16
      %v4977 = vrot.slane %v4975, 5
      %v4978 = vsel %vm298, %v4973, %v4977
      %v4980 = vshrl.u32 %v4871, 16
      %v4982 = vrot.slane %v4980, 4
      %v4983 = vshll.u32 %v4871, 16
      %v4985 = vrot.slane %v4983, 5
      %v4986 = vor.u32 %v4982, %v4985
      %v4987 = vrot.slane %v4986, 4
      %v4989 = vshll.u32 %v4872, 16
      %v4991 = vrot.slane %v4989, 5
      %v4992 = vsel %vm298, %v4987, %v4991
      %v4993 = vshrl.u32 %v4872, 16
      %v4995 = vrot.slane %v4993, 4
      %v4996 = vor.u32 %v4995, %v4991
      %v4997 = vrot.slane %v4996, 4
      %v4999 = vshll.u32 %v4873, 16
      %v5001 = vrot.slane %v4999, 5
      %v5002 = vsel %vm298, %v4997, %v5001
      %v5004 = vshrl.u32 %v4874, 16
      %v5006 = vrot.slane %v5004, 4
      %v5007 = vshll.u32 %v4874, 16
      %v5009 = vrot.slane %v5007, 5
      %v5010 = vor.u32 %v5006, %v5009
      %v5011 = vrot.slane %v5010, 4
      %v5013 = vshll.u32 %v4875, 16
      %v5015 = vrot.slane %v5013, 5
      %v5016 = vsel %vm298, %v5011, %v5015
      %v5017 = vshrl.u32 %v4875, 16
      %v5019 = vrot.slane %v5017, 4
      %v5020 = vor.u32 %v5019, %v5015
      %v5021 = vrot.slane %v5020, 4
      %v5023 = vshll.u32 %v4876, 16
      %v5025 = vrot.slane %v5023, 5
      %v5026 = vsel %vm298, %v5021, %v5025
      %v5028 = vshrl.u32 %v4877, 16
      %v5030 = vrot.slane %v5028, 4
      %v5031 = vshll.u32 %v4877, 16
      %v5033 = vrot.slane %v5031, 5
      %v5034 = vor.u32 %v5030, %v5033
      %v5035 = vrot.slane %v5034, 4
      %v5037 = vshll.u32 %v4878, 16
      %v5039 = vrot.slane %v5037, 5
      %v5040 = vsel %vm298, %v5035, %v5039
      %v5041 = vshrl.u32 %v4878, 16
      %v5043 = vrot.slane %v5041, 4
      %v5044 = vor.u32 %v5043, %v5039
      %v5045 = vrot.slane %v5044, 4
      %v5047 = vshll.u32 %v4879, 16
      %v5049 = vrot.slane %v5047, 5
      %v5050 = vsel %vm298, %v5045, %v5049
      %v5052 = vshrl.u32 %v4880, 16
      %v5054 = vrot.slane %v5052, 4
      %v5055 = vshll.u32 %v4880, 16
      %v5057 = vrot.slane %v5055, 5
      %v5058 = vor.u32 %v5054, %v5057
      %v5059 = vrot.slane %v5058, 4
      %v5061 = vshll.u32 %v4881, 16
      %v5063 = vrot.slane %v5061, 5
      %v5064 = vsel %vm298, %v5059, %v5063
      %v5065 = vshrl.u32 %v4881, 16
      %v5067 = vrot.slane %v5065, 4
      %v5068 = vor.u32 %v5067, %v5063
      %v5069 = vrot.slane %v5068, 4
      %v5071 = vshll.u32 %v4882, 16
      %v5073 = vrot.slane %v5071, 5
      %v5074 = vsel %vm298, %v5069, %v5073
      %s5075 = scalar_lea.vmem %s3, 256
      %v5076 = vld [vmem:[%s5075] sm:$0xf]
      %v5077 = vld [vmem:[%s5075 + $0x4] sm:$0xf]
      %v5078 = vld [vmem:[%s5075 + $0x8] sm:$0xf]
      %v5079 = vld [vmem:[%s5075 + $0xc] sm:$0xf]
      %v5080 = vld [vmem:[%s5075 + $0x10] sm:$0xf]
      %v5081 = vld [vmem:[%s5075 + $0x14] sm:$0xf]
      %v5082 = vld [vmem:[%s5075 + $0x18] sm:$0xf]
      %v5083 = vld [vmem:[%s5075 + $0x1c] sm:$0xf]
      %v5084 = vld [vmem:[%s5075 + $0x20] sm:$0xf]
      %v5085 = vld [vmem:[%s5075 + $0x24] sm:$0xf]
      %v5086 = vld [vmem:[%s5075 + $0x28] sm:$0xf]
      %v5087 = vld [vmem:[%s5075 + $0x2c] sm:$0xf]
      %v5088 = vld [vmem:[%s5075 + $0x30] sm:$0xf]
      %v5089 = vld [vmem:[%s5075 + $0x34] sm:$0xf]
      %v5090 = vld [vmem:[%s5075 + $0x38] sm:$0xf]
      %v5091 = vld [vmem:[%s5075 + $0x3c] sm:$0xf]
      %v5092 = vunpack.c.l.b16 %v4896
      %v5093 = vunpack.c.l.b16 %v4906
      %v5094 = vunpack.c.l.b16 %v4920
      %v5095 = vunpack.c.l.b16 %v4930
      %v5096 = vunpack.c.l.b16 %v4944
      %v5097 = vunpack.c.l.b16 %v4954
      %v5098 = vunpack.c.l.b16 %v4968
      %v5099 = vunpack.c.l.b16 %v4978
      %v5100 = vunpack.c.l.b16 %v4992
      %v5101 = vunpack.c.l.b16 %v5002
      %v5102 = vunpack.c.l.b16 %v5016
      %v5103 = vunpack.c.l.b16 %v5026
      %v5104 = vunpack.c.l.b16 %v5040
      %v5105 = vunpack.c.l.b16 %v5050
      %v5106 = vunpack.c.l.b16 %v5064
      %v5107 = vunpack.c.l.b16 %v5074
      %v5108 = vpack.c.b16 %v5093, %v5092
      %v5109 = vpack.c.b16 %v5095, %v5094
      %v5110 = vpack.c.b16 %v5097, %v5096
      %v5111 = vpack.c.b16 %v5099, %v5098
      %v5112 = vpack.c.b16 %v5101, %v5100
      %v5113 = vpack.c.b16 %v5103, %v5102
      %v5114 = vpack.c.b16 %v5105, %v5104
      %v5115 = vpack.c.b16 %v5107, %v5106
      %v5140 = vunpack.c.l.b16 %v5076
      %v5141 = vunpack.c.l.b16 %v5077
      %v5142 = vunpack.c.l.b16 %v5078
      %v5143 = vunpack.c.l.b16 %v5079
      %v5144 = vunpack.c.l.b16 %v5080
      %v5145 = vunpack.c.l.b16 %v5081
      %v5146 = vunpack.c.l.b16 %v5082
      %v5147 = vunpack.c.l.b16 %v5083
      %v5148 = vunpack.c.l.b16 %v5084
      %v5149 = vunpack.c.l.b16 %v5085
      %v5150 = vunpack.c.l.b16 %v5086
      %v5151 = vunpack.c.l.b16 %v5087
      %v5152 = vunpack.c.l.b16 %v5088
      %v5153 = vunpack.c.l.b16 %v5089
      %v5154 = vunpack.c.l.b16 %v5090
      %v5155 = vunpack.c.l.b16 %v5091
      %v5156 = vpack.c.b16 %v5141, %v5140
      %v5157 = vpack.c.b16 %v5143, %v5142
      %v5158 = vpack.c.b16 %v5145, %v5144
      %v5159 = vpack.c.b16 %v5147, %v5146
      %v5160 = vpack.c.b16 %v5149, %v5148
      %v5161 = vpack.c.b16 %v5151, %v5150
      %v5162 = vpack.c.b16 %v5153, %v5152
      %v5163 = vpack.c.b16 %v5155, %v5154
      %5172 = vmatprep.subr.bf16.mxu0 0
      %5173 = vmatpush1.bf16.msra.mxu0 %v5156
      %5174 = vmatprep.subr.bf16.mxu0 0
      %5175 = vmatpush1.bf16.msra.mxu0 %v5157
      %5176 = vmatprep.subr.bf16.mxu0 0
      %5177 = vmatpush1.bf16.msra.mxu0 %v5158
      %5178 = vmatprep.subr.bf16.mxu0 0
      %5179 = vmatpush1.bf16.msra.mxu0 %v5159
      %5180 = vmatprep.subr.bf16.mxu0 0
      %5181 = vmatpush1.bf16.msra.mxu0 %v5160
      %5182 = vmatprep.subr.bf16.mxu0 0
      %5183 = vmatpush1.bf16.msra.mxu0 %v5161
      %5184 = vmatprep.subr.bf16.mxu0 0
      %5185 = vmatpush1.bf16.msra.mxu0 %v5162
      %5186 = vmatprep.subr.bf16.mxu0 0
      %5187 = vmatpush1.bf16.msra.mxu0 %v5163
      %5188 = vmatprep.subr.bf16.mxu0 0
      %5189 = vmatpush1.bf16.msra.mxu0 0
      %5190 = vmatprep.subr.bf16.mxu0 0
      %5191 = vmatpush1.bf16.msra.mxu0 0
      %5192 = vmatprep.subr.bf16.mxu0 0
      %5193 = vmatpush1.bf16.msra.mxu0 0
      %5194 = vmatprep.subr.bf16.mxu0 0
      %5195 = vmatpush1.bf16.msra.mxu0 0
      %5196 = vmatprep.subr.bf16.mxu0 0
      %5197 = vmatpush1.bf16.msra.mxu0 0
      %5198 = vmatprep.subr.bf16.mxu0 0
      %5199 = vmatpush1.bf16.msra.mxu0 0
      %5200 = vmatprep.subr.bf16.mxu0 0
      %5201 = vmatpush1.bf16.msra.mxu0 0
      %5202 = vmatprep.subr.bf16.mxu0 0
      %5203 = vmatpush1.bf16.msra.mxu0 0
      %5204 = vmatprep.mubr.bf16.mxu0 0
      %5205 = vmatmul.mubr.bf16.gmra.mrb[0].mxu0 %v5108
      %v5206 = vpop.f32.mrb[0].mxu0
      %v5207 = vadd.f32 0.0, %v5206
      %v5208 = vpop.f32.mrb[0].mxu0
      %v5209 = vpop.f32.mrb[0].mxu0
      %v5210 = vadd.f32 0.0, %v5209
      %v5211 = vpop.f32.mrb[0].mxu0
      %5212 = vmatprep.mubr.bf16.mxu0 0
      %5213 = vmatmul.mubr.bf16.gmra.mrb[0].mxu0 %v5109
      %v5214 = vpop.f32.mrb[0].mxu0
      %v5215 = vadd.f32 0.0, %v5214
      %v5216 = vpop.f32.mrb[0].mxu0
      %v5217 = vpop.f32.mrb[0].mxu0
      %v5218 = vadd.f32 0.0, %v5217
      %v5219 = vpop.f32.mrb[0].mxu0
      %5220 = vmatprep.mubr.bf16.mxu0 0
      %5221 = vmatmul.mubr.bf16.gmra.mrb[0].mxu0 %v5110
      %v5222 = vpop.f32.mrb[0].mxu0
      %v5223 = vadd.f32 0.0, %v5222
      %v5224 = vpop.f32.mrb[0].mxu0
      %v5225 = vpop.f32.mrb[0].mxu0
      %v5226 = vadd.f32 0.0, %v5225
      %v5227 = vpop.f32.mrb[0].mxu0
      %5228 = vmatprep.mubr.bf16.mxu0 0
      %5229 = vmatmul.mubr.bf16.gmra.mrb[0].mxu0 %v5111
      %v5230 = vpop.f32.mrb[0].mxu0
      %v5231 = vadd.f32 0.0, %v5230
      %v5232 = vpop.f32.mrb[0].mxu0
      %v5233 = vpop.f32.mrb[0].mxu0
      %v5234 = vadd.f32 0.0, %v5233
      %v5235 = vpop.f32.mrb[0].mxu0
      %5236 = vmatprep.mubr.bf16.mxu0 0
      %5237 = vmatmul.mubr.bf16.gmra.mrb[0].mxu0 %v5112
      %v5238 = vpop.f32.mrb[0].mxu0
      %v5239 = vadd.f32 0.0, %v5238
      %v5240 = vpop.f32.mrb[0].mxu0
      %v5241 = vpop.f32.mrb[0].mxu0
      %v5242 = vadd.f32 0.0, %v5241
      %v5243 = vpop.f32.mrb[0].mxu0
      %5244 = vmatprep.mubr.bf16.mxu0 0
      %5245 = vmatmul.mubr.bf16.gmra.mrb[0].mxu0 %v5113
      %v5246 = vpop.f32.mrb[0].mxu0
      %v5247 = vadd.f32 0.0, %v5246
      %v5248 = vpop.f32.mrb[0].mxu0
      %v5249 = vpop.f32.mrb[0].mxu0
      %v5250 = vadd.f32 0.0, %v5249
      %v5251 = vpop.f32.mrb[0].mxu0
      %5252 = vmatprep.mubr.bf16.mxu0 0
      %5253 = vmatmul.mubr.bf16.gmra.mrb[0].mxu0 %v5114
      %v5254 = vpop.f32.mrb[0].mxu0
      %v5255 = vadd.f32 0.0, %v5254
      %v5256 = vpop.f32.mrb[0].mxu0
      %v5257 = vpop.f32.mrb[0].mxu0
      %v5258 = vadd.f32 0.0, %v5257
      %v5259 = vpop.f32.mrb[0].mxu0
      %5260 = vmatprep.mubr.bf16.mxu0 0
      %5261 = vmatmul.mubr.bf16.gmra.mrb[0].mxu0 %v5115
      %v5262 = vpop.f32.mrb[0].mxu0
      %v5263 = vadd.f32 0.0, %v5262
      %v5264 = vpop.f32.mrb[0].mxu0
      %v5265 = vpop.f32.mrb[0].mxu0
      %v5266 = vadd.f32 0.0, %v5265
      %v5267 = vpop.f32.mrb[0].mxu0
      %5268 = vdwg.mxu0
      %v5269 = vadd.f32 %v4843, %v5207
      %v5270 = vadd.f32 %v4844, %v5210
      %v5271 = vadd.f32 %v4845, %v5215
      %v5272 = vadd.f32 %v4846, %v5218
      %v5273 = vadd.f32 %v4847, %v5223
      %v5274 = vadd.f32 %v4848, %v5226
      %v5275 = vadd.f32 %v4849, %v5231
      %v5276 = vadd.f32 %v4850, %v5234
      %v5277 = vadd.f32 %v4851, %v5239
      %v5278 = vadd.f32 %v4852, %v5242
      %v5279 = vadd.f32 %v4853, %v5247
      %v5280 = vadd.f32 %v4854, %v5250
      %v5281 = vadd.f32 %v4855, %v5255
      %v5282 = vadd.f32 %v4856, %v5258
      %v5283 = vadd.f32 %v4857, %v5263
      %v5284 = vadd.f32 %v4858, %v5266
      %v5285 = vld [vmem:[%s4616] sm:$0xe]
      %v5286 = vld [vmem:[%s4616 + $0xc] sm:$0xe]
      %v5287 = vld [vmem:[%s4616 + $0x18] sm:$0xe]
      %v5288 = vld [vmem:[%s4616 + $0x24] sm:$0xe]
      %v5289 = vld [vmem:[%s4616 + $0x30] sm:$0xe]
      %v5290 = vld [vmem:[%s4616 + $0x3c] sm:$0xe]
      %v5291 = vld [vmem:[%s4616 + $0x48] sm:$0xe]
      %v5292 = vld [vmem:[%s4616 + $0x54] sm:$0xe]
      %v5317 = vrot.slane %v5285, 5
      %v5318 = vrot.slane %v5317, 4
      %v5319 = vrot.slane %v4860, 5
      %v5320 = vsel %vm947, %v5318, %v5319
      %v5321 = vrot.slane %v5319, 4
      %v5322 = vrot.slane %v4861, 5
      %v5323 = vsel %vm947, %v5321, %v5322
      %v5324 = vrot.slane %v5286, 5
      %v5325 = vrot.slane %v5324, 4
      %v5326 = vrot.slane %v4863, 5
      %v5327 = vsel %vm947, %v5325, %v5326
      %v5328 = vrot.slane %v5326, 4
      %v5329 = vrot.slane %v4864, 5
      %v5330 = vsel %vm947, %v5328, %v5329
      %v5331 = vrot.slane %v5287, 5
      %v5332 = vrot.slane %v5331, 4
      %v5333 = vrot.slane %v4866, 5
      %v5334 = vsel %vm947, %v5332, %v5333
      %v5335 = vrot.slane %v5333, 4
      %v5336 = vrot.slane %v4867, 5
      %v5337 = vsel %vm947, %v5335, %v5336
      %v5338 = vrot.slane %v5288, 5
      %v5339 = vrot.slane %v5338, 4
      %v5340 = vrot.slane %v4869, 5
      %v5341 = vsel %vm947, %v5339, %v5340
      %v5342 = vrot.slane %v5340, 4
      %v5343 = vrot.slane %v4870, 5
      %v5344 = vsel %vm947, %v5342, %v5343
      %v5345 = vrot.slane %v5289, 5
      %v5346 = vrot.slane %v5345, 4
      %v5347 = vrot.slane %v4872, 5
      %v5348 = vsel %vm947, %v5346, %v5347
      %v5349 = vrot.slane %v5347, 4
      %v5350 = vrot.slane %v4873, 5
      %v5351 = vsel %vm947, %v5349, %v5350
      %v5352 = vrot.slane %v5290, 5
      %v5353 = vrot.slane %v5352, 4
      %v5354 = vrot.slane %v4875, 5
      %v5355 = vsel %vm947, %v5353, %v5354
      %v5356 = vrot.slane %v5354, 4
      %v5357 = vrot.slane %v4876, 5
      %v5358 = vsel %vm947, %v5356, %v5357
      %v5359 = vrot.slane %v5291, 5
      %v5360 = vrot.slane %v5359, 4
      %v5361 = vrot.slane %v4878, 5
      %v5362 = vsel %vm947, %v5360, %v5361
      %v5363 = vrot.slane %v5361, 4
      %v5364 = vrot.slane %v4879, 5
      %v5365 = vsel %vm947, %v5363, %v5364
      %v5366 = vrot.slane %v5292, 5
      %v5367 = vrot.slane %v5366, 4
      %v5368 = vrot.slane %v4881, 5
      %v5369 = vsel %vm947, %v5367, %v5368
      %v5370 = vrot.slane %v5368, 4
      %v5371 = vrot.slane %v4882, 5
      %v5372 = vsel %vm947, %v5370, %v5371
      %s5373 = scalar_lea.vmem %s3, 320
      %v5374 = vld [vmem:[%s5373] sm:$0xf]
      %v5375 = vld [vmem:[%s5373 + $0x4] sm:$0xf]
      %v5376 = vld [vmem:[%s5373 + $0x8] sm:$0xf]
      %v5377 = vld [vmem:[%s5373 + $0xc] sm:$0xf]
      %v5378 = vld [vmem:[%s5373 + $0x10] sm:$0xf]
      %v5379 = vld [vmem:[%s5373 + $0x14] sm:$0xf]
      %v5380 = vld [vmem:[%s5373 + $0x18] sm:$0xf]
      %v5381 = vld [vmem:[%s5373 + $0x1c] sm:$0xf]
      %v5382 = vld [vmem:[%s5373 + $0x20] sm:$0xf]
      %v5383 = vld [vmem:[%s5373 + $0x24] sm:$0xf]
      %v5384 = vld [vmem:[%s5373 + $0x28] sm:$0xf]
      %v5385 = vld [vmem:[%s5373 + $0x2c] sm:$0xf]
      %v5386 = vld [vmem:[%s5373 + $0x30] sm:$0xf]
      %v5387 = vld [vmem:[%s5373 + $0x34] sm:$0xf]
      %v5388 = vld [vmem:[%s5373 + $0x38] sm:$0xf]
      %v5389 = vld [vmem:[%s5373 + $0x3c] sm:$0xf]
      %v5390 = vunpack.c.l.b16 %v5320
      %v5391 = vunpack.c.l.b16 %v5323
      %v5392 = vunpack.c.l.b16 %v5327
      %v5393 = vunpack.c.l.b16 %v5330
      %v5394 = vunpack.c.l.b16 %v5334
      %v5395 = vunpack.c.l.b16 %v5337
      %v5396 = vunpack.c.l.b16 %v5341
      %v5397 = vunpack.c.l.b16 %v5344
      %v5398 = vunpack.c.l.b16 %v5348
      %v5399 = vunpack.c.l.b16 %v5351
      %v5400 = vunpack.c.l.b16 %v5355
      %v5401 = vunpack.c.l.b16 %v5358
      %v5402 = vunpack.c.l.b16 %v5362
      %v5403 = vunpack.c.l.b16 %v5365
      %v5404 = vunpack.c.l.b16 %v5369
      %v5405 = vunpack.c.l.b16 %v5372
      %v5406 = vpack.c.b16 %v5391, %v5390
      %v5407 = vpack.c.b16 %v5393, %v5392
      %v5408 = vpack.c.b16 %v5395, %v5394
      %v5409 = vpack.c.b16 %v5397, %v5396
      %v5410 = vpack.c.b16 %v5399, %v5398
      %v5411 = vpack.c.b16 %v5401, %v5400
      %v5412 = vpack.c.b16 %v5403, %v5402
      %v5413 = vpack.c.b16 %v5405, %v5404
      %v5438 = vunpack.c.l.b16 %v5374
      %v5439 = vunpack.c.l.b16 %v5375
      %v5440 = vunpack.c.l.b16 %v5376
      %v5441 = vunpack.c.l.b16 %v5377
      %v5442 = vunpack.c.l.b16 %v5378
      %v5443 = vunpack.c.l.b16 %v5379
      %v5444 = vunpack.c.l.b16 %v5380
      %v5445 = vunpack.c.l.b16 %v5381
      %v5446 = vunpack.c.l.b16 %v5382
      %v5447 = vunpack.c.l.b16 %v5383
      %v5448 = vunpack.c.l.b16 %v5384
      %v5449 = vunpack.c.l.b16 %v5385
      %v5450 = vunpack.c.l.b16 %v5386
      %v5451 = vunpack.c.l.b16 %v5387
      %v5452 = vunpack.c.l.b16 %v5388
      %v5453 = vunpack.c.l.b16 %v5389
      %v5454 = vpack.c.b16 %v5439, %v5438
      %v5455 = vpack.c.b16 %v5441, %v5440
      %v5456 = vpack.c.b16 %v5443, %v5442
      %v5457 = vpack.c.b16 %v5445, %v5444
      %v5458 = vpack.c.b16 %v5447, %v5446
      %v5459 = vpack.c.b16 %v5449, %v5448
      %v5460 = vpack.c.b16 %v5451, %v5450
      %v5461 = vpack.c.b16 %v5453, %v5452
      %5470 = vmatprep.subr.bf16.mxu0 0
      %5471 = vmatpush1.bf16.msra.mxu0 %v5454
      %5472 = vmatprep.subr.bf16.mxu0 0
      %5473 = vmatpush1.bf16.msra.mxu0 %v5455
      %5474 = vmatprep.subr.bf16.mxu0 0
      %5475 = vmatpush1.bf16.msra.mxu0 %v5456
      %5476 = vmatprep.subr.bf16.mxu0 0
      %5477 = vmatpush1.bf16.msra.mxu0 %v5457
      %5478 = vmatprep.subr.bf16.mxu0 0
      %5479 = vmatpush1.bf16.msra.mxu0 %v5458
      %5480 = vmatprep.subr.bf16.mxu0 0
      %5481 = vmatpush1.bf16.msra.mxu0 %v5459
      %5482 = vmatprep.subr.bf16.mxu0 0
      %5483 = vmatpush1.bf16.msra.mxu0 %v5460
      %5484 = vmatprep.subr.bf16.mxu0 0
      %5485 = vmatpush1.bf16.msra.mxu0 %v5461
      %5486 = vmatprep.subr.bf16.mxu0 0
      %5487 = vmatpush1.bf16.msra.mxu0 0
      %5488 = vmatprep.subr.bf16.mxu0 0
      %5489 = vmatpush1.bf16.msra.mxu0 0
      %5490 = vmatprep.subr.bf16.mxu0 0
      %5491 = vmatpush1.bf16.msra.mxu0 0
      %5492 = vmatprep.subr.bf16.mxu0 0
      %5493 = vmatpush1.bf16.msra.mxu0 0
      %5494 = vmatprep.subr.bf16.mxu0 0
      %5495 = vmatpush1.bf16.msra.mxu0 0
      %5496 = vmatprep.subr.bf16.mxu0 0
      %5497 = vmatpush1.bf16.msra.mxu0 0
      %5498 = vmatprep.subr.bf16.mxu0 0
      %5499 = vmatpush1.bf16.msra.mxu0 0
      %5500 = vmatprep.subr.bf16.mxu0 0
      %5501 = vmatpush1.bf16.msra.mxu0 0
      %5502 = vmatprep.mubr.bf16.mxu0 0
      %5503 = vmatmul.mubr.bf16.gmra.mrb[0].mxu0 %v5406
      %v5504 = vpop.f32.mrb[0].mxu0
      %v5505 = vadd.f32 0.0, %v5504
      %v5506 = vpop.f32.mrb[0].mxu0
      %v5507 = vpop.f32.mrb[0].mxu0
      %v5508 = vadd.f32 0.0, %v5507
      %v5509 = vpop.f32.mrb[0].mxu0
      %5510 = vmatprep.mubr.bf16.mxu0 0
      %5511 = vmatmul.mubr.bf16.gmra.mrb[0].mxu0 %v5407
      %v5512 = vpop.f32.mrb[0].mxu0
      %v5513 = vadd.f32 0.0, %v5512
      %v5514 = vpop.f32.mrb[0].mxu0
      %v5515 = vpop.f32.mrb[0].mxu0
      %v5516 = vadd.f32 0.0, %v5515
      %v5517 = vpop.f32.mrb[0].mxu0
      %5518 = vmatprep.mubr.bf16.mxu0 0
      %5519 = vmatmul.mubr.bf16.gmra.mrb[0].mxu0 %v5408
      %v5520 = vpop.f32.mrb[0].mxu0
      %v5521 = vadd.f32 0.0, %v5520
      %v5522 = vpop.f32.mrb[0].mxu0
      %v5523 = vpop.f32.mrb[0].mxu0
      %v5524 = vadd.f32 0.0, %v5523
      %v5525 = vpop.f32.mrb[0].mxu0
      %5526 = vmatprep.mubr.bf16.mxu0 0
      %5527 = vmatmul.mubr.bf16.gmra.mrb[0].mxu0 %v5409
      %v5528 = vpop.f32.mrb[0].mxu0
      %v5529 = vadd.f32 0.0, %v5528
      %v5530 = vpop.f32.mrb[0].mxu0
      %v5531 = vpop.f32.mrb[0].mxu0
      %v5532 = vadd.f32 0.0, %v5531
      %v5533 = vpop.f32.mrb[0].mxu0
      %5534 = vmatprep.mubr.bf16.mxu0 0
      %5535 = vmatmul.mubr.bf16.gmra.mrb[0].mxu0 %v5410
      %v5536 = vpop.f32.mrb[0].mxu0
      %v5537 = vadd.f32 0.0, %v5536
      %v5538 = vpop.f32.mrb[0].mxu0
      %v5539 = vpop.f32.mrb[0].mxu0
      %v5540 = vadd.f32 0.0, %v5539
      %v5541 = vpop.f32.mrb[0].mxu0
      %5542 = vmatprep.mubr.bf16.mxu0 0
      %5543 = vmatmul.mubr.bf16.gmra.mrb[0].mxu0 %v5411
      %v5544 = vpop.f32.mrb[0].mxu0
      %v5545 = vadd.f32 0.0, %v5544
      %v5546 = vpop.f32.mrb[0].mxu0
      %v5547 = vpop.f32.mrb[0].mxu0
      %v5548 = vadd.f32 0.0, %v5547
      %v5549 = vpop.f32.mrb[0].mxu0
      %5550 = vmatprep.mubr.bf16.mxu0 0
      %5551 = vmatmul.mubr.bf16.gmra.mrb[0].mxu0 %v5412
      %v5552 = vpop.f32.mrb[0].mxu0
      %v5553 = vadd.f32 0.0, %v5552
      %v5554 = vpop.f32.mrb[0].mxu0
      %v5555 = vpop.f32.mrb[0].mxu0
      %v5556 = vadd.f32 0.0, %v5555
      %v5557 = vpop.f32.mrb[0].mxu0
      %5558 = vmatprep.mubr.bf16.mxu0 0
      %5559 = vmatmul.mubr.bf16.gmra.mrb[0].mxu0 %v5413
      %v5560 = vpop.f32.mrb[0].mxu0
      %v5561 = vadd.f32 0.0, %v5560
      %v5562 = vpop.f32.mrb[0].mxu0
      %v5563 = vpop.f32.mrb[0].mxu0
      %v5564 = vadd.f32 0.0, %v5563
      %v5565 = vpop.f32.mrb[0].mxu0
      %5566 = vdwg.mxu0
      %v5567 = vadd.f32 %v5269, %v5505
      %v5568 = vadd.f32 %v5270, %v5508
      %v5569 = vadd.f32 %v5271, %v5513
      %v5570 = vadd.f32 %v5272, %v5516
      %v5571 = vadd.f32 %v5273, %v5521
      %v5572 = vadd.f32 %v5274, %v5524
      %v5573 = vadd.f32 %v5275, %v5529
      %v5574 = vadd.f32 %v5276, %v5532
      %v5575 = vadd.f32 %v5277, %v5537
      %v5576 = vadd.f32 %v5278, %v5540
      %v5577 = vadd.f32 %v5279, %v5545
      %v5578 = vadd.f32 %v5280, %v5548
      %v5579 = vadd.f32 %v5281, %v5553
      %v5580 = vadd.f32 %v5282, %v5556
      %v5581 = vadd.f32 %v5283, %v5561
      %v5582 = vadd.f32 %v5284, %v5564
      %s5583 = scalar_lea.vmem [#allocation2], 24
      %v5584 = vld [vmem:[%s5583] sm:$0xf]
      %v5585 = vld [vmem:[%s5583 + $0x4] sm:$0xf]
      %v5586 = vld [vmem:[%s5583 + $0xc] sm:$0xf]
      %v5587 = vld [vmem:[%s5583 + $0x10] sm:$0xf]
      %v5588 = vld [vmem:[%s5583 + $0x18] sm:$0xf]
      %v5589 = vld [vmem:[%s5583 + $0x1c] sm:$0xf]
      %v5590 = vld [vmem:[%s5583 + $0x24] sm:$0xf]
      %v5591 = vld [vmem:[%s5583 + $0x28] sm:$0xf]
      %v5592 = vld [vmem:[%s5583 + $0x30] sm:$0xf]
      %v5593 = vld [vmem:[%s5583 + $0x34] sm:$0xf]
      %v5594 = vld [vmem:[%s5583 + $0x3c] sm:$0xf]
      %v5595 = vld [vmem:[%s5583 + $0x40] sm:$0xf]
      %v5596 = vld [vmem:[%s5583 + $0x48] sm:$0xf]
      %v5597 = vld [vmem:[%s5583 + $0x4c] sm:$0xf]
      %v5598 = vld [vmem:[%s5583 + $0x54] sm:$0xf]
      %v5599 = vld [vmem:[%s5583 + $0x58] sm:$0xf]
      %s5600 = scalar_lea.vmem %s3, 384
      %v5601 = vld [vmem:[%s5600] sm:$0xf]
      %v5602 = vld [vmem:[%s5600 + $0x4] sm:$0xf]
      %v5603 = vld [vmem:[%s5600 + $0x8] sm:$0xf]
      %v5604 = vld [vmem:[%s5600 + $0xc] sm:$0xf]
      %v5605 = vld [vmem:[%s5600 + $0x10] sm:$0xf]
      %v5606 = vld [vmem:[%s5600 + $0x14] sm:$0xf]
      %v5607 = vld [vmem:[%s5600 + $0x18] sm:$0xf]
      %v5608 = vld [vmem:[%s5600 + $0x1c] sm:$0xf]
      %v5609 = vld [vmem:[%s5600 + $0x20] sm:$0xf]
      %v5610 = vld [vmem:[%s5600 + $0x24] sm:$0xf]
      %v5611 = vld [vmem:[%s5600 + $0x28] sm:$0xf]
      %v5612 = vld [vmem:[%s5600 + $0x2c] sm:$0xf]
      %v5613 = vld [vmem:[%s5600 + $0x30] sm:$0xf]
      %v5614 = vld [vmem:[%s5600 + $0x34] sm:$0xf]
      %v5615 = vld [vmem:[%s5600 + $0x38] sm:$0xf]
      %v5616 = vld [vmem:[%s5600 + $0x3c] sm:$0xf]
      %v5633 = vunpack.c.l.b16 %v5584
      %v5634 = vunpack.c.l.b16 %v5585
      %v5635 = vunpack.c.l.b16 %v5586
      %v5636 = vunpack.c.l.b16 %v5587
      %v5637 = vunpack.c.l.b16 %v5588
      %v5638 = vunpack.c.l.b16 %v5589
      %v5639 = vunpack.c.l.b16 %v5590
      %v5640 = vunpack.c.l.b16 %v5591
      %v5641 = vunpack.c.l.b16 %v5592
      %v5642 = vunpack.c.l.b16 %v5593
      %v5643 = vunpack.c.l.b16 %v5594
      %v5644 = vunpack.c.l.b16 %v5595
      %v5645 = vunpack.c.l.b16 %v5596
      %v5646 = vunpack.c.l.b16 %v5597
      %v5647 = vunpack.c.l.b16 %v5598
      %v5648 = vunpack.c.l.b16 %v5599
      %v5649 = vpack.c.b16 %v5634, %v5633
      %v5650 = vpack.c.b16 %v5636, %v5635
      %v5651 = vpack.c.b16 %v5638, %v5637
      %v5652 = vpack.c.b16 %v5640, %v5639
      %v5653 = vpack.c.b16 %v5642, %v5641
      %v5654 = vpack.c.b16 %v5644, %v5643
      %v5655 = vpack.c.b16 %v5646, %v5645
      %v5656 = vpack.c.b16 %v5648, %v5647
      %v5681 = vunpack.c.l.b16 %v5601
      %v5682 = vunpack.c.l.b16 %v5602
      %v5683 = vunpack.c.l.b16 %v5603
      %v5684 = vunpack.c.l.b16 %v5604
      %v5685 = vunpack.c.l.b16 %v5605
      %v5686 = vunpack.c.l.b16 %v5606
      %v5687 = vunpack.c.l.b16 %v5607
      %v5688 = vunpack.c.l.b16 %v5608
      %v5689 = vunpack.c.l.b16 %v5609
      %v5690 = vunpack.c.l.b16 %v5610
      %v5691 = vunpack.c.l.b16 %v5611
      %v5692 = vunpack.c.l.b16 %v5612
      %v5693 = vunpack.c.l.b16 %v5613
      %v5694 = vunpack.c.l.b16 %v5614
      %v5695 = vunpack.c.l.b16 %v5615
      %v5696 = vunpack.c.l.b16 %v5616
      %v5697 = vpack.c.b16 %v5682, %v5681
      %v5698 = vpack.c.b16 %v5684, %v5683
      %v5699 = vpack.c.b16 %v5686, %v5685
      %v5700 = vpack.c.b16 %v5688, %v5687
      %v5701 = vpack.c.b16 %v5690, %v5689
      %v5702 = vpack.c.b16 %v5692, %v5691
      %v5703 = vpack.c.b16 %v5694, %v5693
      %v5704 = vpack.c.b16 %v5696, %v5695
      %5713 = vmatprep.subr.bf16.mxu0 0
      %5714 = vmatpush1.bf16.msra.mxu0 %v5697
      %5715 = vmatprep.subr.bf16.mxu0 0
      %5716 = vmatpush1.bf16.msra.mxu0 %v5698
      %5717 = vmatprep.subr.bf16.mxu0 0
      %5718 = vmatpush1.bf16.msra.mxu0 %v5699
      %5719 = vmatprep.subr.bf16.mxu0 0
      %5720 = vmatpush1.bf16.msra.mxu0 %v5700
      %5721 = vmatprep.subr.bf16.mxu0 0
      %5722 = vmatpush1.bf16.msra.mxu0 %v5701
      %5723 = vmatprep.subr.bf16.mxu0 0
      %5724 = vmatpush1.bf16.msra.mxu0 %v5702
      %5725 = vmatprep.subr.bf16.mxu0 0
      %5726 = vmatpush1.bf16.msra.mxu0 %v5703
      %5727 = vmatprep.subr.bf16.mxu0 0
      %5728 = vmatpush1.bf16.msra.mxu0 %v5704
      %5729 = vmatprep.subr.bf16.mxu0 0
      %5730 = vmatpush1.bf16.msra.mxu0 0
      %5731 = vmatprep.subr.bf16.mxu0 0
      %5732 = vmatpush1.bf16.msra.mxu0 0
      %5733 = vmatprep.subr.bf16.mxu0 0
      %5734 = vmatpush1.bf16.msra.mxu0 0
      %5735 = vmatprep.subr.bf16.mxu0 0
      %5736 = vmatpush1.bf16.msra.mxu0 0
      %5737 = vmatprep.subr.bf16.mxu0 0
      %5738 = vmatpush1.bf16.msra.mxu0 0
      %5739 = vmatprep.subr.bf16.mxu0 0
      %5740 = vmatpush1.bf16.msra.mxu0 0
      %5741 = vmatprep.subr.bf16.mxu0 0
      %5742 = vmatpush1.bf16.msra.mxu0 0
      %5743 = vmatprep.subr.bf16.mxu0 0
      %5744 = vmatpush1.bf16.msra.mxu0 0
      %5745 = vmatprep.mubr.bf16.mxu0 0
      %5746 = vmatmul.mubr.bf16.gmra.mrb[0].mxu0 %v5649
      %v5747 = vpop.f32.mrb[0].mxu0
      %v5748 = vadd.f32 0.0, %v5747
      %v5749 = vpop.f32.mrb[0].mxu0
      %v5750 = vpop.f32.mrb[0].mxu0
      %v5751 = vadd.f32 0.0, %v5750
      %v5752 = vpop.f32.mrb[0].mxu0
      %5753 = vmatprep.mubr.bf16.mxu0 0
      %5754 = vmatmul.mubr.bf16.gmra.mrb[0].mxu0 %v5650
      %v5755 = vpop.f32.mrb[0].mxu0
      %v5756 = vadd.f32 0.0, %v5755
      %v5757 = vpop.f32.mrb[0].mxu0
      %v5758 = vpop.f32.mrb[0].mxu0
      %v5759 = vadd.f32 0.0, %v5758
      %v5760 = vpop.f32.mrb[0].mxu0
      %5761 = vmatprep.mubr.bf16.mxu0 0
      %5762 = vmatmul.mubr.bf16.gmra.mrb[0].mxu0 %v5651
      %v5763 = vpop.f32.mrb[0].mxu0
      %v5764 = vadd.f32 0.0, %v5763
      %v5765 = vpop.f32.mrb[0].mxu0
      %v5766 = vpop.f32.mrb[0].mxu0
      %v5767 = vadd.f32 0.0, %v5766
      %v5768 = vpop.f32.mrb[0].mxu0
      %5769 = vmatprep.mubr.bf16.mxu0 0
      %5770 = vmatmul.mubr.bf16.gmra.mrb[0].mxu0 %v5652
      %v5771 = vpop.f32.mrb[0].mxu0
      %v5772 = vadd.f32 0.0, %v5771
      %v5773 = vpop.f32.mrb[0].mxu0
      %v5774 = vpop.f32.mrb[0].mxu0
      %v5775 = vadd.f32 0.0, %v5774
      %v5776 = vpop.f32.mrb[0].mxu0
      %5777 = vmatprep.mubr.bf16.mxu0 0
      %5778 = vmatmul.mubr.bf16.gmra.mrb[0].mxu0 %v5653
      %v5779 = vpop.f32.mrb[0].mxu0
      %v5780 = vadd.f32 0.0, %v5779
      %v5781 = vpop.f32.mrb[0].mxu0
      %v5782 = vpop.f32.mrb[0].mxu0
      %v5783 = vadd.f32 0.0, %v5782
      %v5784 = vpop.f32.mrb[0].mxu0
      %5785 = vmatprep.mubr.bf16.mxu0 0
      %5786 = vmatmul.mubr.bf16.gmra.mrb[0].mxu0 %v5654
      %v5787 = vpop.f32.mrb[0].mxu0
      %v5788 = vadd.f32 0.0, %v5787
      %v5789 = vpop.f32.mrb[0].mxu0
      %v5790 = vpop.f32.mrb[0].mxu0
      %v5791 = vadd.f32 0.0, %v5790
      %v5792 = vpop.f32.mrb[0].mxu0
      %5793 = vmatprep.mubr.bf16.mxu0 0
      %5794 = vmatmul.mubr.bf16.gmra.mrb[0].mxu0 %v5655
      %v5795 = vpop.f32.mrb[0].mxu0
      %v5796 = vadd.f32 0.0, %v5795
      %v5797 = vpop.f32.mrb[0].mxu0
      %v5798 = vpop.f32.mrb[0].mxu0
      %v5799 = vadd.f32 0.0, %v5798
      %v5800 = vpop.f32.mrb[0].mxu0
      %5801 = vmatprep.mubr.bf16.mxu0 0
      %5802 = vmatmul.mubr.bf16.gmra.mrb[0].mxu0 %v5656
      %v5803 = vpop.f32.mrb[0].mxu0
      %v5804 = vadd.f32 0.0, %v5803
      %v5805 = vpop.f32.mrb[0].mxu0
      %v5806 = vpop.f32.mrb[0].mxu0
      %v5807 = vadd.f32 0.0, %v5806
      %v5808 = vpop.f32.mrb[0].mxu0
      %5809 = vdwg.mxu0
      %v5810 = vadd.f32 %v5567, %v5748
      %v5811 = vadd.f32 %v5568, %v5751
      %v5812 = vadd.f32 %v5569, %v5756
      %v5813 = vadd.f32 %v5570, %v5759
      %v5814 = vadd.f32 %v5571, %v5764
      %v5815 = vadd.f32 %v5572, %v5767
      %v5816 = vadd.f32 %v5573, %v5772
      %v5817 = vadd.f32 %v5574, %v5775
      %v5818 = vadd.f32 %v5575, %v5780
      %v5819 = vadd.f32 %v5576, %v5783
      %v5820 = vadd.f32 %v5577, %v5788
      %v5821 = vadd.f32 %v5578, %v5791
      %v5822 = vadd.f32 %v5579, %v5796
      %v5823 = vadd.f32 %v5580, %v5799
      %v5824 = vadd.f32 %v5581, %v5804
      %v5825 = vadd.f32 %v5582, %v5807
      %v5826 = vld [vmem:[%s5583] sm:$0xf]
      %v5827 = vld [vmem:[%s5583 + $0x4] sm:$0xf]
      %v5828 = vld [vmem:[%s5583 + $0x8] sm:$0x1]
      %v5829 = vld [vmem:[%s5583 + $0xc] sm:$0xf]
      %v5830 = vld [vmem:[%s5583 + $0x10] sm:$0xf]
      %v5831 = vld [vmem:[%s5583 + $0x14] sm:$0x1]
      %v5832 = vld [vmem:[%s5583 + $0x18] sm:$0xf]
      %v5833 = vld [vmem:[%s5583 + $0x1c] sm:$0xf]
      %v5834 = vld [vmem:[%s5583 + $0x20] sm:$0x1]
      %v5835 = vld [vmem:[%s5583 + $0x24] sm:$0xf]
      %v5836 = vld [vmem:[%s5583 + $0x28] sm:$0xf]
      %v5837 = vld [vmem:[%s5583 + $0x2c] sm:$0x1]
      %v5838 = vld [vmem:[%s5583 + $0x30] sm:$0xf]
      %v5839 = vld [vmem:[%s5583 + $0x34] sm:$0xf]
      %v5840 = vld [vmem:[%s5583 + $0x38] sm:$0x1]
      %v5841 = vld [vmem:[%s5583 + $0x3c] sm:$0xf]
      %v5842 = vld [vmem:[%s5583 + $0x40] sm:$0xf]
      %v5843 = vld [vmem:[%s5583 + $0x44] sm:$0x1]
      %v5844 = vld [vmem:[%s5583 + $0x48] sm:$0xf]
      %v5845 = vld [vmem:[%s5583 + $0x4c] sm:$0xf]
      %v5846 = vld [vmem:[%s5583 + $0x50] sm:$0x1]
      %v5847 = vld [vmem:[%s5583 + $0x54] sm:$0xf]
      %v5848 = vld [vmem:[%s5583 + $0x58] sm:$0xf]
      %v5849 = vld [vmem:[%s5583 + $0x5c] sm:$0x1]
      %v5851 = vshrl.u32 %v5826, 16
      %v5853 = vrot.slane %v5851, 4
      %v5854 = vshll.u32 %v5826, 16
      %v5856 = vrot.slane %v5854, 5
      %v5857 = vor.u32 %v5853, %v5856
      %v5858 = vrot.slane %v5857, 4
      %v5860 = vshll.u32 %v5827, 16
      %v5862 = vrot.slane %v5860, 5
      %v5863 = vsel %vm298, %v5858, %v5862
      %v5864 = vshrl.u32 %v5827, 16
      %v5866 = vrot.slane %v5864, 4
      %v5867 = vor.u32 %v5866, %v5862
      %v5868 = vrot.slane %v5867, 4
      %v5870 = vshll.u32 %v5828, 16
      %v5872 = vrot.slane %v5870, 5
      %v5873 = vsel %vm298, %v5868, %v5872
      %v5875 = vshrl.u32 %v5829, 16
      %v5877 = vrot.slane %v5875, 4
      %v5878 = vshll.u32 %v5829, 16
      %v5880 = vrot.slane %v5878, 5
      %v5881 = vor.u32 %v5877, %v5880
      %v5882 = vrot.slane %v5881, 4
      %v5884 = vshll.u32 %v5830, 16
      %v5886 = vrot.slane %v5884, 5
      %v5887 = vsel %vm298, %v5882, %v5886
      %v5888 = vshrl.u32 %v5830, 16
      %v5890 = vrot.slane %v5888, 4
      %v5891 = vor.u32 %v5890, %v5886
      %v5892 = vrot.slane %v5891, 4
      %v5894 = vshll.u32 %v5831, 16
      %v5896 = vrot.slane %v5894, 5
      %v5897 = vsel %vm298, %v5892, %v5896
      %v5899 = vshrl.u32 %v5832, 16
      %v5901 = vrot.slane %v5899, 4
      %v5902 = vshll.u32 %v5832, 16
      %v5904 = vrot.slane %v5902, 5
      %v5905 = vor.u32 %v5901, %v5904
      %v5906 = vrot.slane %v5905, 4
      %v5908 = vshll.u32 %v5833, 16
      %v5910 = vrot.slane %v5908, 5
      %v5911 = vsel %vm298, %v5906, %v5910
      %v5912 = vshrl.u32 %v5833, 16
      %v5914 = vrot.slane %v5912, 4
      %v5915 = vor.u32 %v5914, %v5910
      %v5916 = vrot.slane %v5915, 4
      %v5918 = vshll.u32 %v5834, 16
      %v5920 = vrot.slane %v5918, 5
      %v5921 = vsel %vm298, %v5916, %v5920
      %v5923 = vshrl.u32 %v5835, 16
      %v5925 = vrot.slane %v5923, 4
      %v5926 = vshll.u32 %v5835, 16
      %v5928 = vrot.slane %v5926, 5
      %v5929 = vor.u32 %v5925, %v5928
      %v5930 = vrot.slane %v5929, 4
      %v5932 = vshll.u32 %v5836, 16
      %v5934 = vrot.slane %v5932, 5
      %v5935 = vsel %vm298, %v5930, %v5934
      %v5936 = vshrl.u32 %v5836, 16
      %v5938 = vrot.slane %v5936, 4
      %v5939 = vor.u32 %v5938, %v5934
      %v5940 = vrot.slane %v5939, 4
      %v5942 = vshll.u32 %v5837, 16
      %v5944 = vrot.slane %v5942, 5
      %v5945 = vsel %vm298, %v5940, %v5944
      %v5947 = vshrl.u32 %v5838, 16
      %v5949 = vrot.slane %v5947, 4
      %v5950 = vshll.u32 %v5838, 16
      %v5952 = vrot.slane %v5950, 5
      %v5953 = vor.u32 %v5949, %v5952
      %v5954 = vrot.slane %v5953, 4
      %v5956 = vshll.u32 %v5839, 16
      %v5958 = vrot.slane %v5956, 5
      %v5959 = vsel %vm298, %v5954, %v5958
      %v5960 = vshrl.u32 %v5839, 16
      %v5962 = vrot.slane %v5960, 4
      %v5963 = vor.u32 %v5962, %v5958
      %v5964 = vrot.slane %v5963, 4
      %v5966 = vshll.u32 %v5840, 16
      %v5968 = vrot.slane %v5966, 5
      %v5969 = vsel %vm298, %v5964, %v5968
      %v5971 = vshrl.u32 %v5841, 16
      %v5973 = vrot.slane %v5971, 4
      %v5974 = vshll.u32 %v5841, 16
      %v5976 = vrot.slane %v5974, 5
      %v5977 = vor.u32 %v5973, %v5976
      %v5978 = vrot.slane %v5977, 4
      %v5980 = vshll.u32 %v5842, 16
      %v5982 = vrot.slane %v5980, 5
      %v5983 = vsel %vm298, %v5978, %v5982
      %v5984 = vshrl.u32 %v5842, 16
      %v5986 = vrot.slane %v5984, 4
      %v5987 = vor.u32 %v5986, %v5982
      %v5988 = vrot.slane %v5987, 4
      %v5990 = vshll.u32 %v5843, 16
      %v5992 = vrot.slane %v5990, 5
      %v5993 = vsel %vm298, %v5988, %v5992
      %v5995 = vshrl.u32 %v5844, 16
      %v5997 = vrot.slane %v5995, 4
      %v5998 = vshll.u32 %v5844, 16
      %v6000 = vrot.slane %v5998, 5
      %v6001 = vor.u32 %v5997, %v6000
      %v6002 = vrot.slane %v6001, 4
      %v6004 = vshll.u32 %v5845, 16
      %v6006 = vrot.slane %v6004, 5
      %v6007 = vsel %vm298, %v6002, %v6006
      %v6008 = vshrl.u32 %v5845, 16
      %v6010 = vrot.slane %v6008, 4
      %v6011 = vor.u32 %v6010, %v6006
      %v6012 = vrot.slane %v6011, 4
      %v6014 = vshll.u32 %v5846, 16
      %v6016 = vrot.slane %v6014, 5
      %v6017 = vsel %vm298, %v6012, %v6016
      %v6019 = vshrl.u32 %v5847, 16
      %v6021 = vrot.slane %v6019, 4
      %v6022 = vshll.u32 %v5847, 16
      %v6024 = vrot.slane %v6022, 5
      %v6025 = vor.u32 %v6021, %v6024
      %v6026 = vrot.slane %v6025, 4
      %v6028 = vshll.u32 %v5848, 16
      %v6030 = vrot.slane %v6028, 5
      %v6031 = vsel %vm298, %v6026, %v6030
      %v6032 = vshrl.u32 %v5848, 16
      %v6034 = vrot.slane %v6032, 4
      %v6035 = vor.u32 %v6034, %v6030
      %v6036 = vrot.slane %v6035, 4
      %v6038 = vshll.u32 %v5849, 16
      %v6040 = vrot.slane %v6038, 5
      %v6041 = vsel %vm298, %v6036, %v6040
      %s6042 = scalar_lea.vmem %s3, 448
      %v6043 = vld [vmem:[%s6042] sm:$0xf]
      %v6044 = vld [vmem:[%s6042 + $0x4] sm:$0xf]
      %v6045 = vld [vmem:[%s6042 + $0x8] sm:$0xf]
      %v6046 = vld [vmem:[%s6042 + $0xc] sm:$0xf]
      %v6047 = vld [vmem:[%s6042 + $0x10] sm:$0xf]
      %v6048 = vld [vmem:[%s6042 + $0x14] sm:$0xf]
      %v6049 = vld [vmem:[%s6042 + $0x18] sm:$0xf]
      %v6050 = vld [vmem:[%s6042 + $0x1c] sm:$0xf]
      %v6051 = vld [vmem:[%s6042 + $0x20] sm:$0xf]
      %v6052 = vld [vmem:[%s6042 + $0x24] sm:$0xf]
      %v6053 = vld [vmem:[%s6042 + $0x28] sm:$0xf]
      %v6054 = vld [vmem:[%s6042 + $0x2c] sm:$0xf]
      %v6055 = vld [vmem:[%s6042 + $0x30] sm:$0xf]
      %v6056 = vld [vmem:[%s6042 + $0x34] sm:$0xf]
      %v6057 = vld [vmem:[%s6042 + $0x38] sm:$0xf]
      %v6058 = vld [vmem:[%s6042 + $0x3c] sm:$0xf]
      %v6059 = vunpack.c.l.b16 %v5863
      %v6060 = vunpack.c.l.b16 %v5873
      %v6061 = vunpack.c.l.b16 %v5887
      %v6062 = vunpack.c.l.b16 %v5897
      %v6063 = vunpack.c.l.b16 %v5911
      %v6064 = vunpack.c.l.b16 %v5921
      %v6065 = vunpack.c.l.b16 %v5935
      %v6066 = vunpack.c.l.b16 %v5945
      %v6067 = vunpack.c.l.b16 %v5959
      %v6068 = vunpack.c.l.b16 %v5969
      %v6069 = vunpack.c.l.b16 %v5983
      %v6070 = vunpack.c.l.b16 %v5993
      %v6071 = vunpack.c.l.b16 %v6007
      %v6072 = vunpack.c.l.b16 %v6017
      %v6073 = vunpack.c.l.b16 %v6031
      %v6074 = vunpack.c.l.b16 %v6041
      %v6075 = vpack.c.b16 %v6060, %v6059
      %v6076 = vpack.c.b16 %v6062, %v6061
      %v6077 = vpack.c.b16 %v6064, %v6063
      %v6078 = vpack.c.b16 %v6066, %v6065
      %v6079 = vpack.c.b16 %v6068, %v6067
      %v6080 = vpack.c.b16 %v6070, %v6069
      %v6081 = vpack.c.b16 %v6072, %v6071
      %v6082 = vpack.c.b16 %v6074, %v6073
      %v6107 = vunpack.c.l.b16 %v6043
      %v6108 = vunpack.c.l.b16 %v6044
      %v6109 = vunpack.c.l.b16 %v6045
      %v6110 = vunpack.c.l.b16 %v6046
      %v6111 = vunpack.c.l.b16 %v6047
      %v6112 = vunpack.c.l.b16 %v6048
      %v6113 = vunpack.c.l.b16 %v6049
      %v6114 = vunpack.c.l.b16 %v6050
      %v6115 = vunpack.c.l.b16 %v6051
      %v6116 = vunpack.c.l.b16 %v6052
      %v6117 = vunpack.c.l.b16 %v6053
      %v6118 = vunpack.c.l.b16 %v6054
      %v6119 = vunpack.c.l.b16 %v6055
      %v6120 = vunpack.c.l.b16 %v6056
      %v6121 = vunpack.c.l.b16 %v6057
      %v6122 = vunpack.c.l.b16 %v6058
      %v6123 = vpack.c.b16 %v6108, %v6107
      %v6124 = vpack.c.b16 %v6110, %v6109
      %v6125 = vpack.c.b16 %v6112, %v6111
      %v6126 = vpack.c.b16 %v6114, %v6113
      %v6127 = vpack.c.b16 %v6116, %v6115
      %v6128 = vpack.c.b16 %v6118, %v6117
      %v6129 = vpack.c.b16 %v6120, %v6119
      %v6130 = vpack.c.b16 %v6122, %v6121
      %6139 = vmatprep.subr.bf16.mxu0 0
      %6140 = vmatpush1.bf16.msra.mxu0 %v6123
      %6141 = vmatprep.subr.bf16.mxu0 0
      %6142 = vmatpush1.bf16.msra.mxu0 %v6124
      %6143 = vmatprep.subr.bf16.mxu0 0
      %6144 = vmatpush1.bf16.msra.mxu0 %v6125
      %6145 = vmatprep.subr.bf16.mxu0 0
      %6146 = vmatpush1.bf16.msra.mxu0 %v6126
      %6147 = vmatprep.subr.bf16.mxu0 0
      %6148 = vmatpush1.bf16.msra.mxu0 %v6127
      %6149 = vmatprep.subr.bf16.mxu0 0
      %6150 = vmatpush1.bf16.msra.mxu0 %v6128
      %6151 = vmatprep.subr.bf16.mxu0 0
      %6152 = vmatpush1.bf16.msra.mxu0 %v6129
      %6153 = vmatprep.subr.bf16.mxu0 0
      %6154 = vmatpush1.bf16.msra.mxu0 %v6130
      %6155 = vmatprep.subr.bf16.mxu0 0
      %6156 = vmatpush1.bf16.msra.mxu0 0
      %6157 = vmatprep.subr.bf16.mxu0 0
      %6158 = vmatpush1.bf16.msra.mxu0 0
      %6159 = vmatprep.subr.bf16.mxu0 0
      %6160 = vmatpush1.bf16.msra.mxu0 0
      %6161 = vmatprep.subr.bf16.mxu0 0
      %6162 = vmatpush1.bf16.msra.mxu0 0
      %6163 = vmatprep.subr.bf16.mxu0 0
      %6164 = vmatpush1.bf16.msra.mxu0 0
      %6165 = vmatprep.subr.bf16.mxu0 0
      %6166 = vmatpush1.bf16.msra.mxu0 0
      %6167 = vmatprep.subr.bf16.mxu0 0
      %6168 = vmatpush1.bf16.msra.mxu0 0
      %6169 = vmatprep.subr.bf16.mxu0 0
      %6170 = vmatpush1.bf16.msra.mxu0 0
      %6171 = vmatprep.mubr.bf16.mxu0 0
      %6172 = vmatmul.mubr.bf16.gmra.mrb[0].mxu0 %v6075
      %v6173 = vpop.f32.mrb[0].mxu0
      %v6174 = vadd.f32 0.0, %v6173
      %v6175 = vpop.f32.mrb[0].mxu0
      %v6176 = vpop.f32.mrb[0].mxu0
      %v6177 = vadd.f32 0.0, %v6176
      %v6178 = vpop.f32.mrb[0].mxu0
      %6179 = vmatprep.mubr.bf16.mxu0 0
      %6180 = vmatmul.mubr.bf16.gmra.mrb[0].mxu0 %v6076
      %v6181 = vpop.f32.mrb[0].mxu0
      %v6182 = vadd.f32 0.0, %v6181
      %v6183 = vpop.f32.mrb[0].mxu0
      %v6184 = vpop.f32.mrb[0].mxu0
      %v6185 = vadd.f32 0.0, %v6184
      %v6186 = vpop.f32.mrb[0].mxu0
      %6187 = vmatprep.mubr.bf16.mxu0 0
      %6188 = vmatmul.mubr.bf16.gmra.mrb[0].mxu0 %v6077
      %v6189 = vpop.f32.mrb[0].mxu0
      %v6190 = vadd.f32 0.0, %v6189
      %v6191 = vpop.f32.mrb[0].mxu0
      %v6192 = vpop.f32.mrb[0].mxu0
      %v6193 = vadd.f32 0.0, %v6192
      %v6194 = vpop.f32.mrb[0].mxu0
      %6195 = vmatprep.mubr.bf16.mxu0 0
      %6196 = vmatmul.mubr.bf16.gmra.mrb[0].mxu0 %v6078
      %v6197 = vpop.f32.mrb[0].mxu0
      %v6198 = vadd.f32 0.0, %v6197
      %v6199 = vpop.f32.mrb[0].mxu0
      %v6200 = vpop.f32.mrb[0].mxu0
      %v6201 = vadd.f32 0.0, %v6200
      %v6202 = vpop.f32.mrb[0].mxu0
      %6203 = vmatprep.mubr.bf16.mxu0 0
      %6204 = vmatmul.mubr.bf16.gmra.mrb[0].mxu0 %v6079
      %v6205 = vpop.f32.mrb[0].mxu0
      %v6206 = vadd.f32 0.0, %v6205
      %v6207 = vpop.f32.mrb[0].mxu0
      %v6208 = vpop.f32.mrb[0].mxu0
      %v6209 = vadd.f32 0.0, %v6208
      %v6210 = vpop.f32.mrb[0].mxu0
      %6211 = vmatprep.mubr.bf16.mxu0 0
      %6212 = vmatmul.mubr.bf16.gmra.mrb[0].mxu0 %v6080
      %v6213 = vpop.f32.mrb[0].mxu0
      %v6214 = vadd.f32 0.0, %v6213
      %v6215 = vpop.f32.mrb[0].mxu0
      %v6216 = vpop.f32.mrb[0].mxu0
      %v6217 = vadd.f32 0.0, %v6216
      %v6218 = vpop.f32.mrb[0].mxu0
      %6219 = vmatprep.mubr.bf16.mxu0 0
      %6220 = vmatmul.mubr.bf16.gmra.mrb[0].mxu0 %v6081
      %v6221 = vpop.f32.mrb[0].mxu0
      %v6222 = vadd.f32 0.0, %v6221
      %v6223 = vpop.f32.mrb[0].mxu0
      %v6224 = vpop.f32.mrb[0].mxu0
      %v6225 = vadd.f32 0.0, %v6224
      %v6226 = vpop.f32.mrb[0].mxu0
      %6227 = vmatprep.mubr.bf16.mxu0 0
      %6228 = vmatmul.mubr.bf16.gmra.mrb[0].mxu0 %v6082
      %v6229 = vpop.f32.mrb[0].mxu0
      %v6230 = vadd.f32 0.0, %v6229
      %v6231 = vpop.f32.mrb[0].mxu0
      %v6232 = vpop.f32.mrb[0].mxu0
      %v6233 = vadd.f32 0.0, %v6232
      %v6234 = vpop.f32.mrb[0].mxu0
      %6235 = vdwg.mxu0
      %v6236 = vadd.f32 %v5810, %v6174
      %v6237 = vadd.f32 %v5811, %v6177
      %v6238 = vadd.f32 %v5812, %v6182
      %v6239 = vadd.f32 %v5813, %v6185
      %v6240 = vadd.f32 %v5814, %v6190
      %v6241 = vadd.f32 %v5815, %v6193
      %v6242 = vadd.f32 %v5816, %v6198
      %v6243 = vadd.f32 %v5817, %v6201
      %v6244 = vadd.f32 %v5818, %v6206
      %v6245 = vadd.f32 %v5819, %v6209
      %v6246 = vadd.f32 %v5820, %v6214
      %v6247 = vadd.f32 %v5821, %v6217
      %v6248 = vadd.f32 %v5822, %v6222
      %v6249 = vadd.f32 %v5823, %v6225
      %v6250 = vadd.f32 %v5824, %v6230
      %v6251 = vadd.f32 %v5825, %v6233
      %v6252 = vld [vmem:[%s5583] sm:$0xe]
      %v6253 = vld [vmem:[%s5583 + $0xc] sm:$0xe]
      %v6254 = vld [vmem:[%s5583 + $0x18] sm:$0xe]
      %v6255 = vld [vmem:[%s5583 + $0x24] sm:$0xe]
      %v6256 = vld [vmem:[%s5583 + $0x30] sm:$0xe]
      %v6257 = vld [vmem:[%s5583 + $0x3c] sm:$0xe]
      %v6258 = vld [vmem:[%s5583 + $0x48] sm:$0xe]
      %v6259 = vld [vmem:[%s5583 + $0x54] sm:$0xe]
      %v6284 = vrot.slane %v6252, 5
      %v6285 = vrot.slane %v6284, 4
      %v6286 = vrot.slane %v5827, 5
      %v6287 = vsel %vm947, %v6285, %v6286
      %v6288 = vrot.slane %v6286, 4
      %v6289 = vrot.slane %v5828, 5
      %v6290 = vsel %vm947, %v6288, %v6289
      %v6291 = vrot.slane %v6253, 5
      %v6292 = vrot.slane %v6291, 4
      %v6293 = vrot.slane %v5830, 5
      %v6294 = vsel %vm947, %v6292, %v6293
      %v6295 = vrot.slane %v6293, 4
      %v6296 = vrot.slane %v5831, 5
      %v6297 = vsel %vm947, %v6295, %v6296
      %v6298 = vrot.slane %v6254, 5
      %v6299 = vrot.slane %v6298, 4
      %v6300 = vrot.slane %v5833, 5
      %v6301 = vsel %vm947, %v6299, %v6300
      %v6302 = vrot.slane %v6300, 4
      %v6303 = vrot.slane %v5834, 5
      %v6304 = vsel %vm947, %v6302, %v6303
      %v6305 = vrot.slane %v6255, 5
      %v6306 = vrot.slane %v6305, 4
      %v6307 = vrot.slane %v5836, 5
      %v6308 = vsel %vm947, %v6306, %v6307
      %v6309 = vrot.slane %v6307, 4
      %v6310 = vrot.slane %v5837, 5
      %v6311 = vsel %vm947, %v6309, %v6310
      %v6312 = vrot.slane %v6256, 5
      %v6313 = vrot.slane %v6312, 4
      %v6314 = vrot.slane %v5839, 5
      %v6315 = vsel %vm947, %v6313, %v6314
      %v6316 = vrot.slane %v6314, 4
      %v6317 = vrot.slane %v5840, 5
      %v6318 = vsel %vm947, %v6316, %v6317
      %v6319 = vrot.slane %v6257, 5
      %v6320 = vrot.slane %v6319, 4
      %v6321 = vrot.slane %v5842, 5
      %v6322 = vsel %vm947, %v6320, %v6321
      %v6323 = vrot.slane %v6321, 4
      %v6324 = vrot.slane %v5843, 5
      %v6325 = vsel %vm947, %v6323, %v6324
      %v6326 = vrot.slane %v6258, 5
      %v6327 = vrot.slane %v6326, 4
      %v6328 = vrot.slane %v5845, 5
      %v6329 = vsel %vm947, %v6327, %v6328
      %v6330 = vrot.slane %v6328, 4
      %v6331 = vrot.slane %v5846, 5
      %v6332 = vsel %vm947, %v6330, %v6331
      %v6333 = vrot.slane %v6259, 5
      %v6334 = vrot.slane %v6333, 4
      %v6335 = vrot.slane %v5848, 5
      %v6336 = vsel %vm947, %v6334, %v6335
      %v6337 = vrot.slane %v6335, 4
      %v6338 = vrot.slane %v5849, 5
      %v6339 = vsel %vm947, %v6337, %v6338
      %s6340 = scalar_lea.vmem %s3, 512
      %v6341 = vld [vmem:[%s6340] sm:$0xf]
      %v6342 = vld [vmem:[%s6340 + $0x4] sm:$0xf]
      %v6343 = vld [vmem:[%s6340 + $0x8] sm:$0xf]
      %v6344 = vld [vmem:[%s6340 + $0xc] sm:$0xf]
      %v6345 = vld [vmem:[%s6340 + $0x10] sm:$0xf]
      %v6346 = vld [vmem:[%s6340 + $0x14] sm:$0xf]
      %v6347 = vld [vmem:[%s6340 + $0x18] sm:$0xf]
      %v6348 = vld [vmem:[%s6340 + $0x1c] sm:$0xf]
      %v6349 = vld [vmem:[%s6340 + $0x20] sm:$0xf]
      %v6350 = vld [vmem:[%s6340 + $0x24] sm:$0xf]
      %v6351 = vld [vmem:[%s6340 + $0x28] sm:$0xf]
      %v6352 = vld [vmem:[%s6340 + $0x2c] sm:$0xf]
      %v6353 = vld [vmem:[%s6340 + $0x30] sm:$0xf]
      %v6354 = vld [vmem:[%s6340 + $0x34] sm:$0xf]
      %v6355 = vld [vmem:[%s6340 + $0x38] sm:$0xf]
      %v6356 = vld [vmem:[%s6340 + $0x3c] sm:$0xf]
      %v6357 = vunpack.c.l.b16 %v6287
      %v6358 = vunpack.c.l.b16 %v6290
      %v6359 = vunpack.c.l.b16 %v6294
      %v6360 = vunpack.c.l.b16 %v6297
      %v6361 = vunpack.c.l.b16 %v6301
      %v6362 = vunpack.c.l.b16 %v6304
      %v6363 = vunpack.c.l.b16 %v6308
      %v6364 = vunpack.c.l.b16 %v6311
      %v6365 = vunpack.c.l.b16 %v6315
      %v6366 = vunpack.c.l.b16 %v6318
      %v6367 = vunpack.c.l.b16 %v6322
      %v6368 = vunpack.c.l.b16 %v6325
      %v6369 = vunpack.c.l.b16 %v6329
      %v6370 = vunpack.c.l.b16 %v6332
      %v6371 = vunpack.c.l.b16 %v6336
      %v6372 = vunpack.c.l.b16 %v6339
      %v6373 = vpack.c.b16 %v6358, %v6357
      %v6374 = vpack.c.b16 %v6360, %v6359
      %v6375 = vpack.c.b16 %v6362, %v6361
      %v6376 = vpack.c.b16 %v6364, %v6363
      %v6377 = vpack.c.b16 %v6366, %v6365
      %v6378 = vpack.c.b16 %v6368, %v6367
      %v6379 = vpack.c.b16 %v6370, %v6369
      %v6380 = vpack.c.b16 %v6372, %v6371
      %v6405 = vunpack.c.l.b16 %v6341
      %v6406 = vunpack.c.l.b16 %v6342
      %v6407 = vunpack.c.l.b16 %v6343
      %v6408 = vunpack.c.l.b16 %v6344
      %v6409 = vunpack.c.l.b16 %v6345
      %v6410 = vunpack.c.l.b16 %v6346
      %v6411 = vunpack.c.l.b16 %v6347
      %v6412 = vunpack.c.l.b16 %v6348
      %v6413 = vunpack.c.l.b16 %v6349
      %v6414 = vunpack.c.l.b16 %v6350
      %v6415 = vunpack.c.l.b16 %v6351
      %v6416 = vunpack.c.l.b16 %v6352
      %v6417 = vunpack.c.l.b16 %v6353
      %v6418 = vunpack.c.l.b16 %v6354
      %v6419 = vunpack.c.l.b16 %v6355
      %v6420 = vunpack.c.l.b16 %v6356
      %v6421 = vpack.c.b16 %v6406, %v6405
      %v6422 = vpack.c.b16 %v6408, %v6407
      %v6423 = vpack.c.b16 %v6410, %v6409
      %v6424 = vpack.c.b16 %v6412, %v6411
      %v6425 = vpack.c.b16 %v6414, %v6413
      %v6426 = vpack.c.b16 %v6416, %v6415
      %v6427 = vpack.c.b16 %v6418, %v6417
      %v6428 = vpack.c.b16 %v6420, %v6419
      %6437 = vmatprep.subr.bf16.mxu0 0
      %6438 = vmatpush1.bf16.msra.mxu0 %v6421
      %6439 = vmatprep.subr.bf16.mxu0 0
      %6440 = vmatpush1.bf16.msra.mxu0 %v6422
      %6441 = vmatprep.subr.bf16.mxu0 0
      %6442 = vmatpush1.bf16.msra.mxu0 %v6423
      %6443 = vmatprep.subr.bf16.mxu0 0
      %6444 = vmatpush1.bf16.msra.mxu0 %v6424
      %6445 = vmatprep.subr.bf16.mxu0 0
      %6446 = vmatpush1.bf16.msra.mxu0 %v6425
      %6447 = vmatprep.subr.bf16.mxu0 0
      %6448 = vmatpush1.bf16.msra.mxu0 %v6426
      %6449 = vmatprep.subr.bf16.mxu0 0
      %6450 = vmatpush1.bf16.msra.mxu0 %v6427
      %6451 = vmatprep.subr.bf16.mxu0 0
      %6452 = vmatpush1.bf16.msra.mxu0 %v6428
      %6453 = vmatprep.subr.bf16.mxu0 0
      %6454 = vmatpush1.bf16.msra.mxu0 0
      %6455 = vmatprep.subr.bf16.mxu0 0
      %6456 = vmatpush1.bf16.msra.mxu0 0
      %6457 = vmatprep.subr.bf16.mxu0 0
      %6458 = vmatpush1.bf16.msra.mxu0 0
      %6459 = vmatprep.subr.bf16.mxu0 0
      %6460 = vmatpush1.bf16.msra.mxu0 0
      %6461 = vmatprep.subr.bf16.mxu0 0
      %6462 = vmatpush1.bf16.msra.mxu0 0
      %6463 = vmatprep.subr.bf16.mxu0 0
      %6464 = vmatpush1.bf16.msra.mxu0 0
      %6465 = vmatprep.subr.bf16.mxu0 0
      %6466 = vmatpush1.bf16.msra.mxu0 0
      %6467 = vmatprep.subr.bf16.mxu0 0
      %6468 = vmatpush1.bf16.msra.mxu0 0
      %6469 = vmatprep.mubr.bf16.mxu0 0
      %6470 = vmatmul.mubr.bf16.gmra.mrb[0].mxu0 %v6373
      %v6471 = vpop.f32.mrb[0].mxu0
      %v6472 = vadd.f32 0.0, %v6471
      %v6473 = vpop.f32.mrb[0].mxu0
      %v6474 = vpop.f32.mrb[0].mxu0
      %v6475 = vadd.f32 0.0, %v6474
      %v6476 = vpop.f32.mrb[0].mxu0
      %6477 = vmatprep.mubr.bf16.mxu0 0
      %6478 = vmatmul.mubr.bf16.gmra.mrb[0].mxu0 %v6374
      %v6479 = vpop.f32.mrb[0].mxu0
      %v6480 = vadd.f32 0.0, %v6479
      %v6481 = vpop.f32.mrb[0].mxu0
      %v6482 = vpop.f32.mrb[0].mxu0
      %v6483 = vadd.f32 0.0, %v6482
      %v6484 = vpop.f32.mrb[0].mxu0
      %6485 = vmatprep.mubr.bf16.mxu0 0
      %6486 = vmatmul.mubr.bf16.gmra.mrb[0].mxu0 %v6375
      %v6487 = vpop.f32.mrb[0].mxu0
      %v6488 = vadd.f32 0.0, %v6487
      %v6489 = vpop.f32.mrb[0].mxu0
      %v6490 = vpop.f32.mrb[0].mxu0
      %v6491 = vadd.f32 0.0, %v6490
      %v6492 = vpop.f32.mrb[0].mxu0
      %6493 = vmatprep.mubr.bf16.mxu0 0
      %6494 = vmatmul.mubr.bf16.gmra.mrb[0].mxu0 %v6376
      %v6495 = vpop.f32.mrb[0].mxu0
      %v6496 = vadd.f32 0.0, %v6495
      %v6497 = vpop.f32.mrb[0].mxu0
      %v6498 = vpop.f32.mrb[0].mxu0
      %v6499 = vadd.f32 0.0, %v6498
      %v6500 = vpop.f32.mrb[0].mxu0
      %6501 = vmatprep.mubr.bf16.mxu0 0
      %6502 = vmatmul.mubr.bf16.gmra.mrb[0].mxu0 %v6377
      %v6503 = vpop.f32.mrb[0].mxu0
      %v6504 = vadd.f32 0.0, %v6503
      %v6505 = vpop.f32.mrb[0].mxu0
      %v6506 = vpop.f32.mrb[0].mxu0
      %v6507 = vadd.f32 0.0, %v6506
      %v6508 = vpop.f32.mrb[0].mxu0
      %6509 = vmatprep.mubr.bf16.mxu0 0
      %6510 = vmatmul.mubr.bf16.gmra.mrb[0].mxu0 %v6378
      %v6511 = vpop.f32.mrb[0].mxu0
      %v6512 = vadd.f32 0.0, %v6511
      %v6513 = vpop.f32.mrb[0].mxu0
      %v6514 = vpop.f32.mrb[0].mxu0
      %v6515 = vadd.f32 0.0, %v6514
      %v6516 = vpop.f32.mrb[0].mxu0
      %6517 = vmatprep.mubr.bf16.mxu0 0
      %6518 = vmatmul.mubr.bf16.gmra.mrb[0].mxu0 %v6379
      %v6519 = vpop.f32.mrb[0].mxu0
      %v6520 = vadd.f32 0.0, %v6519
      %v6521 = vpop.f32.mrb[0].mxu0
      %v6522 = vpop.f32.mrb[0].mxu0
      %v6523 = vadd.f32 0.0, %v6522
      %v6524 = vpop.f32.mrb[0].mxu0
      %6525 = vmatprep.mubr.bf16.mxu0 0
      %6526 = vmatmul.mubr.bf16.gmra.mrb[0].mxu0 %v6380
      %v6527 = vpop.f32.mrb[0].mxu0
      %v6528 = vadd.f32 0.0, %v6527
      %v6529 = vpop.f32.mrb[0].mxu0
      %v6530 = vpop.f32.mrb[0].mxu0
      %v6531 = vadd.f32 0.0, %v6530
      %v6532 = vpop.f32.mrb[0].mxu0
      %6533 = vdwg.mxu0
      %v6534 = vadd.f32 %v6236, %v6472
      %v6535 = vadd.f32 %v6237, %v6475
      %v6536 = vadd.f32 %v6238, %v6480
      %v6537 = vadd.f32 %v6239, %v6483
      %v6538 = vadd.f32 %v6240, %v6488
      %v6539 = vadd.f32 %v6241, %v6491
      %v6540 = vadd.f32 %v6242, %v6496
      %v6541 = vadd.f32 %v6243, %v6499
      %v6542 = vadd.f32 %v6244, %v6504
      %v6543 = vadd.f32 %v6245, %v6507
      %v6544 = vadd.f32 %v6246, %v6512
      %v6545 = vadd.f32 %v6247, %v6515
      %v6546 = vadd.f32 %v6248, %v6520
      %v6547 = vadd.f32 %v6249, %v6523
      %v6548 = vadd.f32 %v6250, %v6528
      %v6549 = vadd.f32 %v6251, %v6531
      %v6550 = vld [vmem:[%s4] sm:$0x1]
      %v6552 = vlaneseq
      %v6553 = vshrl.u32 %v6552, 7
      %v6554 = vsub.s32 0, %v6553
      %v6555 = vrot.slane %v6550, %v6554
      %v6557 = vadd.f32 %v6534, %v6555
      %v6558 = vadd.f32 %v6535, %v6555
      %v6559 = vadd.f32 %v6536, %v6555
      %v6560 = vadd.f32 %v6537, %v6555
      %v6561 = vadd.f32 %v6538, %v6555
      %v6562 = vadd.f32 %v6539, %v6555
      %v6563 = vadd.f32 %v6540, %v6555
      %v6564 = vadd.f32 %v6541, %v6555
      %v6565 = vadd.f32 %v6542, %v6555
      %v6566 = vadd.f32 %v6543, %v6555
      %v6567 = vadd.f32 %v6544, %v6555
      %v6568 = vadd.f32 %v6545, %v6555
      %v6569 = vadd.f32 %v6546, %v6555
      %v6570 = vadd.f32 %v6547, %v6555
      %v6571 = vadd.f32 %v6548, %v6555
      %v6572 = vadd.f32 %v6549, %v6555
      %v6573 = vmax.f32 %v6557, 0.0
      %v6574 = vmax.f32 %v6558, 0.0
      %v6575 = vmax.f32 %v6559, 0.0
      %v6576 = vmax.f32 %v6560, 0.0
      %v6577 = vmax.f32 %v6561, 0.0
      %v6578 = vmax.f32 %v6562, 0.0
      %v6579 = vmax.f32 %v6563, 0.0
      %v6580 = vmax.f32 %v6564, 0.0
      %v6581 = vmax.f32 %v6565, 0.0
      %v6582 = vmax.f32 %v6566, 0.0
      %v6583 = vmax.f32 %v6567, 0.0
      %v6584 = vmax.f32 %v6568, 0.0
      %v6585 = vmax.f32 %v6569, 0.0
      %v6586 = vmax.f32 %v6570, 0.0
      %v6587 = vmax.f32 %v6571, 0.0
      %v6588 = vmax.f32 %v6572, 0.0
      %6589 = vst [vmem:[%s262] sm:$0xff] %v6573
      %6590 = vst [vmem:[%s262 + $0x8] sm:$0xff] %v6574
      %6591 = vst [vmem:[%s262 + $0x10] sm:$0xff] %v6575
      %6592 = vst [vmem:[%s262 + $0x18] sm:$0xff] %v6576
      %6593 = vst [vmem:[%s262 + $0x20] sm:$0xff] %v6577
      %6594 = vst [vmem:[%s262 + $0x28] sm:$0xff] %v6578
      %6595 = vst [vmem:[%s262 + $0x30] sm:$0xff] %v6579
      %6596 = vst [vmem:[%s262 + $0x38] sm:$0xff] %v6580
      %6597 = vst [vmem:[%s262 + $0x40] sm:$0xff] %v6581
      %6598 = vst [vmem:[%s262 + $0x48] sm:$0xff] %v6582
      %6599 = vst [vmem:[%s262 + $0x50] sm:$0xff] %v6583
      %6600 = vst [vmem:[%s262 + $0x58] sm:$0xff] %v6584
      %6601 = vst [vmem:[%s262 + $0x60] sm:$0xff] %v6585
      %6602 = vst [vmem:[%s262 + $0x68] sm:$0xff] %v6586
      %6603 = vst [vmem:[%s262 + $0x70] sm:$0xff] %v6587
      %6604 = vst [vmem:[%s262 + $0x78] sm:$0xff] %v6588
      %s6605 = smul.u32 8, %s21
      %p6606 = scmp.lt.s32.totalorder %s20, 1
      %s6607 = scalar_select %p6606, %s20, 1
      %p6608 = scmp.lt.s32.totalorder %s6605, 15
      %s6609 = scalar_select %p6608, %s6605, 15
      %s6610 = smul.addr %s6609, 2
      %s6611 = smul.addr %s6607, 32
      %s6612 = sadd.s32 %s6610, %s6611
      %s6613 = smul.addr %s6612, 8
      %s6614 = scalar_lea.vmem %s5, %s6613
      // Predicated region
      $region49: #{double_conv.1} parent=39 // pred_check
        %p6615 = pneg %p160
      $region50: #{double_conv.1} parent=39 // pred_check_branch
        %6617 = sbr.rel (%p6615) target = $region52
      $region51: #{double_conv.1} parent=39 // pred_region
        %s6618 = smul.u32 8, %s21
      $region52: #{double_conv.1} parent=39 // pred_fallthru
        _
    $region40: #{double_conv.1} parent=5 // pred_fallthru
      _
    %p6619 = scmp.le.s32.totalorder 2, %s11
    // Predicated region
    $region53: #{double_conv.1} parent=5 // pred_check
      %p6620 = pneg %p6619
    $region54: #{double_conv.1} parent=5 // pred_check_branch
      %6622 = sbr.rel (%p6620) target = $region56
    $region55: #{double_conv.1} parent=5 // pred_region
      %s6623 = ssub.s32 %s11, 2
      // Predicated region
      $region57: #{double_conv.1} parent=55 // pred_check
        %p6624 = pneg %p166
      $region58: #{double_conv.1} parent=55 // pred_check_branch
        %6626 = sbr.rel (%p6624) target = $region60
      $region59: #{double_conv.1} parent=55 // pred_region
        %s6627 = smul.u32 8, %s23
        %p6628 = scmp.lt.s32.totalorder %s22, 1
        %s6629 = scalar_select %p6628, %s22, 1
        %p6630 = scmp.lt.s32.totalorder %s6627, 15
        %s6631 = scalar_select %p6630, %s6627, 15
        %s6632 = smul.addr %s6631, 2
        %s6633 = smul.addr %s6629, 32
        %s6634 = sadd.s32 %s6632, %s6633
        %s6635 = smul.addr %s6634, 8
        %s6636 = scalar_lea.vmem %s5, %s6635
      $region60: #{double_conv.1} parent=55 // pred_fallthru
        _
    $region56: #{double_conv.1} parent=5 // pred_fallthru
      _
  $region6: #{double_conv.1} parent=0 // loop_footer
    %s15 = sadd.s32 1, %s11
  $region7: #{double_conv.1} parent=0 // loop_footer_branch
    %10 = sbr.rel target = $region3
  $region8: #{double_conv.1} parent=0 // loop_exit
    _

</llo_original>
